<compile_context>
chip_gen: v7x
topology: tpu7x:2x2x1
jax: 0.10.0
libtpu: 0.0.40
codegen_flags: <defaults>
</compile_context>

<pallas_src>
import functools

import jax
import jax.numpy as jnp
from jax.experimental import pallas as pl
from jax.experimental.pallas import tpu as pltpu


def _conv_relu_pool_stats_kernel(x_ref, w_ref, b_ref, mx_ref, mn_ref, st_ref,
                                 *, K, p, QW, Cin_p, Hout, Wout):
    """Conv2d('same') + bias + ReLU, fused pre-BN max/min pooling and BN partial sums.

    x_ref:  (1, p*QW*p*Cin_p, Hv*Wout)  polyphase / column-shifted padded image
                                         (lane axis = pooled spatial, resident in VMEM)
    w_ref:  (K*K, Cout, Cin_p)          per-tap weight matrices
    b_ref:  (Cout, 1)                   conv bias
    mx_ref: (1, Cout, Hout*Wout)        per pooling-window max of ReLU(conv), NCHW order
    mn_ref: (1, Cout, Hout*Wout)        per pooling-window min of ReLU(conv)
    st_ref: (1, Cout, 2)                [sum(y), sum(y*y)] over all H*W positions
    """
    HW = Hout * Wout
    Cout = w_ref.shape[1]
    mx = mn = s1 = s2 = None
    for pa in range(p):                         # window row offset (output phase)
        for pb in range(p):                     # window col offset (output phase)
            acc = jnp.zeros((Cout, HW), jnp.float32)
            for kh in range(K):
                qh, al = divmod(pa + kh, p)     # row polyphase shift / plane
                for kw in range(K):
                    qw, be = divmod(pb + kw, p)  # col polyphase shift / plane
                    base = ((be * QW + qw) * p + al) * Cin_p
                    # Static contiguous slice: (Cin_p, Hout*Wout), spatial on the lane axis.
                    tap = x_ref[0, base:base + Cin_p, qh * Wout: qh * Wout + HW]
                    acc = acc + jnp.dot(w_ref[kh * K + kw], tap,
                                        preferred_element_type=jnp.float32)
            y = jnp.maximum(acc + b_ref[...], 0.0)          # bias + ReLU, (Cout, HW)
            ps1 = jnp.sum(y, axis=1, keepdims=True)         # (Cout, 1)
            ps2 = jnp.sum(y * y, axis=1, keepdims=True)
            if mx is None:
                mx, mn, s1, s2 = y, y, ps1, ps2
            else:
                mx = jnp.maximum(mx, y)
                mn = jnp.minimum(mn, y)
                s1 = s1 + ps1
                s2 = s2 + ps2
    mx_ref[0] = mx                               # dense lane-major (NCHW) store
    mn_ref[0] = mn
    st_ref[0, :, 0:1] = s1
    st_ref[0, :, 1:2] = s2


def _bn_pool_finalize_kernel(mx_ref, mn_ref, sc_ref, sh_ref, o_ref):
    """BatchNorm affine applied to the pooled result.

    max over a window of (scale*y + shift) == max(scale*max_y, scale*min_y) + shift,
    which stays correct for negative BN scale (gamma) without a select.
    """
    sc = sc_ref[...]                             # (Cout, 1)
    sh = sh_ref[...]
    o_ref[0] = jnp.maximum(mx_ref[0] * sc, mn_ref[0] * sc) + sh


@functools.partial(jax.jit, static_argnames=("pool_size", "eps"))
def meso1_forward(x_nchw, weight, bias, gamma, beta, *, pool_size, eps=1e-5):
    """Meso1.forward: Conv2d(padding='same', bias) -> ReLU -> BatchNorm2d -> MaxPool2d."""
    N, Cin, H, W = x_nchw.shape
    Cout, _, K, K2 = weight.shape
    assert K == K2 and K % 2 == 1, "odd kernel_size assumed for symmetric 'same' padding"
    p = pool_size
    assert H % p == 0 and W % p == 0, "spatial dims assumed divisible by pool_size"
    Hout, Wout = H // p, W // p
    HW = Hout * Wout
    pad = (K - 1) // 2
    QW = (p + K - 2) // p + 1                    # number of polyphase shifts per axis
    Hv, Wv = Hout + QW - 1, Wout + QW - 1        # rows/cols per polyphase plane
    Cin_p = ((Cin + 7) // 8) * 8                 # 8-aligned sublane tap slices

    # ---- wrapper prep: one cheap pass over the (small) input, nothing over outputs ----
    # Polyphase + column-shift layout: element (beta, qw, alpha, ci, v, c) holds
    # xpad[ci, v*p + alpha, (c + qw)*p + beta], so the tap (kh,kw) of pooling phase
    # (pa,pb) is a static contiguous (Cin_p, Hout*Wout) slice in the kernel.
    x32 = x_nchw.astype(jnp.float32)
    xpad = jnp.pad(x32, ((0, 0), (0, 0),
                         (pad, Hv * p - H - pad), (pad, Wv * p - W - pad)))
    xq = xpad.reshape(N, Cin, Hv, p, Wv, p)                      # (n, ci, v, a, u, b)
    xcs = jnp.stack([xq[:, :, :, :, qw:qw + Wout, :] for qw in range(QW)], axis=1)
    xcs = xcs.transpose(0, 6, 1, 4, 2, 3, 5)                     # (n, b, qw, a, ci, v, c)
    if Cin_p != Cin:
        xcs = jnp.pad(xcs, ((0, 0),) * 4 + ((0, Cin_p - Cin),) + ((0, 0),) * 2)
    xcs = xcs.reshape(N, p * QW * p * Cin_p, Hv * Wout)

    w_t = jnp.transpose(weight, (2, 3, 0, 1)).reshape(K * K, Cout, Cin)
    w_t = w_t.astype(jnp.float32)
    if Cin_p != Cin:
        w_t = jnp.pad(w_t, ((0, 0), (0, 0), (0, Cin_p - Cin)))
    b2 = bias.reshape(Cout, 1).astype(jnp.float32)

    P = p * QW * p * Cin_p
    HWv = Hv * Wout

    # ---- kernel 1: conv + bias + ReLU + fused pre-BN max/min pooling + BN sums ----
    mx, mn, stats = pl.pallas_call(
        functools.partial(_conv_relu_pool_stats_kernel,
                          K=K, p=p, QW=QW, Cin_p=Cin_p, Hout=Hout, Wout=Wout),
        out_shape=(
            jax.ShapeDtypeStruct((N, Cout, HW), jnp.float32),
            jax.ShapeDtypeStruct((N, Cout, HW), jnp.float32),
            jax.ShapeDtypeStruct((N, Cout, 2), jnp.float32),
        ),
        grid=(N,),
        in_specs=[
            pl.BlockSpec((1, P, HWv), lambda n: (n, 0, 0)),
            pl.BlockSpec((K * K, Cout, Cin_p), lambda n: (0, 0, 0)),
            pl.BlockSpec((Cout, 1), lambda n: (0, 0)),
        ],
        out_specs=(
            pl.BlockSpec((1, Cout, HW), lambda n: (n, 0, 0)),
            pl.BlockSpec((1, Cout, HW), lambda n: (n, 0, 0)),
            pl.BlockSpec((1, Cout, 2), lambda n: (n, 0, 0)),
        ),
        compiler_params=pltpu.CompilerParams(dimension_semantics=("parallel",)),
    )(xcs, w_t, b2)

    # ---- finalize batch stats (tiny cross-grid reduction) -> per-channel scale/shift ----
    # NOTE: single-pass E[y^2]-E[y]^2 in f32 (clamped).  Fine at 1e-3 tolerances; switch
    # to shifted sums if tolerances tighten (post-ReLU means are non-negative).
    s = jnp.sum(stats, axis=0)                                   # (Cout, 2)
    cnt = float(N * H * W)
    mean = s[:, 0] / cnt
    var = jnp.maximum(s[:, 1] / cnt - mean * mean, 0.0)          # biased variance
    scale = gamma.astype(jnp.float32) * jax.lax.rsqrt(var + eps)
    shift = beta.astype(jnp.float32) - mean * scale

    # ---- kernel 2: BN affine on the pooled (p^2-smaller) tensor, lane-dense NCHW out ----
    out_flat = pl.pallas_call(
        _bn_pool_finalize_kernel,
        out_shape=jax.ShapeDtypeStruct((N, Cout, HW), jnp.float32),
        grid=(N,),
        in_specs=[
            pl.BlockSpec((1, Cout, HW), lambda n: (n, 0, 0)),
            pl.BlockSpec((1, Cout, HW), lambda n: (n, 0, 0)),
            pl.BlockSpec((Cout, 1), lambda n: (0, 0)),
            pl.BlockSpec((Cout, 1), lambda n: (0, 0)),
        ],
        out_specs=pl.BlockSpec((1, Cout, HW), lambda n: (n, 0, 0)),
        compiler_params=pltpu.CompilerParams(dimension_semantics=("parallel",)),
    )(mx, mn, scale.reshape(Cout, 1), shift.reshape(Cout, 1))

    # Row-major split of the lane axis only: (N, Cout, Hout*Wout) -> NCHW, no data movement.
    return out_flat.reshape(N, Cout, Hout, Wout)


def meso1_reference(x_nchw, weight, bias, gamma, beta, *, pool_size, eps=1e-5):
    """Pure-JAX reference mirroring the PyTorch forward (train-mode BatchNorm)."""
    y = jax.lax.conv_general_dilated(
        x_nchw, weight, window_strides=(1, 1), padding="SAME",
        dimension_numbers=("NCHW", "OIHW", "NCHW"),
        precision=jax.lax.Precision.HIGHEST)
    y = y + bias[None, :, None, None]
    y = jnp.maximum(y, 0.0)
    mean = jnp.mean(y, axis=(0, 2, 3), keepdims=True)
    var = jnp.mean((y - mean) ** 2, axis=(0, 2, 3), keepdims=True)
    y = (y - mean) / jnp.sqrt(var + eps)
    y = y * gamma[None, :, None, None] + beta[None, :, None, None]
    N, C, H, W = y.shape
    p = pool_size
    y = y[:, :, :H // p * p, :W // p * p].reshape(N, C, H // p, p, W // p, p)
    return jnp.max(y, axis=(3, 5))


if __name__ == "__main__":
    in_channels, out_channels, kernel_size, pool_size = 4, 8, 3, 2
    N, H, W = 2, 16, 16

    key = jax.random.PRNGKey(0)
    k_w, k_b, k_g, k_beta, k_x = jax.random.split(key, 5)
    weight = 0.1 * jax.random.normal(
        k_w, (out_channels, in_channels, kernel_size, kernel_size), jnp.float32)
    bias = 0.1 * jax.random.normal(k_b, (out_channels,), jnp.float32)
    gamma = 1.0 + 0.1 * jax.random.normal(k_g, (out_channels,), jnp.float32)
    beta = 0.1 * jax.random.normal(k_beta, (out_channels,), jnp.float32)
    x = jax.random.normal(k_x, (N, in_channels, H, W), jnp.float32)

    out = meso1_forward(x, weight, bias, gamma, beta, pool_size=pool_size)
    out = jax.block_until_ready(out)

    ref = meso1_reference(x, weight, bias, gamma, beta, pool_size=pool_size)
    assert out.shape == (N, out_channels, H // pool_size, W // pool_size), out.shape
    max_err = float(jnp.max(jnp.abs(out - ref)))
    assert bool(jnp.allclose(out, ref, atol=1e-3, rtol=1e-3)), f"max abs err {max_err}"
    print("KERNEL_OK")
</pallas_src>

<mosaic_0001>
module attributes {stable_mosaic.version = 11 : i64} {
  func.func @_conv_relu_pool_stats_kernel(%arg0: i32, %arg1: memref<1x64x72xf32, #tpu.memory_space<vmem>>, %arg2: memref<9x8x8xf32, #tpu.memory_space<vmem>>, %arg3: memref<8x1xf32, #tpu.memory_space<vmem>>, %arg4: memref<1x8x64xf32, #tpu.memory_space<vmem>>, %arg5: memref<1x8x64xf32, #tpu.memory_space<vmem>>, %arg6: memref<1x8x2xf32, #tpu.memory_space<vmem>>) attributes {dimension_semantics = [#tpu.dimension_semantics<parallel>], iteration_bounds = array<i64: 2>, scalar_prefetch = 0 : i64, scratch_operands = 0 : i64, tpu.core_type = #tpu.core_type<tc>, window_params = [{transform_indices = @transform_0, window_bounds = array<i64: 1, 64, 72>}, {pipeline_mode = #tpu.pipeline_mode<synchronous>, transform_indices = @transform_1, window_bounds = array<i64: 9, 8, 8>}, {pipeline_mode = #tpu.pipeline_mode<synchronous>, transform_indices = @transform_2, window_bounds = array<i64: 8, 1>}, {transform_indices = @transform_3, window_bounds = array<i64: 1, 8, 64>}, {transform_indices = @transform_4, window_bounds = array<i64: 1, 8, 64>}, {transform_indices = @transform_5, window_bounds = array<i64: 1, 8, 2>}]} {
    %cst = arith.constant 0.000000e+00 : f32
    %0 = vector.broadcast %cst : f32 to vector<8x64xf32>
    %c0 = arith.constant 0 : index
    %c0_0 = arith.constant 0 : index
    %c0_1 = arith.constant 0 : index
    %1 = vector.load %arg1[%c0, %c0_0, %c0_1] : memref<1x64x72xf32, #tpu.memory_space<vmem>>, vector<1x8x64xf32>
    %2 = vector.shape_cast %1 : vector<1x8x64xf32> to vector<8x64xf32>
    %c0_2 = arith.constant 0 : index
    %c0_3 = arith.constant 0 : index
    %c0_4 = arith.constant 0 : index
    %3 = vector.load %arg2[%c0_2, %c0_3, %c0_4] : memref<9x8x8xf32, #tpu.memory_space<vmem>>, vector<1x8x8xf32>
    %4 = vector.shape_cast %3 : vector<1x8x8xf32> to vector<8x8xf32>
    %cst_5 = arith.constant dense<0.000000e+00> : vector<8x64xf32>
    %5 = tpu.matmul %4, %2, %cst_5 {dimension_numbers = #tpu.dot_dimension_numbers<[1], [0], [0], [1], [0, 0, 1, 1], [], []>} : vector<8x8xf32>, vector<8x64xf32>, vector<8x64xf32> -> vector<8x64xf32>
    %6 = arith.addf %0, %5 : vector<8x64xf32>
    %c0_6 = arith.constant 0 : index
    %c32 = arith.constant 32 : index
    %c0_7 = arith.constant 0 : index
    %7 = vector.load %arg1[%c0_6, %c32, %c0_7] : memref<1x64x72xf32, #tpu.memory_space<vmem>>, vector<1x8x64xf32>
    %8 = vector.shape_cast %7 : vector<1x8x64xf32> to vector<8x64xf32>
    %c1 = arith.constant 1 : index
    %c0_8 = arith.constant 0 : index
    %c0_9 = arith.constant 0 : index
    %9 = vector.load %arg2[%c1, %c0_8, %c0_9] : memref<9x8x8xf32, #tpu.memory_space<vmem>>, vector<1x8x8xf32>
    %10 = vector.shape_cast %9 : vector<1x8x8xf32> to vector<8x8xf32>
    %cst_10 = arith.constant dense<0.000000e+00> : vector<8x64xf32>
    %11 = tpu.matmul %10, %8, %cst_10 {dimension_numbers = #tpu.dot_dimension_numbers<[1], [0], [0], [1], [0, 0, 1, 1], [], []>} : vector<8x8xf32>, vector<8x64xf32>, vector<8x64xf32> -> vector<8x64xf32>
    %12 = arith.addf %6, %11 : vector<8x64xf32>
    %c0_11 = arith.constant 0 : index
    %c16 = arith.constant 16 : index
    %c0_12 = arith.constant 0 : index
    %13 = vector.load %arg1[%c0_11, %c16, %c0_12] : memref<1x64x72xf32, #tpu.memory_space<vmem>>, vector<1x8x64xf32>
    %14 = vector.shape_cast %13 : vector<1x8x64xf32> to vector<8x64xf32>
    %c2 = arith.constant 2 : index
    %c0_13 = arith.constant 0 : index
    %c0_14 = arith.constant 0 : index
    %15 = vector.load %arg2[%c2, %c0_13, %c0_14] : memref<9x8x8xf32, #tpu.memory_space<vmem>>, vector<1x8x8xf32>
    %16 = vector.shape_cast %15 : vector<1x8x8xf32> to vector<8x8xf32>
    %cst_15 = arith.constant dense<0.000000e+00> : vector<8x64xf32>
    %17 = tpu.matmul %16, %14, %cst_15 {dimension_numbers = #tpu.dot_dimension_numbers<[1], [0], [0], [1], [0, 0, 1, 1], [], []>} : vector<8x8xf32>, vector<8x64xf32>, vector<8x64xf32> -> vector<8x64xf32>
    %18 = arith.addf %12, %17 : vector<8x64xf32>
    %c0_16 = arith.constant 0 : index
    %c8 = arith.constant 8 : index
    %c0_17 = arith.constant 0 : index
    %19 = vector.load %arg1[%c0_16, %c8, %c0_17] : memref<1x64x72xf32, #tpu.memory_space<vmem>>, vector<1x8x64xf32>
    %20 = vector.shape_cast %19 : vector<1x8x64xf32> to vector<8x64xf32>
    %c3 = arith.constant 3 : index
    %c0_18 = arith.constant 0 : index
    %c0_19 = arith.constant 0 : index
    %21 = vector.load %arg2[%c3, %c0_18, %c0_19] : memref<9x8x8xf32, #tpu.memory_space<vmem>>, vector<1x8x8xf32>
    %22 = vector.shape_cast %21 : vector<1x8x8xf32> to vector<8x8xf32>
    %cst_20 = arith.constant dense<0.000000e+00> : vector<8x64xf32>
    %23 = tpu.matmul %22, %20, %cst_20 {dimension_numbers = #tpu.dot_dimension_numbers<[1], [0], [0], [1], [0, 0, 1, 1], [], []>} : vector<8x8xf32>, vector<8x64xf32>, vector<8x64xf32> -> vector<8x64xf32>
    %24 = arith.addf %18, %23 : vector<8x64xf32>
    %c0_21 = arith.constant 0 : index
    %c40 = arith.constant 40 : index
    %c0_22 = arith.constant 0 : index
    %25 = vector.load %arg1[%c0_21, %c40, %c0_22] : memref<1x64x72xf32, #tpu.memory_space<vmem>>, vector<1x8x64xf32>
    %26 = vector.shape_cast %25 : vector<1x8x64xf32> to vector<8x64xf32>
    %c4 = arith.constant 4 : index
    %c0_23 = arith.constant 0 : index
    %c0_24 = arith.constant 0 : index
    %27 = vector.load %arg2[%c4, %c0_23, %c0_24] : memref<9x8x8xf32, #tpu.memory_space<vmem>>, vector<1x8x8xf32>
    %28 = vector.shape_cast %27 : vector<1x8x8xf32> to vector<8x8xf32>
    %cst_25 = arith.constant dense<0.000000e+00> : vector<8x64xf32>
    %29 = tpu.matmul %28, %26, %cst_25 {dimension_numbers = #tpu.dot_dimension_numbers<[1], [0], [0], [1], [0, 0, 1, 1], [], []>} : vector<8x8xf32>, vector<8x64xf32>, vector<8x64xf32> -> vector<8x64xf32>
    %30 = arith.addf %24, %29 : vector<8x64xf32>
    %c0_26 = arith.constant 0 : index
    %c24 = arith.constant 24 : index
    %c0_27 = arith.constant 0 : index
    %31 = vector.load %arg1[%c0_26, %c24, %c0_27] : memref<1x64x72xf32, #tpu.memory_space<vmem>>, vector<1x8x64xf32>
    %32 = vector.shape_cast %31 : vector<1x8x64xf32> to vector<8x64xf32>
    %c5 = arith.constant 5 : index
    %c0_28 = arith.constant 0 : index
    %c0_29 = arith.constant 0 : index
    %33 = vector.load %arg2[%c5, %c0_28, %c0_29] : memref<9x8x8xf32, #tpu.memory_space<vmem>>, vector<1x8x8xf32>
    %34 = vector.shape_cast %33 : vector<1x8x8xf32> to vector<8x8xf32>
    %cst_30 = arith.constant dense<0.000000e+00> : vector<8x64xf32>
    %35 = tpu.matmul %34, %32, %cst_30 {dimension_numbers = #tpu.dot_dimension_numbers<[1], [0], [0], [1], [0, 0, 1, 1], [], []>} : vector<8x8xf32>, vector<8x64xf32>, vector<8x64xf32> -> vector<8x64xf32>
    %36 = arith.addf %30, %35 : vector<8x64xf32>
    %c0_31 = arith.constant 0 : index
    %c0_32 = arith.constant 0 : index
    %c8_33 = arith.constant 8 : index
    %37 = vector.load %arg1[%c0_31, %c0_32, %c8_33] : memref<1x64x72xf32, #tpu.memory_space<vmem>>, vector<1x8x64xf32>
    %38 = vector.shape_cast %37 : vector<1x8x64xf32> to vector<8x64xf32>
    %c6 = arith.constant 6 : index
    %c0_34 = arith.constant 0 : index
    %c0_35 = arith.constant 0 : index
    %39 = vector.load %arg2[%c6, %c0_34, %c0_35] : memref<9x8x8xf32, #tpu.memory_space<vmem>>, vector<1x8x8xf32>
    %40 = vector.shape_cast %39 : vector<1x8x8xf32> to vector<8x8xf32>
    %cst_36 = arith.constant dense<0.000000e+00> : vector<8x64xf32>
    %41 = tpu.matmul %40, %38, %cst_36 {dimension_numbers = #tpu.dot_dimension_numbers<[1], [0], [0], [1], [0, 0, 1, 1], [], []>} : vector<8x8xf32>, vector<8x64xf32>, vector<8x64xf32> -> vector<8x64xf32>
    %42 = arith.addf %36, %41 : vector<8x64xf32>
    %c0_37 = arith.constant 0 : index
    %c32_38 = arith.constant 32 : index
    %c8_39 = arith.constant 8 : index
    %43 = vector.load %arg1[%c0_37, %c32_38, %c8_39] : memref<1x64x72xf32, #tpu.memory_space<vmem>>, vector<1x8x64xf32>
    %44 = vector.shape_cast %43 : vector<1x8x64xf32> to vector<8x64xf32>
    %c7 = arith.constant 7 : index
    %c0_40 = arith.constant 0 : index
    %c0_41 = arith.constant 0 : index
    %45 = vector.load %arg2[%c7, %c0_40, %c0_41] : memref<9x8x8xf32, #tpu.memory_space<vmem>>, vector<1x8x8xf32>
    %46 = vector.shape_cast %45 : vector<1x8x8xf32> to vector<8x8xf32>
    %cst_42 = arith.constant dense<0.000000e+00> : vector<8x64xf32>
    %47 = tpu.matmul %46, %44, %cst_42 {dimension_numbers = #tpu.dot_dimension_numbers<[1], [0], [0], [1], [0, 0, 1, 1], [], []>} : vector<8x8xf32>, vector<8x64xf32>, vector<8x64xf32> -> vector<8x64xf32>
    %48 = arith.addf %42, %47 : vector<8x64xf32>
    %c0_43 = arith.constant 0 : index
    %c16_44 = arith.constant 16 : index
    %c8_45 = arith.constant 8 : index
    %49 = vector.load %arg1[%c0_43, %c16_44, %c8_45] : memref<1x64x72xf32, #tpu.memory_space<vmem>>, vector<1x8x64xf32>
    %50 = vector.shape_cast %49 : vector<1x8x64xf32> to vector<8x64xf32>
    %c8_46 = arith.constant 8 : index
    %c0_47 = arith.constant 0 : index
    %c0_48 = arith.constant 0 : index
    %51 = vector.load %arg2[%c8_46, %c0_47, %c0_48] : memref<9x8x8xf32, #tpu.memory_space<vmem>>, vector<1x8x8xf32>
    %52 = vector.shape_cast %51 : vector<1x8x8xf32> to vector<8x8xf32>
    %cst_49 = arith.constant dense<0.000000e+00> : vector<8x64xf32>
    %53 = tpu.matmul %52, %50, %cst_49 {dimension_numbers = #tpu.dot_dimension_numbers<[1], [0], [0], [1], [0, 0, 1, 1], [], []>} : vector<8x8xf32>, vector<8x64xf32>, vector<8x64xf32> -> vector<8x64xf32>
    %54 = arith.addf %48, %53 : vector<8x64xf32>
    %c0_50 = arith.constant 0 : index
    %c0_51 = arith.constant 0 : index
    %55 = vector.load %arg3[%c0_50, %c0_51] : memref<8x1xf32, #tpu.memory_space<vmem>>, vector<8x1xf32>
    %56 = vector.broadcast %55 : vector<8x1xf32> to vector<8x64xf32>
    %57 = arith.addf %54, %56 : vector<8x64xf32>
    %cst_52 = arith.constant 0.000000e+00 : f32
    %58 = vector.broadcast %cst_52 : f32 to vector<8x64xf32>
    %59 = arith.maximumf %57, %58 : vector<8x64xf32>
    %cst_53 = arith.constant dense<0.000000e+00> : vector<8xf32>
    %60 = vector.multi_reduction <add>, %59, %cst_53 [1] : vector<8x64xf32> to vector<8xf32>
    %61 = vector.shape_cast %60 : vector<8xf32> to vector<8x1xf32>
    %62 = arith.mulf %59, %59 : vector<8x64xf32>
    %cst_54 = arith.constant dense<0.000000e+00> : vector<8xf32>
    %63 = vector.multi_reduction <add>, %62, %cst_54 [1] : vector<8x64xf32> to vector<8xf32>
    %64 = vector.shape_cast %63 : vector<8xf32> to vector<8x1xf32>
    %cst_55 = arith.constant 0.000000e+00 : f32
    %65 = vector.broadcast %cst_55 : f32 to vector<8x64xf32>
    %c0_56 = arith.constant 0 : index
    %c32_57 = arith.constant 32 : index
    %c0_58 = arith.constant 0 : index
    %66 = vector.load %arg1[%c0_56, %c32_57, %c0_58] : memref<1x64x72xf32, #tpu.memory_space<vmem>>, vector<1x8x64xf32>
    %67 = vector.shape_cast %66 : vector<1x8x64xf32> to vector<8x64xf32>
    %c0_59 = arith.constant 0 : index
    %c0_60 = arith.constant 0 : index
    %c0_61 = arith.constant 0 : index
    %68 = vector.load %arg2[%c0_59, %c0_60, %c0_61] : memref<9x8x8xf32, #tpu.memory_space<vmem>>, vector<1x8x8xf32>
    %69 = vector.shape_cast %68 : vector<1x8x8xf32> to vector<8x8xf32>
    %cst_62 = arith.constant dense<0.000000e+00> : vector<8x64xf32>
    %70 = tpu.matmul %69, %67, %cst_62 {dimension_numbers = #tpu.dot_dimension_numbers<[1], [0], [0], [1], [0, 0, 1, 1], [], []>} : vector<8x8xf32>, vector<8x64xf32>, vector<8x64xf32> -> vector<8x64xf32>
    %71 = arith.addf %65, %70 : vector<8x64xf32>
    %c0_63 = arith.constant 0 : index
    %c16_64 = arith.constant 16 : index
    %c0_65 = arith.constant 0 : index
    %72 = vector.load %arg1[%c0_63, %c16_64, %c0_65] : memref<1x64x72xf32, #tpu.memory_space<vmem>>, vector<1x8x64xf32>
    %73 = vector.shape_cast %72 : vector<1x8x64xf32> to vector<8x64xf32>
    %c1_66 = arith.constant 1 : index
    %c0_67 = arith.constant 0 : index
    %c0_68 = arith.constant 0 : index
    %74 = vector.load %arg2[%c1_66, %c0_67, %c0_68] : memref<9x8x8xf32, #tpu.memory_space<vmem>>, vector<1x8x8xf32>
    %75 = vector.shape_cast %74 : vector<1x8x8xf32> to vector<8x8xf32>
    %cst_69 = arith.constant dense<0.000000e+00> : vector<8x64xf32>
    %76 = tpu.matmul %75, %73, %cst_69 {dimension_numbers = #tpu.dot_dimension_numbers<[1], [0], [0], [1], [0, 0, 1, 1], [], []>} : vector<8x8xf32>, vector<8x64xf32>, vector<8x64xf32> -> vector<8x64xf32>
    %77 = arith.addf %71, %76 : vector<8x64xf32>
    %c0_70 = arith.constant 0 : index
    %c48 = arith.constant 48 : index
    %c0_71 = arith.constant 0 : index
    %78 = vector.load %arg1[%c0_70, %c48, %c0_71] : memref<1x64x72xf32, #tpu.memory_space<vmem>>, vector<1x8x64xf32>
    %79 = vector.shape_cast %78 : vector<1x8x64xf32> to vector<8x64xf32>
    %c2_72 = arith.constant 2 : index
    %c0_73 = arith.constant 0 : index
    %c0_74 = arith.constant 0 : index
    %80 = vector.load %arg2[%c2_72, %c0_73, %c0_74] : memref<9x8x8xf32, #tpu.memory_space<vmem>>, vector<1x8x8xf32>
    %81 = vector.shape_cast %80 : vector<1x8x8xf32> to vector<8x8xf32>
    %cst_75 = arith.constant dense<0.000000e+00> : vector<8x64xf32>
    %82 = tpu.matmul %81, %79, %cst_75 {dimension_numbers = #tpu.dot_dimension_numbers<[1], [0], [0], [1], [0, 0, 1, 1], [], []>} : vector<8x8xf32>, vector<8x64xf32>, vector<8x64xf32> -> vector<8x64xf32>
    %83 = arith.addf %77, %82 : vector<8x64xf32>
    %c0_76 = arith.constant 0 : index
    %c40_77 = arith.constant 40 : index
    %c0_78 = arith.constant 0 : index
    %84 = vector.load %arg1[%c0_76, %c40_77, %c0_78] : memref<1x64x72xf32, #tpu.memory_space<vmem>>, vector<1x8x64xf32>
    %85 = vector.shape_cast %84 : vector<1x8x64xf32> to vector<8x64xf32>
    %c3_79 = arith.constant 3 : index
    %c0_80 = arith.constant 0 : index
    %c0_81 = arith.constant 0 : index
    %86 = vector.load %arg2[%c3_79, %c0_80, %c0_81] : memref<9x8x8xf32, #tpu.memory_space<vmem>>, vector<1x8x8xf32>
    %87 = vector.shape_cast %86 : vector<1x8x8xf32> to vector<8x8xf32>
    %cst_82 = arith.constant dense<0.000000e+00> : vector<8x64xf32>
    %88 = tpu.matmul %87, %85, %cst_82 {dimension_numbers = #tpu.dot_dimension_numbers<[1], [0], [0], [1], [0, 0, 1, 1], [], []>} : vector<8x8xf32>, vector<8x64xf32>, vector<8x64xf32> -> vector<8x64xf32>
    %89 = arith.addf %83, %88 : vector<8x64xf32>
    %c0_83 = arith.constant 0 : index
    %c24_84 = arith.constant 24 : index
    %c0_85 = arith.constant 0 : index
    %90 = vector.load %arg1[%c0_83, %c24_84, %c0_85] : memref<1x64x72xf32, #tpu.memory_space<vmem>>, vector<1x8x64xf32>
    %91 = vector.shape_cast %90 : vector<1x8x64xf32> to vector<8x64xf32>
    %c4_86 = arith.constant 4 : index
    %c0_87 = arith.constant 0 : index
    %c0_88 = arith.constant 0 : index
    %92 = vector.load %arg2[%c4_86, %c0_87, %c0_88] : memref<9x8x8xf32, #tpu.memory_space<vmem>>, vector<1x8x8xf32>
    %93 = vector.shape_cast %92 : vector<1x8x8xf32> to vector<8x8xf32>
    %cst_89 = arith.constant dense<0.000000e+00> : vector<8x64xf32>
    %94 = tpu.matmul %93, %91, %cst_89 {dimension_numbers = #tpu.dot_dimension_numbers<[1], [0], [0], [1], [0, 0, 1, 1], [], []>} : vector<8x8xf32>, vector<8x64xf32>, vector<8x64xf32> -> vector<8x64xf32>
    %95 = arith.addf %89, %94 : vector<8x64xf32>
    %c0_90 = arith.constant 0 : index
    %c56 = arith.constant 56 : index
    %c0_91 = arith.constant 0 : index
    %96 = vector.load %arg1[%c0_90, %c56, %c0_91] : memref<1x64x72xf32, #tpu.memory_space<vmem>>, vector<1x8x64xf32>
    %97 = vector.shape_cast %96 : vector<1x8x64xf32> to vector<8x64xf32>
    %c5_92 = arith.constant 5 : index
    %c0_93 = arith.constant 0 : index
    %c0_94 = arith.constant 0 : index
    %98 = vector.load %arg2[%c5_92, %c0_93, %c0_94] : memref<9x8x8xf32, #tpu.memory_space<vmem>>, vector<1x8x8xf32>
    %99 = vector.shape_cast %98 : vector<1x8x8xf32> to vector<8x8xf32>
    %cst_95 = arith.constant dense<0.000000e+00> : vector<8x64xf32>
    %100 = tpu.matmul %99, %97, %cst_95 {dimension_numbers = #tpu.dot_dimension_numbers<[1], [0], [0], [1], [0, 0, 1, 1], [], []>} : vector<8x8xf32>, vector<8x64xf32>, vector<8x64xf32> -> vector<8x64xf32>
    %101 = arith.addf %95, %100 : vector<8x64xf32>
    %c0_96 = arith.constant 0 : index
    %c32_97 = arith.constant 32 : index
    %c8_98 = arith.constant 8 : index
    %102 = vector.load %arg1[%c0_96, %c32_97, %c8_98] : memref<1x64x72xf32, #tpu.memory_space<vmem>>, vector<1x8x64xf32>
    %103 = vector.shape_cast %102 : vector<1x8x64xf32> to vector<8x64xf32>
    %c6_99 = arith.constant 6 : index
    %c0_100 = arith.constant 0 : index
    %c0_101 = arith.constant 0 : index
    %104 = vector.load %arg2[%c6_99, %c0_100, %c0_101] : memref<9x8x8xf32, #tpu.memory_space<vmem>>, vector<1x8x8xf32>
    %105 = vector.shape_cast %104 : vector<1x8x8xf32> to vector<8x8xf32>
    %cst_102 = arith.constant dense<0.000000e+00> : vector<8x64xf32>
    %106 = tpu.matmul %105, %103, %cst_102 {dimension_numbers = #tpu.dot_dimension_numbers<[1], [0], [0], [1], [0, 0, 1, 1], [], []>} : vector<8x8xf32>, vector<8x64xf32>, vector<8x64xf32> -> vector<8x64xf32>
    %107 = arith.addf %101, %106 : vector<8x64xf32>
    %c0_103 = arith.constant 0 : index
    %c16_104 = arith.constant 16 : index
    %c8_105 = arith.constant 8 : index
    %108 = vector.load %arg1[%c0_103, %c16_104, %c8_105] : memref<1x64x72xf32, #tpu.memory_space<vmem>>, vector<1x8x64xf32>
    %109 = vector.shape_cast %108 : vector<1x8x64xf32> to vector<8x64xf32>
    %c7_106 = arith.constant 7 : index
    %c0_107 = arith.constant 0 : index
    %c0_108 = arith.constant 0 : index
    %110 = vector.load %arg2[%c7_106, %c0_107, %c0_108] : memref<9x8x8xf32, #tpu.memory_space<vmem>>, vector<1x8x8xf32>
    %111 = vector.shape_cast %110 : vector<1x8x8xf32> to vector<8x8xf32>
    %cst_109 = arith.constant dense<0.000000e+00> : vector<8x64xf32>
    %112 = tpu.matmul %111, %109, %cst_109 {dimension_numbers = #tpu.dot_dimension_numbers<[1], [0], [0], [1], [0, 0, 1, 1], [], []>} : vector<8x8xf32>, vector<8x64xf32>, vector<8x64xf32> -> vector<8x64xf32>
    %113 = arith.addf %107, %112 : vector<8x64xf32>
    %c0_110 = arith.constant 0 : index
    %c48_111 = arith.constant 48 : index
    %c8_112 = arith.constant 8 : index
    %114 = vector.load %arg1[%c0_110, %c48_111, %c8_112] : memref<1x64x72xf32, #tpu.memory_space<vmem>>, vector<1x8x64xf32>
    %115 = vector.shape_cast %114 : vector<1x8x64xf32> to vector<8x64xf32>
    %c8_113 = arith.constant 8 : index
    %c0_114 = arith.constant 0 : index
    %c0_115 = arith.constant 0 : index
    %116 = vector.load %arg2[%c8_113, %c0_114, %c0_115] : memref<9x8x8xf32, #tpu.memory_space<vmem>>, vector<1x8x8xf32>
    %117 = vector.shape_cast %116 : vector<1x8x8xf32> to vector<8x8xf32>
    %cst_116 = arith.constant dense<0.000000e+00> : vector<8x64xf32>
    %118 = tpu.matmul %117, %115, %cst_116 {dimension_numbers = #tpu.dot_dimension_numbers<[1], [0], [0], [1], [0, 0, 1, 1], [], []>} : vector<8x8xf32>, vector<8x64xf32>, vector<8x64xf32> -> vector<8x64xf32>
    %119 = arith.addf %113, %118 : vector<8x64xf32>
    %c0_117 = arith.constant 0 : index
    %c0_118 = arith.constant 0 : index
    %120 = vector.load %arg3[%c0_117, %c0_118] : memref<8x1xf32, #tpu.memory_space<vmem>>, vector<8x1xf32>
    %121 = vector.broadcast %120 : vector<8x1xf32> to vector<8x64xf32>
    %122 = arith.addf %119, %121 : vector<8x64xf32>
    %cst_119 = arith.constant 0.000000e+00 : f32
    %123 = vector.broadcast %cst_119 : f32 to vector<8x64xf32>
    %124 = arith.maximumf %122, %123 : vector<8x64xf32>
    %cst_120 = arith.constant dense<0.000000e+00> : vector<8xf32>
    %125 = vector.multi_reduction <add>, %124, %cst_120 [1] : vector<8x64xf32> to vector<8xf32>
    %126 = vector.shape_cast %125 : vector<8xf32> to vector<8x1xf32>
    %127 = arith.mulf %124, %124 : vector<8x64xf32>
    %cst_121 = arith.constant dense<0.000000e+00> : vector<8xf32>
    %128 = vector.multi_reduction <add>, %127, %cst_121 [1] : vector<8x64xf32> to vector<8xf32>
    %129 = vector.shape_cast %128 : vector<8xf32> to vector<8x1xf32>
    %130 = arith.maximumf %59, %124 : vector<8x64xf32>
    %131 = arith.minimumf %59, %124 : vector<8x64xf32>
    %132 = arith.addf %61, %126 : vector<8x1xf32>
    %133 = arith.addf %64, %129 : vector<8x1xf32>
    %cst_122 = arith.constant 0.000000e+00 : f32
    %134 = vector.broadcast %cst_122 : f32 to vector<8x64xf32>
    %c0_123 = arith.constant 0 : index
    %c8_124 = arith.constant 8 : index
    %c0_125 = arith.constant 0 : index
    %135 = vector.load %arg1[%c0_123, %c8_124, %c0_125] : memref<1x64x72xf32, #tpu.memory_space<vmem>>, vector<1x8x64xf32>
    %136 = vector.shape_cast %135 : vector<1x8x64xf32> to vector<8x64xf32>
    %c0_126 = arith.constant 0 : index
    %c0_127 = arith.constant 0 : index
    %c0_128 = arith.constant 0 : index
    %137 = vector.load %arg2[%c0_126, %c0_127, %c0_128] : memref<9x8x8xf32, #tpu.memory_space<vmem>>, vector<1x8x8xf32>
    %138 = vector.shape_cast %137 : vector<1x8x8xf32> to vector<8x8xf32>
    %cst_129 = arith.constant dense<0.000000e+00> : vector<8x64xf32>
    %139 = tpu.matmul %138, %136, %cst_129 {dimension_numbers = #tpu.dot_dimension_numbers<[1], [0], [0], [1], [0, 0, 1, 1], [], []>} : vector<8x8xf32>, vector<8x64xf32>, vector<8x64xf32> -> vector<8x64xf32>
    %140 = arith.addf %134, %139 : vector<8x64xf32>
    %c0_130 = arith.constant 0 : index
    %c40_131 = arith.constant 40 : index
    %c0_132 = arith.constant 0 : index
    %141 = vector.load %arg1[%c0_130, %c40_131, %c0_132] : memref<1x64x72xf32, #tpu.memory_space<vmem>>, vector<1x8x64xf32>
    %142 = vector.shape_cast %141 : vector<1x8x64xf32> to vector<8x64xf32>
    %c1_133 = arith.constant 1 : index
    %c0_134 = arith.constant 0 : index
    %c0_135 = arith.constant 0 : index
    %143 = vector.load %arg2[%c1_133, %c0_134, %c0_135] : memref<9x8x8xf32, #tpu.memory_space<vmem>>, vector<1x8x8xf32>
    %144 = vector.shape_cast %143 : vector<1x8x8xf32> to vector<8x8xf32>
    %cst_136 = arith.constant dense<0.000000e+00> : vector<8x64xf32>
    %145 = tpu.matmul %144, %142, %cst_136 {dimension_numbers = #tpu.dot_dimension_numbers<[1], [0], [0], [1], [0, 0, 1, 1], [], []>} : vector<8x8xf32>, vector<8x64xf32>, vector<8x64xf32> -> vector<8x64xf32>
    %146 = arith.addf %140, %145 : vector<8x64xf32>
    %c0_137 = arith.constant 0 : index
    %c24_138 = arith.constant 24 : index
    %c0_139 = arith.constant 0 : index
    %147 = vector.load %arg1[%c0_137, %c24_138, %c0_139] : memref<1x64x72xf32, #tpu.memory_space<vmem>>, vector<1x8x64xf32>
    %148 = vector.shape_cast %147 : vector<1x8x64xf32> to vector<8x64xf32>
    %c2_140 = arith.constant 2 : index
    %c0_141 = arith.constant 0 : index
    %c0_142 = arith.constant 0 : index
    %149 = vector.load %arg2[%c2_140, %c0_141, %c0_142] : memref<9x8x8xf32, #tpu.memory_space<vmem>>, vector<1x8x8xf32>
    %150 = vector.shape_cast %149 : vector<1x8x8xf32> to vector<8x8xf32>
    %cst_143 = arith.constant dense<0.000000e+00> : vector<8x64xf32>
    %151 = tpu.matmul %150, %148, %cst_143 {dimension_numbers = #tpu.dot_dimension_numbers<[1], [0], [0], [1], [0, 0, 1, 1], [], []>} : vector<8x8xf32>, vector<8x64xf32>, vector<8x64xf32> -> vector<8x64xf32>
    %152 = arith.addf %146, %151 : vector<8x64xf32>
    %c0_144 = arith.constant 0 : index
    %c0_145 = arith.constant 0 : index
    %c8_146 = arith.constant 8 : index
    %153 = vector.load %arg1[%c0_144, %c0_145, %c8_146] : memref<1x64x72xf32, #tpu.memory_space<vmem>>, vector<1x8x64xf32>
    %154 = vector.shape_cast %153 : vector<1x8x64xf32> to vector<8x64xf32>
    %c3_147 = arith.constant 3 : index
    %c0_148 = arith.constant 0 : index
    %c0_149 = arith.constant 0 : index
    %155 = vector.load %arg2[%c3_147, %c0_148, %c0_149] : memref<9x8x8xf32, #tpu.memory_space<vmem>>, vector<1x8x8xf32>
    %156 = vector.shape_cast %155 : vector<1x8x8xf32> to vector<8x8xf32>
    %cst_150 = arith.constant dense<0.000000e+00> : vector<8x64xf32>
    %157 = tpu.matmul %156, %154, %cst_150 {dimension_numbers = #tpu.dot_dimension_numbers<[1], [0], [0], [1], [0, 0, 1, 1], [], []>} : vector<8x8xf32>, vector<8x64xf32>, vector<8x64xf32> -> vector<8x64xf32>
    %158 = arith.addf %152, %157 : vector<8x64xf32>
    %c0_151 = arith.constant 0 : index
    %c32_152 = arith.constant 32 : index
    %c8_153 = arith.constant 8 : index
    %159 = vector.load %arg1[%c0_151, %c32_152, %c8_153] : memref<1x64x72xf32, #tpu.memory_space<vmem>>, vector<1x8x64xf32>
    %160 = vector.shape_cast %159 : vector<1x8x64xf32> to vector<8x64xf32>
    %c4_154 = arith.constant 4 : index
    %c0_155 = arith.constant 0 : index
    %c0_156 = arith.constant 0 : index
    %161 = vector.load %arg2[%c4_154, %c0_155, %c0_156] : memref<9x8x8xf32, #tpu.memory_space<vmem>>, vector<1x8x8xf32>
    %162 = vector.shape_cast %161 : vector<1x8x8xf32> to vector<8x8xf32>
    %cst_157 = arith.constant dense<0.000000e+00> : vector<8x64xf32>
    %163 = tpu.matmul %162, %160, %cst_157 {dimension_numbers = #tpu.dot_dimension_numbers<[1], [0], [0], [1], [0, 0, 1, 1], [], []>} : vector<8x8xf32>, vector<8x64xf32>, vector<8x64xf32> -> vector<8x64xf32>
    %164 = arith.addf %158, %163 : vector<8x64xf32>
    %c0_158 = arith.constant 0 : index
    %c16_159 = arith.constant 16 : index
    %c8_160 = arith.constant 8 : index
    %165 = vector.load %arg1[%c0_158, %c16_159, %c8_160] : memref<1x64x72xf32, #tpu.memory_space<vmem>>, vector<1x8x64xf32>
    %166 = vector.shape_cast %165 : vector<1x8x64xf32> to vector<8x64xf32>
    %c5_161 = arith.constant 5 : index
    %c0_162 = arith.constant 0 : index
    %c0_163 = arith.constant 0 : index
    %167 = vector.load %arg2[%c5_161, %c0_162, %c0_163] : memref<9x8x8xf32, #tpu.memory_space<vmem>>, vector<1x8x8xf32>
    %168 = vector.shape_cast %167 : vector<1x8x8xf32> to vector<8x8xf32>
    %cst_164 = arith.constant dense<0.000000e+00> : vector<8x64xf32>
    %169 = tpu.matmul %168, %166, %cst_164 {dimension_numbers = #tpu.dot_dimension_numbers<[1], [0], [0], [1], [0, 0, 1, 1], [], []>} : vector<8x8xf32>, vector<8x64xf32>, vector<8x64xf32> -> vector<8x64xf32>
    %170 = arith.addf %164, %169 : vector<8x64xf32>
    %c0_165 = arith.constant 0 : index
    %c8_166 = arith.constant 8 : index
    %c8_167 = arith.constant 8 : index
    %171 = vector.load %arg1[%c0_165, %c8_166, %c8_167] : memref<1x64x72xf32, #tpu.memory_space<vmem>>, vector<1x8x64xf32>
    %172 = vector.shape_cast %171 : vector<1x8x64xf32> to vector<8x64xf32>
    %c6_168 = arith.constant 6 : index
    %c0_169 = arith.constant 0 : index
    %c0_170 = arith.constant 0 : index
    %173 = vector.load %arg2[%c6_168, %c0_169, %c0_170] : memref<9x8x8xf32, #tpu.memory_space<vmem>>, vector<1x8x8xf32>
    %174 = vector.shape_cast %173 : vector<1x8x8xf32> to vector<8x8xf32>
    %cst_171 = arith.constant dense<0.000000e+00> : vector<8x64xf32>
    %175 = tpu.matmul %174, %172, %cst_171 {dimension_numbers = #tpu.dot_dimension_numbers<[1], [0], [0], [1], [0, 0, 1, 1], [], []>} : vector<8x8xf32>, vector<8x64xf32>, vector<8x64xf32> -> vector<8x64xf32>
    %176 = arith.addf %170, %175 : vector<8x64xf32>
    %c0_172 = arith.constant 0 : index
    %c40_173 = arith.constant 40 : index
    %c8_174 = arith.constant 8 : index
    %177 = vector.load %arg1[%c0_172, %c40_173, %c8_174] : memref<1x64x72xf32, #tpu.memory_space<vmem>>, vector<1x8x64xf32>
    %178 = vector.shape_cast %177 : vector<1x8x64xf32> to vector<8x64xf32>
    %c7_175 = arith.constant 7 : index
    %c0_176 = arith.constant 0 : index
    %c0_177 = arith.constant 0 : index
    %179 = vector.load %arg2[%c7_175, %c0_176, %c0_177] : memref<9x8x8xf32, #tpu.memory_space<vmem>>, vector<1x8x8xf32>
    %180 = vector.shape_cast %179 : vector<1x8x8xf32> to vector<8x8xf32>
    %cst_178 = arith.constant dense<0.000000e+00> : vector<8x64xf32>
    %181 = tpu.matmul %180, %178, %cst_178 {dimension_numbers = #tpu.dot_dimension_numbers<[1], [0], [0], [1], [0, 0, 1, 1], [], []>} : vector<8x8xf32>, vector<8x64xf32>, vector<8x64xf32> -> vector<8x64xf32>
    %182 = arith.addf %176, %181 : vector<8x64xf32>
    %c0_179 = arith.constant 0 : index
    %c24_180 = arith.constant 24 : index
    %c8_181 = arith.constant 8 : index
    %183 = vector.load %arg1[%c0_179, %c24_180, %c8_181] : memref<1x64x72xf32, #tpu.memory_space<vmem>>, vector<1x8x64xf32>
    %184 = vector.shape_cast %183 : vector<1x8x64xf32> to vector<8x64xf32>
    %c8_182 = arith.constant 8 : index
    %c0_183 = arith.constant 0 : index
    %c0_184 = arith.constant 0 : index
    %185 = vector.load %arg2[%c8_182, %c0_183, %c0_184] : memref<9x8x8xf32, #tpu.memory_space<vmem>>, vector<1x8x8xf32>
    %186 = vector.shape_cast %185 : vector<1x8x8xf32> to vector<8x8xf32>
    %cst_185 = arith.constant dense<0.000000e+00> : vector<8x64xf32>
    %187 = tpu.matmul %186, %184, %cst_185 {dimension_numbers = #tpu.dot_dimension_numbers<[1], [0], [0], [1], [0, 0, 1, 1], [], []>} : vector<8x8xf32>, vector<8x64xf32>, vector<8x64xf32> -> vector<8x64xf32>
    %188 = arith.addf %182, %187 : vector<8x64xf32>
    %c0_186 = arith.constant 0 : index
    %c0_187 = arith.constant 0 : index
    %189 = vector.load %arg3[%c0_186, %c0_187] : memref<8x1xf32, #tpu.memory_space<vmem>>, vector<8x1xf32>
    %190 = vector.broadcast %189 : vector<8x1xf32> to vector<8x64xf32>
    %191 = arith.addf %188, %190 : vector<8x64xf32>
    %cst_188 = arith.constant 0.000000e+00 : f32
    %192 = vector.broadcast %cst_188 : f32 to vector<8x64xf32>
    %193 = arith.maximumf %191, %192 : vector<8x64xf32>
    %cst_189 = arith.constant dense<0.000000e+00> : vector<8xf32>
    %194 = vector.multi_reduction <add>, %193, %cst_189 [1] : vector<8x64xf32> to vector<8xf32>
    %195 = vector.shape_cast %194 : vector<8xf32> to vector<8x1xf32>
    %196 = arith.mulf %193, %193 : vector<8x64xf32>
    %cst_190 = arith.constant dense<0.000000e+00> : vector<8xf32>
    %197 = vector.multi_reduction <add>, %196, %cst_190 [1] : vector<8x64xf32> to vector<8xf32>
    %198 = vector.shape_cast %197 : vector<8xf32> to vector<8x1xf32>
    %199 = arith.maximumf %130, %193 : vector<8x64xf32>
    %200 = arith.minimumf %131, %193 : vector<8x64xf32>
    %201 = arith.addf %132, %195 : vector<8x1xf32>
    %202 = arith.addf %133, %198 : vector<8x1xf32>
    %cst_191 = arith.constant 0.000000e+00 : f32
    %203 = vector.broadcast %cst_191 : f32 to vector<8x64xf32>
    %c0_192 = arith.constant 0 : index
    %c40_193 = arith.constant 40 : index
    %c0_194 = arith.constant 0 : index
    %204 = vector.load %arg1[%c0_192, %c40_193, %c0_194] : memref<1x64x72xf32, #tpu.memory_space<vmem>>, vector<1x8x64xf32>
    %205 = vector.shape_cast %204 : vector<1x8x64xf32> to vector<8x64xf32>
    %c0_195 = arith.constant 0 : index
    %c0_196 = arith.constant 0 : index
    %c0_197 = arith.constant 0 : index
    %206 = vector.load %arg2[%c0_195, %c0_196, %c0_197] : memref<9x8x8xf32, #tpu.memory_space<vmem>>, vector<1x8x8xf32>
    %207 = vector.shape_cast %206 : vector<1x8x8xf32> to vector<8x8xf32>
    %cst_198 = arith.constant dense<0.000000e+00> : vector<8x64xf32>
    %208 = tpu.matmul %207, %205, %cst_198 {dimension_numbers = #tpu.dot_dimension_numbers<[1], [0], [0], [1], [0, 0, 1, 1], [], []>} : vector<8x8xf32>, vector<8x64xf32>, vector<8x64xf32> -> vector<8x64xf32>
    %209 = arith.addf %203, %208 : vector<8x64xf32>
    %c0_199 = arith.constant 0 : index
    %c24_200 = arith.constant 24 : index
    %c0_201 = arith.constant 0 : index
    %210 = vector.load %arg1[%c0_199, %c24_200, %c0_201] : memref<1x64x72xf32, #tpu.memory_space<vmem>>, vector<1x8x64xf32>
    %211 = vector.shape_cast %210 : vector<1x8x64xf32> to vector<8x64xf32>
    %c1_202 = arith.constant 1 : index
    %c0_203 = arith.constant 0 : index
    %c0_204 = arith.constant 0 : index
    %212 = vector.load %arg2[%c1_202, %c0_203, %c0_204] : memref<9x8x8xf32, #tpu.memory_space<vmem>>, vector<1x8x8xf32>
    %213 = vector.shape_cast %212 : vector<1x8x8xf32> to vector<8x8xf32>
    %cst_205 = arith.constant dense<0.000000e+00> : vector<8x64xf32>
    %214 = tpu.matmul %213, %211, %cst_205 {dimension_numbers = #tpu.dot_dimension_numbers<[1], [0], [0], [1], [0, 0, 1, 1], [], []>} : vector<8x8xf32>, vector<8x64xf32>, vector<8x64xf32> -> vector<8x64xf32>
    %215 = arith.addf %209, %214 : vector<8x64xf32>
    %c0_206 = arith.constant 0 : index
    %c56_207 = arith.constant 56 : index
    %c0_208 = arith.constant 0 : index
    %216 = vector.load %arg1[%c0_206, %c56_207, %c0_208] : memref<1x64x72xf32, #tpu.memory_space<vmem>>, vector<1x8x64xf32>
    %217 = vector.shape_cast %216 : vector<1x8x64xf32> to vector<8x64xf32>
    %c2_209 = arith.constant 2 : index
    %c0_210 = arith.constant 0 : index
    %c0_211 = arith.constant 0 : index
    %218 = vector.load %arg2[%c2_209, %c0_210, %c0_211] : memref<9x8x8xf32, #tpu.memory_space<vmem>>, vector<1x8x8xf32>
    %219 = vector.shape_cast %218 : vector<1x8x8xf32> to vector<8x8xf32>
    %cst_212 = arith.constant dense<0.000000e+00> : vector<8x64xf32>
    %220 = tpu.matmul %219, %217, %cst_212 {dimension_numbers = #tpu.dot_dimension_numbers<[1], [0], [0], [1], [0, 0, 1, 1], [], []>} : vector<8x8xf32>, vector<8x64xf32>, vector<8x64xf32> -> vector<8x64xf32>
    %221 = arith.addf %215, %220 : vector<8x64xf32>
    %c0_213 = arith.constant 0 : index
    %c32_214 = arith.constant 32 : index
    %c8_215 = arith.constant 8 : index
    %222 = vector.load %arg1[%c0_213, %c32_214, %c8_215] : memref<1x64x72xf32, #tpu.memory_space<vmem>>, vector<1x8x64xf32>
    %223 = vector.shape_cast %222 : vector<1x8x64xf32> to vector<8x64xf32>
    %c3_216 = arith.constant 3 : index
    %c0_217 = arith.constant 0 : index
    %c0_218 = arith.constant 0 : index
    %224 = vector.load %arg2[%c3_216, %c0_217, %c0_218] : memref<9x8x8xf32, #tpu.memory_space<vmem>>, vector<1x8x8xf32>
    %225 = vector.shape_cast %224 : vector<1x8x8xf32> to vector<8x8xf32>
    %cst_219 = arith.constant dense<0.000000e+00> : vector<8x64xf32>
    %226 = tpu.matmul %225, %223, %cst_219 {dimension_numbers = #tpu.dot_dimension_numbers<[1], [0], [0], [1], [0, 0, 1, 1], [], []>} : vector<8x8xf32>, vector<8x64xf32>, vector<8x64xf32> -> vector<8x64xf32>
    %227 = arith.addf %221, %226 : vector<8x64xf32>
    %c0_220 = arith.constant 0 : index
    %c16_221 = arith.constant 16 : index
    %c8_222 = arith.constant 8 : index
    %228 = vector.load %arg1[%c0_220, %c16_221, %c8_222] : memref<1x64x72xf32, #tpu.memory_space<vmem>>, vector<1x8x64xf32>
    %229 = vector.shape_cast %228 : vector<1x8x64xf32> to vector<8x64xf32>
    %c4_223 = arith.constant 4 : index
    %c0_224 = arith.constant 0 : index
    %c0_225 = arith.constant 0 : index
    %230 = vector.load %arg2[%c4_223, %c0_224, %c0_225] : memref<9x8x8xf32, #tpu.memory_space<vmem>>, vector<1x8x8xf32>
    %231 = vector.shape_cast %230 : vector<1x8x8xf32> to vector<8x8xf32>
    %cst_226 = arith.constant dense<0.000000e+00> : vector<8x64xf32>
    %232 = tpu.matmul %231, %229, %cst_226 {dimension_numbers = #tpu.dot_dimension_numbers<[1], [0], [0], [1], [0, 0, 1, 1], [], []>} : vector<8x8xf32>, vector<8x64xf32>, vector<8x64xf32> -> vector<8x64xf32>
    %233 = arith.addf %227, %232 : vector<8x64xf32>
    %c0_227 = arith.constant 0 : index
    %c48_228 = arith.constant 48 : index
    %c8_229 = arith.constant 8 : index
    %234 = vector.load %arg1[%c0_227, %c48_228, %c8_229] : memref<1x64x72xf32, #tpu.memory_space<vmem>>, vector<1x8x64xf32>
    %235 = vector.shape_cast %234 : vector<1x8x64xf32> to vector<8x64xf32>
    %c5_230 = arith.constant 5 : index
    %c0_231 = arith.constant 0 : index
    %c0_232 = arith.constant 0 : index
    %236 = vector.load %arg2[%c5_230, %c0_231, %c0_232] : memref<9x8x8xf32, #tpu.memory_space<vmem>>, vector<1x8x8xf32>
    %237 = vector.shape_cast %236 : vector<1x8x8xf32> to vector<8x8xf32>
    %cst_233 = arith.constant dense<0.000000e+00> : vector<8x64xf32>
    %238 = tpu.matmul %237, %235, %cst_233 {dimension_numbers = #tpu.dot_dimension_numbers<[1], [0], [0], [1], [0, 0, 1, 1], [], []>} : vector<8x8xf32>, vector<8x64xf32>, vector<8x64xf32> -> vector<8x64xf32>
    %239 = arith.addf %233, %238 : vector<8x64xf32>
    %c0_234 = arith.constant 0 : index
    %c40_235 = arith.constant 40 : index
    %c8_236 = arith.constant 8 : index
    %240 = vector.load %arg1[%c0_234, %c40_235, %c8_236] : memref<1x64x72xf32, #tpu.memory_space<vmem>>, vector<1x8x64xf32>
    %241 = vector.shape_cast %240 : vector<1x8x64xf32> to vector<8x64xf32>
    %c6_237 = arith.constant 6 : index
    %c0_238 = arith.constant 0 : index
    %c0_239 = arith.constant 0 : index
    %242 = vector.load %arg2[%c6_237, %c0_238, %c0_239] : memref<9x8x8xf32, #tpu.memory_space<vmem>>, vector<1x8x8xf32>
    %243 = vector.shape_cast %242 : vector<1x8x8xf32> to vector<8x8xf32>
    %cst_240 = arith.constant dense<0.000000e+00> : vector<8x64xf32>
    %244 = tpu.matmul %243, %241, %cst_240 {dimension_numbers = #tpu.dot_dimension_numbers<[1], [0], [0], [1], [0, 0, 1, 1], [], []>} : vector<8x8xf32>, vector<8x64xf32>, vector<8x64xf32> -> vector<8x64xf32>
    %245 = arith.addf %239, %244 : vector<8x64xf32>
    %c0_241 = arith.constant 0 : index
    %c24_242 = arith.constant 24 : index
    %c8_243 = arith.constant 8 : index
    %246 = vector.load %arg1[%c0_241, %c24_242, %c8_243] : memref<1x64x72xf32, #tpu.memory_space<vmem>>, vector<1x8x64xf32>
    %247 = vector.shape_cast %246 : vector<1x8x64xf32> to vector<8x64xf32>
    %c7_244 = arith.constant 7 : index
    %c0_245 = arith.constant 0 : index
    %c0_246 = arith.constant 0 : index
    %248 = vector.load %arg2[%c7_244, %c0_245, %c0_246] : memref<9x8x8xf32, #tpu.memory_space<vmem>>, vector<1x8x8xf32>
    %249 = vector.shape_cast %248 : vector<1x8x8xf32> to vector<8x8xf32>
    %cst_247 = arith.constant dense<0.000000e+00> : vector<8x64xf32>
    %250 = tpu.matmul %249, %247, %cst_247 {dimension_numbers = #tpu.dot_dimension_numbers<[1], [0], [0], [1], [0, 0, 1, 1], [], []>} : vector<8x8xf32>, vector<8x64xf32>, vector<8x64xf32> -> vector<8x64xf32>
    %251 = arith.addf %245, %250 : vector<8x64xf32>
    %c0_248 = arith.constant 0 : index
    %c56_249 = arith.constant 56 : index
    %c8_250 = arith.constant 8 : index
    %252 = vector.load %arg1[%c0_248, %c56_249, %c8_250] : memref<1x64x72xf32, #tpu.memory_space<vmem>>, vector<1x8x64xf32>
    %253 = vector.shape_cast %252 : vector<1x8x64xf32> to vector<8x64xf32>
    %c8_251 = arith.constant 8 : index
    %c0_252 = arith.constant 0 : index
    %c0_253 = arith.constant 0 : index
    %254 = vector.load %arg2[%c8_251, %c0_252, %c0_253] : memref<9x8x8xf32, #tpu.memory_space<vmem>>, vector<1x8x8xf32>
    %255 = vector.shape_cast %254 : vector<1x8x8xf32> to vector<8x8xf32>
    %cst_254 = arith.constant dense<0.000000e+00> : vector<8x64xf32>
    %256 = tpu.matmul %255, %253, %cst_254 {dimension_numbers = #tpu.dot_dimension_numbers<[1], [0], [0], [1], [0, 0, 1, 1], [], []>} : vector<8x8xf32>, vector<8x64xf32>, vector<8x64xf32> -> vector<8x64xf32>
    %257 = arith.addf %251, %256 : vector<8x64xf32>
    %c0_255 = arith.constant 0 : index
    %c0_256 = arith.constant 0 : index
    %258 = vector.load %arg3[%c0_255, %c0_256] : memref<8x1xf32, #tpu.memory_space<vmem>>, vector<8x1xf32>
    %259 = vector.broadcast %258 : vector<8x1xf32> to vector<8x64xf32>
    %260 = arith.addf %257, %259 : vector<8x64xf32>
    %cst_257 = arith.constant 0.000000e+00 : f32
    %261 = vector.broadcast %cst_257 : f32 to vector<8x64xf32>
    %262 = arith.maximumf %260, %261 : vector<8x64xf32>
    %cst_258 = arith.constant dense<0.000000e+00> : vector<8xf32>
    %263 = vector.multi_reduction <add>, %262, %cst_258 [1] : vector<8x64xf32> to vector<8xf32>
    %264 = vector.shape_cast %263 : vector<8xf32> to vector<8x1xf32>
    %265 = arith.mulf %262, %262 : vector<8x64xf32>
    %cst_259 = arith.constant dense<0.000000e+00> : vector<8xf32>
    %266 = vector.multi_reduction <add>, %265, %cst_259 [1] : vector<8x64xf32> to vector<8xf32>
    %267 = vector.shape_cast %266 : vector<8xf32> to vector<8x1xf32>
    %268 = arith.maximumf %199, %262 : vector<8x64xf32>
    %269 = arith.minimumf %200, %262 : vector<8x64xf32>
    %270 = arith.addf %201, %264 : vector<8x1xf32>
    %271 = arith.addf %202, %267 : vector<8x1xf32>
    %c0_260 = arith.constant 0 : index
    %c0_261 = arith.constant 0 : index
    %c0_262 = arith.constant 0 : index
    %272 = vector.load %arg4[%c0_260, %c0_261, %c0_262] : memref<1x8x64xf32, #tpu.memory_space<vmem>>, vector<1x8x64xf32>
    %273 = vector.shape_cast %272 : vector<1x8x64xf32> to vector<8x64xf32>
    %274 = vector.shape_cast %268 : vector<8x64xf32> to vector<1x8x64xf32>
    tpu.vector_store %arg4[%c0_260, %c0_261, %c0_262], %274 {strides = array<i32>} : memref<1x8x64xf32, #tpu.memory_space<vmem>>, vector<1x8x64xf32>,
    %c0_263 = arith.constant 0 : index
    %c0_264 = arith.constant 0 : index
    %c0_265 = arith.constant 0 : index
    %275 = vector.load %arg5[%c0_263, %c0_264, %c0_265] : memref<1x8x64xf32, #tpu.memory_space<vmem>>, vector<1x8x64xf32>
    %276 = vector.shape_cast %275 : vector<1x8x64xf32> to vector<8x64xf32>
    %277 = vector.shape_cast %269 : vector<8x64xf32> to vector<1x8x64xf32>
    tpu.vector_store %arg5[%c0_263, %c0_264, %c0_265], %277 {strides = array<i32>} : memref<1x8x64xf32, #tpu.memory_space<vmem>>, vector<1x8x64xf32>,
    %c0_266 = arith.constant 0 : index
    %c0_267 = arith.constant 0 : index
    %c0_268 = arith.constant 0 : index
    %278 = vector.load %arg6[%c0_266, %c0_267, %c0_268] : memref<1x8x2xf32, #tpu.memory_space<vmem>>, vector<1x8x1xf32>
    %279 = vector.shape_cast %278 : vector<1x8x1xf32> to vector<8x1xf32>
    %280 = vector.shape_cast %270 : vector<8x1xf32> to vector<1x8x1xf32>
    tpu.vector_store %arg6[%c0_266, %c0_267, %c0_268], %280 {strides = array<i32>} : memref<1x8x2xf32, #tpu.memory_space<vmem>>, vector<1x8x1xf32>,
    %c0_269 = arith.constant 0 : index
    %c0_270 = arith.constant 0 : index
    %c1_271 = arith.constant 1 : index
    %281 = vector.load %arg6[%c0_269, %c0_270, %c1_271] : memref<1x8x2xf32, #tpu.memory_space<vmem>>, vector<1x8x1xf32>
    %282 = vector.shape_cast %281 : vector<1x8x1xf32> to vector<8x1xf32>
    %283 = vector.shape_cast %271 : vector<8x1xf32> to vector<1x8x1xf32>
    tpu.vector_store %arg6[%c0_269, %c0_270, %c1_271], %283 {strides = array<i32>} : memref<1x8x2xf32, #tpu.memory_space<vmem>>, vector<1x8x1xf32>,
    return
  }
  func.func @transform_0(%arg0: i32) -> (i32, i32, i32) {
    %c0_i32 = arith.constant 0 : i32
    %c0_i32_0 = arith.constant 0 : i32
    %c0_i32_1 = arith.constant 0 : i32
    return %arg0, %c0_i32, %c0_i32_0 : i32, i32, i32
  }
  func.func @transform_1(%arg0: i32) -> (i32, i32, i32) {
    %c0_i32 = arith.constant 0 : i32
    %c0_i32_0 = arith.constant 0 : i32
    %c0_i32_1 = arith.constant 0 : i32
    %c0_i32_2 = arith.constant 0 : i32
    return %c0_i32, %c0_i32_0, %c0_i32_1 : i32, i32, i32
  }
  func.func @transform_2(%arg0: i32) -> (i32, i32) {
    %c0_i32 = arith.constant 0 : i32
    %c0_i32_0 = arith.constant 0 : i32
    %c0_i32_1 = arith.constant 0 : i32
    return %c0_i32, %c0_i32_0 : i32, i32
  }
  func.func @transform_3(%arg0: i32) -> (i32, i32, i32) {
    %c0_i32 = arith.constant 0 : i32
    %c0_i32_0 = arith.constant 0 : i32
    %c0_i32_1 = arith.constant 0 : i32
    return %arg0, %c0_i32, %c0_i32_0 : i32, i32, i32
  }
  func.func @transform_4(%arg0: i32) -> (i32, i32, i32) {
    %c0_i32 = arith.constant 0 : i32
    %c0_i32_0 = arith.constant 0 : i32
    %c0_i32_1 = arith.constant 0 : i32
    return %arg0, %c0_i32, %c0_i32_0 : i32, i32, i32
  }
  func.func @transform_5(%arg0: i32) -> (i32, i32, i32) {
    %c0_i32 = arith.constant 0 : i32
    %c0_i32_0 = arith.constant 0 : i32
    %c0_i32_1 = arith.constant 0 : i32
    return %arg0, %c0_i32, %c0_i32_0 : i32, i32, i32
  }
}

module attributes {stable_mosaic.version = 11 : i64} {
  func.func @_bn_pool_finalize_kernel(%arg0: i32, %arg1: memref<1x8x64xf32, #tpu.memory_space<vmem>>, %arg2: memref<1x8x64xf32, #tpu.memory_space<vmem>>, %arg3: memref<8x1xf32, #tpu.memory_space<vmem>>, %arg4: memref<8x1xf32, #tpu.memory_space<vmem>>, %arg5: memref<1x8x64xf32, #tpu.memory_space<vmem>>) attributes {dimension_semantics = [#tpu.dimension_semantics<parallel>], iteration_bounds = array<i64: 2>, scalar_prefetch = 0 : i64, scratch_operands = 0 : i64, tpu.core_type = #tpu.core_type<tc>, window_params = [{transform_indices = @transform_0, window_bounds = array<i64: 1, 8, 64>}, {transform_indices = @transform_1, window_bounds = array<i64: 1, 8, 64>}, {pipeline_mode = #tpu.pipeline_mode<synchronous>, transform_indices = @transform_2, window_bounds = array<i64: 8, 1>}, {pipeline_mode = #tpu.pipeline_mode<synchronous>, transform_indices = @transform_3, window_bounds = array<i64: 8, 1>}, {transform_indices = @transform_4, window_bounds = array<i64: 1, 8, 64>}]} {
    %c0 = arith.constant 0 : index
    %c0_0 = arith.constant 0 : index
    %0 = vector.load %arg3[%c0, %c0_0] : memref<8x1xf32, #tpu.memory_space<vmem>>, vector<8x1xf32>
    %c0_1 = arith.constant 0 : index
    %c0_2 = arith.constant 0 : index
    %1 = vector.load %arg4[%c0_1, %c0_2] : memref<8x1xf32, #tpu.memory_space<vmem>>, vector<8x1xf32>
    %c0_3 = arith.constant 0 : index
    %c0_4 = arith.constant 0 : index
    %c0_5 = arith.constant 0 : index
    %2 = vector.load %arg1[%c0_3, %c0_4, %c0_5] : memref<1x8x64xf32, #tpu.memory_space<vmem>>, vector<1x8x64xf32>
    %3 = vector.shape_cast %2 : vector<1x8x64xf32> to vector<8x64xf32>
    %4 = vector.broadcast %0 : vector<8x1xf32> to vector<8x64xf32>
    %5 = arith.mulf %3, %4 : vector<8x64xf32>
    %c0_6 = arith.constant 0 : index
    %c0_7 = arith.constant 0 : index
    %c0_8 = arith.constant 0 : index
    %6 = vector.load %arg2[%c0_6, %c0_7, %c0_8] : memref<1x8x64xf32, #tpu.memory_space<vmem>>, vector<1x8x64xf32>
    %7 = vector.shape_cast %6 : vector<1x8x64xf32> to vector<8x64xf32>
    %8 = vector.broadcast %0 : vector<8x1xf32> to vector<8x64xf32>
    %9 = arith.mulf %7, %8 : vector<8x64xf32>
    %10 = arith.maximumf %5, %9 : vector<8x64xf32>
    %11 = vector.broadcast %1 : vector<8x1xf32> to vector<8x64xf32>
    %12 = arith.addf %10, %11 : vector<8x64xf32>
    %c0_9 = arith.constant 0 : index
    %c0_10 = arith.constant 0 : index
    %c0_11 = arith.constant 0 : index
    %13 = vector.load %arg5[%c0_9, %c0_10, %c0_11] : memref<1x8x64xf32, #tpu.memory_space<vmem>>, vector<1x8x64xf32>
    %14 = vector.shape_cast %13 : vector<1x8x64xf32> to vector<8x64xf32>
    %15 = vector.shape_cast %12 : vector<8x64xf32> to vector<1x8x64xf32>
    tpu.vector_store %arg5[%c0_9, %c0_10, %c0_11], %15 {strides = array<i32>} : memref<1x8x64xf32, #tpu.memory_space<vmem>>, vector<1x8x64xf32>,
    return
  }
  func.func @transform_0(%arg0: i32) -> (i32, i32, i32) {
    %c0_i32 = arith.constant 0 : i32
    %c0_i32_0 = arith.constant 0 : i32
    %c0_i32_1 = arith.constant 0 : i32
    return %arg0, %c0_i32, %c0_i32_0 : i32, i32, i32
  }
  func.func @transform_1(%arg0: i32) -> (i32, i32, i32) {
    %c0_i32 = arith.constant 0 : i32
    %c0_i32_0 = arith.constant 0 : i32
    %c0_i32_1 = arith.constant 0 : i32
    return %arg0, %c0_i32, %c0_i32_0 : i32, i32, i32
  }
  func.func @transform_2(%arg0: i32) -> (i32, i32) {
    %c0_i32 = arith.constant 0 : i32
    %c0_i32_0 = arith.constant 0 : i32
    %c0_i32_1 = arith.constant 0 : i32
    return %c0_i32, %c0_i32_0 : i32, i32
  }
  func.func @transform_3(%arg0: i32) -> (i32, i32) {
    %c0_i32 = arith.constant 0 : i32
    %c0_i32_0 = arith.constant 0 : i32
    %c0_i32_1 = arith.constant 0 : i32
    return %c0_i32, %c0_i32_0 : i32, i32
  }
  func.func @transform_4(%arg0: i32) -> (i32, i32, i32) {
    %c0_i32 = arith.constant 0 : i32
    %c0_i32_0 = arith.constant 0 : i32
    %c0_i32_1 = arith.constant 0 : i32
    return %arg0, %c0_i32, %c0_i32_0 : i32, i32, i32
  }
}

</mosaic_0001>

<llo_original>
// kernel: meso1_forward.3
$region0: #{meso1_forward.3}
  #allocation0 [shape = 'u32[]', space=smem, size = 0x4, offset = 0x4, fixed_abs, tag = 'smem constant byte address 0x4 - core index']
  #allocation1 [shape = 'u32[144,128]{1,0:T(1,128)}', space=vmem, size = 0x12000, scoped, tag = 'internal scratch']
  %s0 = inlined_call_operand.vmem [shape: f32[2,8,64], index: 0, kind: input, shape index: {}]
  %s1 = inlined_call_operand.vmem [shape: f32[2,8,64], index: 1, kind: input, shape index: {}]
  %s2 = inlined_call_operand.vmem [shape: f32[8,1], index: 2, kind: input, shape index: {}]
  %s3 = inlined_call_operand.vmem [shape: f32[8,1], index: 3, kind: input, shape index: {}]
  %s4 = inlined_call_operand.vmem [shape: f32[2,8,64], index: 4, kind: output, shape index: {}]
  %s5 = sld [smem:[#allocation0]]
  $region49: #{meso1_forward.3} parent=0
    _
  %s7 = ssub.s32 1, %s5
  %s8 = scalar_select 0, %s7, %s5
  loop: start=0, step=1, limit=4
  $region2: #{meso1_forward.3} parent=0 // loop_pre_header
    _
  $region3: #{meso1_forward.3} parent=0 // loop_header
    %s10 = sphi 0, %s14
    %p11 = scmp.ge.s32.totalorder %s10, 4
    %s20 = sphi 0, %s22
    %s23 = sphi 0, %s20
    %s24 = sphi 0, %s23
    %s40 = sphi 0, %s24
    %s46 = sphi 0, %s48
    %s49 = sphi 0, %s46
    %s50 = sphi 0, %s49
    %s66 = sphi 0, %s50
    %s70 = sphi 0, %s70
    %s72 = sphi 0, %s70
    %s73 = sphi 0, %s72
    %s87 = sphi 0, %s73
    %s91 = sphi 0, %s91
    %s93 = sphi 0, %s91
    %s94 = sphi 0, %s93
    %s108 = sphi 0, %s94
    %s114 = sphi 0, %s116
    %s117 = sphi 0, %s114
    %s118 = sphi 0, %s117
    %s134 = sphi 0, %s118
  $region4: #{meso1_forward.3} parent=0 // loop_header_branch
    %13 = sbr.rel (%p11) target = $region8
  $region5: #{meso1_forward.3} parent=0 // loop_body
    %s15 = ssub.s32 %s10, 1
    %s16 = ssub.s32 %s10, 2
    %s17 = sadd.s32 %s10, 1
    %s18 = ssub.s32 %s10, %s17
    %p19 = scmp.eq.s32.totalorder %s18, 0
    %s21 = sadd.s32 %s20, 1
    %s22 = scalar_select %p19, %s20, %s21
    %p25 = pneg %p19
    %p26 = scmp.eq.s32.totalorder %s10, 1
    %p27 = por %p25, %p26
    %p28 = scmp.ne.s32.totalorder %s20, %s23
    %p29 = scmp.eq.s32.totalorder %s10, 0
    %p30 = por %p28, %p29
    %p31 = scmp.ne.s32.totalorder %s20, %s23
    %p32 = scmp.eq.s32.totalorder %s15, 1
    %p33 = por %p31, %p32
    %p34 = scmp.ne.s32.totalorder %s23, %s24
    %p35 = scmp.eq.s32.totalorder %s15, 0
    %p36 = por %p34, %p35
    %p37 = scmp.ne.s32.totalorder %s23, %s24
    %p38 = scmp.eq.s32.totalorder %s16, 1
    %p39 = por %p37, %p38
    %p41 = scmp.ne.s32.totalorder %s24, %s40
    %p42 = scmp.eq.s32.totalorder %s16, 0
    %p43 = por %p41, %p42
    %s44 = ssub.s32 %s10, %s17
    %p45 = scmp.eq.s32.totalorder %s44, 0
    %s47 = sadd.s32 %s46, 1
    %s48 = scalar_select %p45, %s46, %s47
    %p51 = pneg %p45
    %p52 = scmp.eq.s32.totalorder %s10, 1
    %p53 = por %p51, %p52
    %p54 = scmp.ne.s32.totalorder %s46, %s49
    %p55 = scmp.eq.s32.totalorder %s10, 0
    %p56 = por %p54, %p55
    %p57 = scmp.ne.s32.totalorder %s46, %s49
    %p58 = scmp.eq.s32.totalorder %s15, 1
    %p59 = por %p57, %p58
    %p60 = scmp.ne.s32.totalorder %s49, %s50
    %p61 = scmp.eq.s32.totalorder %s15, 0
    %p62 = por %p60, %p61
    %p63 = scmp.ne.s32.totalorder %s49, %s50
    %p64 = scmp.eq.s32.totalorder %s16, 1
    %p65 = por %p63, %p64
    %p67 = scmp.ne.s32.totalorder %s50, %s66
    %p68 = scmp.eq.s32.totalorder %s16, 0
    %p69 = por %p67, %p68
    %s71 = sadd.s32 %s70, 1
    %p74 = scmp.eq.s32.totalorder %s10, 1
    %p75 = scmp.ne.s32.totalorder %s70, %s72
    %p76 = scmp.eq.s32.totalorder %s10, 0
    %p77 = por %p75, %p76
    %p78 = scmp.ne.s32.totalorder %s70, %s72
    %p79 = scmp.eq.s32.totalorder %s15, 1
    %p80 = por %p78, %p79
    %p81 = scmp.ne.s32.totalorder %s72, %s73
    %p82 = scmp.eq.s32.totalorder %s15, 0
    %p83 = por %p81, %p82
    %p84 = scmp.ne.s32.totalorder %s72, %s73
    %p85 = scmp.eq.s32.totalorder %s16, 1
    %p86 = por %p84, %p85
    %p88 = scmp.ne.s32.totalorder %s73, %s87
    %p89 = scmp.eq.s32.totalorder %s16, 0
    %p90 = por %p88, %p89
    %s92 = sadd.s32 %s91, 1
    %p95 = scmp.eq.s32.totalorder %s10, 1
    %p96 = scmp.ne.s32.totalorder %s91, %s93
    %p97 = scmp.eq.s32.totalorder %s10, 0
    %p98 = por %p96, %p97
    %p99 = scmp.ne.s32.totalorder %s91, %s93
    %p100 = scmp.eq.s32.totalorder %s15, 1
    %p101 = por %p99, %p100
    %p102 = scmp.ne.s32.totalorder %s93, %s94
    %p103 = scmp.eq.s32.totalorder %s15, 0
    %p104 = por %p102, %p103
    %p105 = scmp.ne.s32.totalorder %s93, %s94
    %p106 = scmp.eq.s32.totalorder %s16, 1
    %p107 = por %p105, %p106
    %p109 = scmp.ne.s32.totalorder %s94, %s108
    %p110 = scmp.eq.s32.totalorder %s16, 0
    %p111 = por %p109, %p110
    %s112 = ssub.s32 %s10, %s17
    %p113 = scmp.eq.s32.totalorder %s112, 0
    %s115 = sadd.s32 %s114, 1
    %s116 = scalar_select %p113, %s114, %s115
    %p119 = pneg %p113
    %p120 = scmp.eq.s32.totalorder %s10, 1
    %p121 = por %p119, %p120
    %p122 = scmp.ne.s32.totalorder %s114, %s117
    %p123 = scmp.eq.s32.totalorder %s10, 0
    %p124 = por %p122, %p123
    %p125 = scmp.ne.s32.totalorder %s114, %s117
    %p126 = scmp.eq.s32.totalorder %s15, 1
    %p127 = por %p125, %p126
    %p128 = scmp.ne.s32.totalorder %s117, %s118
    %p129 = scmp.eq.s32.totalorder %s15, 0
    %p130 = por %p128, %p129
    %p131 = scmp.ne.s32.totalorder %s117, %s118
    %p132 = scmp.eq.s32.totalorder %s16, 1
    %p133 = por %p131, %p132
    %p135 = scmp.ne.s32.totalorder %s118, %s134
    %p136 = scmp.eq.s32.totalorder %s16, 0
    %p137 = por %p135, %p136
    %p138 = scmp.le.s32.totalorder 1, %s10
    %p139 = scmp.lt.s32.totalorder %s10, 3
    %p140 = pnand %p138, %p139
    %p141 = pneg %p140
    // Predicated region
    $region9: #{meso1_forward.3} parent=5 // pred_check
      _
    $region10: #{meso1_forward.3} parent=5 // pred_check_branch
      %143 = sbr.rel (%p140) target = $region12
    $region11: #{meso1_forward.3} parent=5 // pred_region
      %s144 = ssub.s32 %s10, 1
      // Predicated region
      $region13: #{meso1_forward.3} parent=11 // pred_check
        %p145 = pneg %p83
      $region14: #{meso1_forward.3} parent=11 // pred_check_branch
        %147 = sbr.rel (%p145) target = $region16
      $region15: #{meso1_forward.3} parent=11 // pred_region
        _
      $region16: #{meso1_forward.3} parent=11 // pred_fallthru
        _
      // Predicated region
      $region17: #{meso1_forward.3} parent=11 // pred_check
        %p148 = pneg %p104
      $region18: #{meso1_forward.3} parent=11 // pred_check_branch
        %150 = sbr.rel (%p148) target = $region20
      $region19: #{meso1_forward.3} parent=11 // pred_region
        _
      $region20: #{meso1_forward.3} parent=11 // pred_fallthru
        _
    $region12: #{meso1_forward.3} parent=5 // pred_fallthru
      _
    %p151 = scmp.lt.s32.totalorder %s10, 2
    // Predicated region
    $region21: #{meso1_forward.3} parent=5 // pred_check
      %p152 = pneg %p151
    $region22: #{meso1_forward.3} parent=5 // pred_check_branch
      %154 = sbr.rel (%p152) target = $region24
    $region23: #{meso1_forward.3} parent=5 // pred_region
      // Predicated region
      $region25: #{meso1_forward.3} parent=23 // pred_check
        %p155 = pneg %p30
      $region26: #{meso1_forward.3} parent=23 // pred_check_branch
        %157 = sbr.rel (%p155) target = $region28
      $region27: #{meso1_forward.3} parent=23 // pred_region
        %p158 = scmp.lt.s32.totalorder %s10, 1
        %s159 = scalar_select %p158, %s10, 1
        %s160 = smul.addr %s159, 8
        %s161 = scalar_lea.vmem %s0, %s160
      $region28: #{meso1_forward.3} parent=23 // pred_fallthru
        _
      // Predicated region
      $region29: #{meso1_forward.3} parent=23 // pred_check
        %p162 = pneg %p56
      $region30: #{meso1_forward.3} parent=23 // pred_check_branch
        %164 = sbr.rel (%p162) target = $region32
      $region31: #{meso1_forward.3} parent=23 // pred_region
        %p165 = scmp.lt.s32.totalorder %s10, 1
        %s166 = scalar_select %p165, %s10, 1
        %s167 = smul.addr %s166, 8
        %s168 = scalar_lea.vmem %s1, %s167
      $region32: #{meso1_forward.3} parent=23 // pred_fallthru
        _
    $region24: #{meso1_forward.3} parent=5 // pred_fallthru
      _
    %p169 = scmp.le.s32.totalorder 1, %s10
    %p170 = scmp.lt.s32.totalorder %s10, 3
    %p171 = pnand %p169, %p170
    %p172 = pneg %p171
    // Predicated region
    $region33: #{meso1_forward.3} parent=5 // pred_check
      _
    $region34: #{meso1_forward.3} parent=5 // pred_check_branch
      %174 = sbr.rel (%p171) target = $region36
    $region35: #{meso1_forward.3} parent=5 // pred_region
      %s175 = ssub.s32 %s10, 1
      %p176 = scmp.lt.s32.totalorder %s15, 1
      %s177 = scalar_select %p176, %s15, 1
      %s178 = smul.addr %s177, 8
      %s179 = scalar_lea.vmem %s0, %s178
      %p180 = pneg %p36
      %p181 = pneg %p33
      %p182 = scmp.lt.s32.totalorder %s15, 1
      %s183 = scalar_select %p182, %s15, 1
      %s184 = smul.addr %s183, 8
      %s185 = scalar_lea.vmem %s1, %s184
      %p186 = pneg %p62
      %p187 = pneg %p59
      %p188 = pneg %p83
      %p189 = pneg %p80
      %p190 = pneg %p104
      %p191 = pneg %p101
      %p192 = pneg %p130
      %p193 = pneg %p127
      %p194 = scmp.lt.s32.totalorder %s15, 1
      %s195 = scalar_select %p194, %s15, 1
      %s196 = smul.addr %s195, 8
      %s197 = scalar_lea.vmem %s4, %s196
      %p198 = scmp.lt.s32.totalorder %s15, 1
      %s199 = scalar_select %p198, %s15, 1
      %s200 = smul.addr %s199, 8
      %s201 = scalar_lea.vmem %s0, %s200
      %p202 = scmp.lt.s32.totalorder %s15, 1
      %s203 = scalar_select %p202, %s15, 1
      %s204 = smul.addr %s203, 8
      %s205 = scalar_lea.vmem %s1, %s204
      %p206 = scmp.lt.s32.totalorder %s15, 1
      %s207 = scalar_select %p206, %s15, 1
      %s208 = smul.addr %s207, 8
      %s209 = scalar_lea.vmem %s4, %s208
      %v210 = vld [vmem:[%s2] sm:$0xff]
      %v211 = vld [vmem:[%s3] sm:$0xff]
      %v212 = vld [vmem:[%s201] sm:$0xff]
      %214 = vset.pattern.permute.xlu0 0
      %215 = vperm.xlu0 %214, %v210
      %v216 = vpop.permute.xlu0 %215
      %v218 = vmul.f32 %v212, %v216
      %v219 = vld [vmem:[%s205] sm:$0xff]
      %v220 = vmul.f32 %v219, %v216
      %v221 = vmax.f32 %v218, %v220
      %223 = vset.pattern.permute.xlu0 0
      %224 = vperm.xlu0 %223, %v211
      %v225 = vpop.permute.xlu0 %224
      %v227 = vadd.f32 %v221, %v225
      %vm228 = vcmask 523264
      %229 = vst.msk [vmem:[%s209] sm:$0xff] %vm228, %v227
      %p230 = scmp.lt.s32.totalorder %s15, 1
      %s231 = scalar_select %p230, %s15, 1
      %s232 = smul.addr %s231, 8
      %s233 = scalar_lea.vmem %s4, %s232
      // Predicated region
      $region37: #{meso1_forward.3} parent=35 // pred_check
        %p234 = pneg %p127
      $region38: #{meso1_forward.3} parent=35 // pred_check_branch
        %236 = sbr.rel (%p234) target = $region40
      $region39: #{meso1_forward.3} parent=35 // pred_region
        _
      $region40: #{meso1_forward.3} parent=35 // pred_fallthru
        _
    $region36: #{meso1_forward.3} parent=5 // pred_fallthru
      _
    %p237 = scmp.le.s32.totalorder 2, %s10
    // Predicated region
    $region41: #{meso1_forward.3} parent=5 // pred_check
      %p238 = pneg %p237
    $region42: #{meso1_forward.3} parent=5 // pred_check_branch
      %240 = sbr.rel (%p238) target = $region44
    $region43: #{meso1_forward.3} parent=5 // pred_region
      %s241 = ssub.s32 %s10, 2
      // Predicated region
      $region45: #{meso1_forward.3} parent=43 // pred_check
        %p242 = pneg %p133
      $region46: #{meso1_forward.3} parent=43 // pred_check_branch
        %244 = sbr.rel (%p242) target = $region48
      $region47: #{meso1_forward.3} parent=43 // pred_region
        %p245 = scmp.lt.s32.totalorder %s16, 1
        %s246 = scalar_select %p245, %s16, 1
        %s247 = smul.addr %s246, 8
        %s248 = scalar_lea.vmem %s4, %s247
      $region48: #{meso1_forward.3} parent=43 // pred_fallthru
        _
    $region44: #{meso1_forward.3} parent=5 // pred_fallthru
      _
  $region6: #{meso1_forward.3} parent=0 // loop_footer
    %s14 = sadd.s32 1, %s10
  $region7: #{meso1_forward.3} parent=0 // loop_footer_branch
    %9 = sbr.rel target = $region3
  $region8: #{meso1_forward.3} parent=0 // loop_exit
    _

// kernel: meso1_forward.2
$region0: #{meso1_forward.2}
  #allocation0 [shape = 'u32[]', space=smem, size = 0x4, offset = 0x4, fixed_abs, tag = 'smem constant byte address 0x4 - core index']
  #allocation1 [shape = 'u32[144,128]{1,0:T(1,128)}', space=vmem, size = 0x12000, scoped, tag = 'internal scratch']
  %s0 = inlined_call_operand.vmem [shape: f32[2,64,72], index: 0, kind: input, shape index: {}]
  %s1 = inlined_call_operand.vmem [shape: f32[9,8,8], index: 1, kind: input, shape index: {}]
  %s2 = inlined_call_operand.vmem [shape: f32[8,1], index: 2, kind: input, shape index: {}]
  %s3 = inlined_call_operand.vmem [shape: f32[2,8,64], index: 3, kind: output, shape index: {0}]
  %s4 = inlined_call_operand.vmem [shape: f32[2,8,64], index: 4, kind: output, shape index: {1}]
  %s5 = inlined_call_operand.vmem [shape: f32[2,8,2], index: 5, kind: output, shape index: {2}]
  %6 = xla_tuple %s3, %s4, %s5
  %s7 = sld [smem:[#allocation0]]
  $region61: #{meso1_forward.2} parent=0
    _
  %s9 = ssub.s32 1, %s7
  %s10 = scalar_select 0, %s9, %s7
  loop: start=0, step=1, limit=4
  $region2: #{meso1_forward.2} parent=0 // loop_pre_header
    _
  $region3: #{meso1_forward.2} parent=0 // loop_header
    %s12 = sphi 0, %s16
    %p13 = scmp.ge.s32.totalorder %s12, 4
    %s22 = sphi 0, %s24
    %s25 = sphi 0, %s22
    %s26 = sphi 0, %s25
    %s42 = sphi 0, %s26
    %s46 = sphi 0, %s46
    %s48 = sphi 0, %s46
    %s49 = sphi 0, %s48
    %s63 = sphi 0, %s49
    %s67 = sphi 0, %s67
    %s69 = sphi 0, %s67
    %s70 = sphi 0, %s69
    %s84 = sphi 0, %s70
    %s90 = sphi 0, %s92
    %s93 = sphi 0, %s90
    %s94 = sphi 0, %s93
    %s110 = sphi 0, %s94
    %s116 = sphi 0, %s118
    %s119 = sphi 0, %s116
    %s120 = sphi 0, %s119
    %s136 = sphi 0, %s120
    %s142 = sphi 0, %s144
    %s145 = sphi 0, %s142
    %s146 = sphi 0, %s145
    %s162 = sphi 0, %s146
  $region4: #{meso1_forward.2} parent=0 // loop_header_branch
    %15 = sbr.rel (%p13) target = $region8
  $region5: #{meso1_forward.2} parent=0 // loop_body
    %s17 = ssub.s32 %s12, 1
    %s18 = ssub.s32 %s12, 2
    %s19 = sadd.s32 %s12, 1
    %s20 = ssub.s32 %s12, %s19
    %p21 = scmp.eq.s32.totalorder %s20, 0
    %s23 = sadd.s32 %s22, 1
    %s24 = scalar_select %p21, %s22, %s23
    %p27 = pneg %p21
    %p28 = scmp.eq.s32.totalorder %s12, 1
    %p29 = por %p27, %p28
    %p30 = scmp.ne.s32.totalorder %s22, %s25
    %p31 = scmp.eq.s32.totalorder %s12, 0
    %p32 = por %p30, %p31
    %p33 = scmp.ne.s32.totalorder %s22, %s25
    %p34 = scmp.eq.s32.totalorder %s17, 1
    %p35 = por %p33, %p34
    %p36 = scmp.ne.s32.totalorder %s25, %s26
    %p37 = scmp.eq.s32.totalorder %s17, 0
    %p38 = por %p36, %p37
    %p39 = scmp.ne.s32.totalorder %s25, %s26
    %p40 = scmp.eq.s32.totalorder %s18, 1
    %p41 = por %p39, %p40
    %p43 = scmp.ne.s32.totalorder %s26, %s42
    %p44 = scmp.eq.s32.totalorder %s18, 0
    %p45 = por %p43, %p44
    %s47 = sadd.s32 %s46, 1
    %p50 = scmp.eq.s32.totalorder %s12, 1
    %p51 = scmp.ne.s32.totalorder %s46, %s48
    %p52 = scmp.eq.s32.totalorder %s12, 0
    %p53 = por %p51, %p52
    %p54 = scmp.ne.s32.totalorder %s46, %s48
    %p55 = scmp.eq.s32.totalorder %s17, 1
    %p56 = por %p54, %p55
    %p57 = scmp.ne.s32.totalorder %s48, %s49
    %p58 = scmp.eq.s32.totalorder %s17, 0
    %p59 = por %p57, %p58
    %p60 = scmp.ne.s32.totalorder %s48, %s49
    %p61 = scmp.eq.s32.totalorder %s18, 1
    %p62 = por %p60, %p61
    %p64 = scmp.ne.s32.totalorder %s49, %s63
    %p65 = scmp.eq.s32.totalorder %s18, 0
    %p66 = por %p64, %p65
    %s68 = sadd.s32 %s67, 1
    %p71 = scmp.eq.s32.totalorder %s12, 1
    %p72 = scmp.ne.s32.totalorder %s67, %s69
    %p73 = scmp.eq.s32.totalorder %s12, 0
    %p74 = por %p72, %p73
    %p75 = scmp.ne.s32.totalorder %s67, %s69
    %p76 = scmp.eq.s32.totalorder %s17, 1
    %p77 = por %p75, %p76
    %p78 = scmp.ne.s32.totalorder %s69, %s70
    %p79 = scmp.eq.s32.totalorder %s17, 0
    %p80 = por %p78, %p79
    %p81 = scmp.ne.s32.totalorder %s69, %s70
    %p82 = scmp.eq.s32.totalorder %s18, 1
    %p83 = por %p81, %p82
    %p85 = scmp.ne.s32.totalorder %s70, %s84
    %p86 = scmp.eq.s32.totalorder %s18, 0
    %p87 = por %p85, %p86
    %s88 = ssub.s32 %s12, %s19
    %p89 = scmp.eq.s32.totalorder %s88, 0
    %s91 = sadd.s32 %s90, 1
    %s92 = scalar_select %p89, %s90, %s91
    %p95 = pneg %p89
    %p96 = scmp.eq.s32.totalorder %s12, 1
    %p97 = por %p95, %p96
    %p98 = scmp.ne.s32.totalorder %s90, %s93
    %p99 = scmp.eq.s32.totalorder %s12, 0
    %p100 = por %p98, %p99
    %p101 = scmp.ne.s32.totalorder %s90, %s93
    %p102 = scmp.eq.s32.totalorder %s17, 1
    %p103 = por %p101, %p102
    %p104 = scmp.ne.s32.totalorder %s93, %s94
    %p105 = scmp.eq.s32.totalorder %s17, 0
    %p106 = por %p104, %p105
    %p107 = scmp.ne.s32.totalorder %s93, %s94
    %p108 = scmp.eq.s32.totalorder %s18, 1
    %p109 = por %p107, %p108
    %p111 = scmp.ne.s32.totalorder %s94, %s110
    %p112 = scmp.eq.s32.totalorder %s18, 0
    %p113 = por %p111, %p112
    %s114 = ssub.s32 %s12, %s19
    %p115 = scmp.eq.s32.totalorder %s114, 0
    %s117 = sadd.s32 %s116, 1
    %s118 = scalar_select %p115, %s116, %s117
    %p121 = pneg %p115
    %p122 = scmp.eq.s32.totalorder %s12, 1
    %p123 = por %p121, %p122
    %p124 = scmp.ne.s32.totalorder %s116, %s119
    %p125 = scmp.eq.s32.totalorder %s12, 0
    %p126 = por %p124, %p125
    %p127 = scmp.ne.s32.totalorder %s116, %s119
    %p128 = scmp.eq.s32.totalorder %s17, 1
    %p129 = por %p127, %p128
    %p130 = scmp.ne.s32.totalorder %s119, %s120
    %p131 = scmp.eq.s32.totalorder %s17, 0
    %p132 = por %p130, %p131
    %p133 = scmp.ne.s32.totalorder %s119, %s120
    %p134 = scmp.eq.s32.totalorder %s18, 1
    %p135 = por %p133, %p134
    %p137 = scmp.ne.s32.totalorder %s120, %s136
    %p138 = scmp.eq.s32.totalorder %s18, 0
    %p139 = por %p137, %p138
    %s140 = ssub.s32 %s12, %s19
    %p141 = scmp.eq.s32.totalorder %s140, 0
    %s143 = sadd.s32 %s142, 1
    %s144 = scalar_select %p141, %s142, %s143
    %p147 = pneg %p141
    %p148 = scmp.eq.s32.totalorder %s12, 1
    %p149 = por %p147, %p148
    %p150 = scmp.ne.s32.totalorder %s142, %s145
    %p151 = scmp.eq.s32.totalorder %s12, 0
    %p152 = por %p150, %p151
    %p153 = scmp.ne.s32.totalorder %s142, %s145
    %p154 = scmp.eq.s32.totalorder %s17, 1
    %p155 = por %p153, %p154
    %p156 = scmp.ne.s32.totalorder %s145, %s146
    %p157 = scmp.eq.s32.totalorder %s17, 0
    %p158 = por %p156, %p157
    %p159 = scmp.ne.s32.totalorder %s145, %s146
    %p160 = scmp.eq.s32.totalorder %s18, 1
    %p161 = por %p159, %p160
    %p163 = scmp.ne.s32.totalorder %s146, %s162
    %p164 = scmp.eq.s32.totalorder %s18, 0
    %p165 = por %p163, %p164
    %p166 = scmp.le.s32.totalorder 1, %s12
    %p167 = scmp.lt.s32.totalorder %s12, 3
    %p168 = pnand %p166, %p167
    %p169 = pneg %p168
    // Predicated region
    $region9: #{meso1_forward.2} parent=5 // pred_check
      _
    $region10: #{meso1_forward.2} parent=5 // pred_check_branch
      %171 = sbr.rel (%p168) target = $region12
    $region11: #{meso1_forward.2} parent=5 // pred_region
      %s172 = ssub.s32 %s12, 1
      // Predicated region
      $region13: #{meso1_forward.2} parent=11 // pred_check
        %p173 = pneg %p59
      $region14: #{meso1_forward.2} parent=11 // pred_check_branch
        %175 = sbr.rel (%p173) target = $region16
      $region15: #{meso1_forward.2} parent=11 // pred_region
        _
      $region16: #{meso1_forward.2} parent=11 // pred_fallthru
        _
      // Predicated region
      $region17: #{meso1_forward.2} parent=11 // pred_check
        %p176 = pneg %p80
      $region18: #{meso1_forward.2} parent=11 // pred_check_branch
        %178 = sbr.rel (%p176) target = $region20
      $region19: #{meso1_forward.2} parent=11 // pred_region
        _
      $region20: #{meso1_forward.2} parent=11 // pred_fallthru
        _
    $region12: #{meso1_forward.2} parent=5 // pred_fallthru
      _
    %p179 = scmp.lt.s32.totalorder %s12, 2
    // Predicated region
    $region21: #{meso1_forward.2} parent=5 // pred_check
      %p180 = pneg %p179
    $region22: #{meso1_forward.2} parent=5 // pred_check_branch
      %182 = sbr.rel (%p180) target = $region24
    $region23: #{meso1_forward.2} parent=5 // pred_region
      // Predicated region
      $region25: #{meso1_forward.2} parent=23 // pred_check
        %p183 = pneg %p32
      $region26: #{meso1_forward.2} parent=23 // pred_check_branch
        %185 = sbr.rel (%p183) target = $region28
      $region27: #{meso1_forward.2} parent=23 // pred_region
        %p186 = scmp.lt.s32.totalorder %s12, 1
        %s187 = scalar_select %p186, %s12, 1
        %s188 = smul.addr %s187, 8
        %s189 = smul.addr %s188, 8
        %s190 = scalar_lea.vmem %s0, %s189
      $region28: #{meso1_forward.2} parent=23 // pred_fallthru
        _
    $region24: #{meso1_forward.2} parent=5 // pred_fallthru
      _
    %p191 = scmp.le.s32.totalorder 1, %s12
    %p192 = scmp.lt.s32.totalorder %s12, 3
    %p193 = pnand %p191, %p192
    %p194 = pneg %p193
    // Predicated region
    $region29: #{meso1_forward.2} parent=5 // pred_check
      _
    $region30: #{meso1_forward.2} parent=5 // pred_check_branch
      %196 = sbr.rel (%p193) target = $region32
    $region31: #{meso1_forward.2} parent=5 // pred_region
      %s197 = ssub.s32 %s12, 1
      %p198 = scmp.lt.s32.totalorder %s17, 1
      %s199 = scalar_select %p198, %s17, 1
      %s200 = smul.addr %s199, 8
      %s201 = smul.addr %s200, 8
      %s202 = scalar_lea.vmem %s0, %s201
      %p203 = pneg %p38
      %p204 = pneg %p35
      %p205 = pneg %p59
      %p206 = pneg %p56
      %p207 = pneg %p80
      %p208 = pneg %p77
      %p209 = pneg %p106
      %p210 = pneg %p103
      %p211 = scmp.lt.s32.totalorder %s17, 1
      %s212 = scalar_select %p211, %s17, 1
      %s213 = smul.addr %s212, 8
      %s214 = scalar_lea.vmem %s3, %s213
      %p215 = pneg %p132
      %p216 = pneg %p129
      %p217 = scmp.lt.s32.totalorder %s17, 1
      %s218 = scalar_select %p217, %s17, 1
      %s219 = smul.addr %s218, 8
      %s220 = scalar_lea.vmem %s4, %s219
      %p221 = pneg %p158
      %p222 = pneg %p155
      %p223 = scmp.lt.s32.totalorder %s17, 1
      %s224 = scalar_select %p223, %s17, 1
      %s225 = smul.addr %s224, 8
      %s226 = scalar_lea.vmem %s5, %s225
      %p227 = scmp.lt.s32.totalorder %s17, 1
      %s228 = scalar_select %p227, %s17, 1
      %s229 = smul.addr %s228, 8
      %s230 = smul.addr %s229, 8
      %s231 = scalar_lea.vmem %s0, %s230
      %p232 = scmp.lt.s32.totalorder %s17, 1
      %s233 = scalar_select %p232, %s17, 1
      %s234 = smul.addr %s233, 8
      %s235 = scalar_lea.vmem %s3, %s234
      %p236 = scmp.lt.s32.totalorder %s17, 1
      %s237 = scalar_select %p236, %s17, 1
      %s238 = smul.addr %s237, 8
      %s239 = scalar_lea.vmem %s4, %s238
      %p240 = scmp.lt.s32.totalorder %s17, 1
      %s241 = scalar_select %p240, %s17, 1
      %s242 = smul.addr %s241, 8
      %s243 = scalar_lea.vmem %s5, %s242
      %v244 = vld [vmem:[%s231] sm:$0xff]
      %v245 = vld [vmem:[%s1] sm:$0xff]
      %v246 = vld [vmem:[%s231 + $0x20] sm:$0xff]
      %s247 = scalar_lea.vmem %s1, 8
      %v248 = vld [vmem:[%s247] sm:$0xff]
      %vm249 = vcmask 64512
      %v251 = vsel %vm249, %v248, 0
      %253 = vmatprep.subr.mxu0 0.0
      %254 = vmatpush1.msra.mxu0 %v246
      %255 = vmatprep.subr.mxu0 0.0
      %256 = vmatpush1.msra.mxu0 0.0
      %257 = vmatprep.subr.mxu0 0.0
      %258 = vmatpush1.msra.mxu0 0.0
      %259 = vmatprep.subr.mxu0 0.0
      %260 = vmatpush1.msra.mxu0 0.0
      %261 = vmatprep.subr.mxu0 0.0
      %262 = vmatpush1.msra.mxu0 0.0
      %263 = vmatprep.subr.mxu0 0.0
      %264 = vmatpush1.msra.mxu0 0.0
      %265 = vmatprep.subr.mxu0 0.0
      %266 = vmatpush1.msra.mxu0 0.0
      %267 = vmatprep.subr.mxu0 0.0
      %268 = vmatpush1.msra.mxu0 0.0
      %269 = vmatprep.subr.mxu0 0.0
      %270 = vmatpush1.msra.mxu0 0.0
      %271 = vmatprep.subr.mxu0 0.0
      %272 = vmatpush1.msra.mxu0 0.0
      %273 = vmatprep.subr.mxu0 0.0
      %274 = vmatpush1.msra.mxu0 0.0
      %275 = vmatprep.subr.mxu0 0.0
      %276 = vmatpush1.msra.mxu0 0.0
      %277 = vmatprep.subr.mxu0 0.0
      %278 = vmatpush1.msra.mxu0 0.0
      %279 = vmatprep.subr.mxu0 0.0
      %280 = vmatpush1.msra.mxu0 0.0
      %281 = vmatprep.subr.mxu0 0.0
      %282 = vmatpush1.msra.mxu0 0.0
      %283 = vmatprep.subr.mxu0 0.0
      %284 = vmatpush1.msra.mxu0 0.0
      %285 = vmatprep.subr.mxu0 0.0
      %286 = vmatpush1.msra.mxu0 0.0
      %287 = vmatprep.subr.mxu0 0.0
      %288 = vmatpush1.msra.mxu0 0.0
      %289 = vmatprep.subr.mxu0 0.0
      %290 = vmatpush1.msra.mxu0 0.0
      %291 = vmatprep.subr.mxu0 0.0
      %292 = vmatpush1.msra.mxu0 0.0
      %293 = vmatprep.subr.mxu0 0.0
      %294 = vmatpush1.msra.mxu0 0.0
      %295 = vmatprep.subr.mxu0 0.0
      %296 = vmatpush1.msra.mxu0 0.0
      %297 = vmatprep.subr.mxu0 0.0
      %298 = vmatpush1.msra.mxu0 0.0
      %299 = vmatprep.subr.mxu0 0.0
      %300 = vmatpush1.msra.mxu0 0.0
      %301 = vmatprep.subr.mxu0 0.0
      %302 = vmatpush1.msra.mxu0 0.0
      %303 = vmatprep.subr.mxu0 0.0
      %304 = vmatpush1.msra.mxu0 0.0
      %305 = vmatprep.subr.mxu0 0.0
      %306 = vmatpush1.msra.mxu0 0.0
      %307 = vmatprep.subr.mxu0 0.0
      %308 = vmatpush1.msra.mxu0 0.0
      %309 = vmatprep.subr.mxu0 0.0
      %310 = vmatpush1.msra.mxu0 0.0
      %311 = vmatprep.subr.mxu0 0.0
      %312 = vmatpush1.msra.mxu0 0.0
      %313 = vmatprep.subr.mxu0 0.0
      %314 = vmatpush1.msra.mxu0 0.0
      %315 = vmatprep.subr.mxu0 0.0
      %316 = vmatpush1.msra.mxu0 0.0
      %317 = vmatprep.mubr.f32.mxu0 0.0
      %318 = vmatmul.mubr.f32.gmra.mrb[0].mxu0 %v251
      %v319 = vpop.f32.mrb[0].mxu0
      %v320 = vadd.f32 0.0, %v319
      %v321 = vpop.f32.mrb[0].mxu0
      %322 = vdwg.mxu0
      %v324 = vsel %vm249, %v245, 0
      %326 = vmatprep.subr.mxu0 0.0
      %327 = vmatpush1.msra.mxu0 %v244
      %328 = vmatprep.subr.mxu0 0.0
      %329 = vmatpush1.msra.mxu0 0.0
      %330 = vmatprep.subr.mxu0 0.0
      %331 = vmatpush1.msra.mxu0 0.0
      %332 = vmatprep.subr.mxu0 0.0
      %333 = vmatpush1.msra.mxu0 0.0
      %334 = vmatprep.subr.mxu0 0.0
      %335 = vmatpush1.msra.mxu0 0.0
      %336 = vmatprep.subr.mxu0 0.0
      %337 = vmatpush1.msra.mxu0 0.0
      %338 = vmatprep.subr.mxu0 0.0
      %339 = vmatpush1.msra.mxu0 0.0
      %340 = vmatprep.subr.mxu0 0.0
      %341 = vmatpush1.msra.mxu0 0.0
      %342 = vmatprep.subr.mxu0 0.0
      %343 = vmatpush1.msra.mxu0 0.0
      %344 = vmatprep.subr.mxu0 0.0
      %345 = vmatpush1.msra.mxu0 0.0
      %346 = vmatprep.subr.mxu0 0.0
      %347 = vmatpush1.msra.mxu0 0.0
      %348 = vmatprep.subr.mxu0 0.0
      %349 = vmatpush1.msra.mxu0 0.0
      %350 = vmatprep.subr.mxu0 0.0
      %351 = vmatpush1.msra.mxu0 0.0
      %352 = vmatprep.subr.mxu0 0.0
      %353 = vmatpush1.msra.mxu0 0.0
      %354 = vmatprep.subr.mxu0 0.0
      %355 = vmatpush1.msra.mxu0 0.0
      %356 = vmatprep.subr.mxu0 0.0
      %357 = vmatpush1.msra.mxu0 0.0
      %358 = vmatprep.subr.mxu0 0.0
      %359 = vmatpush1.msra.mxu0 0.0
      %360 = vmatprep.subr.mxu0 0.0
      %361 = vmatpush1.msra.mxu0 0.0
      %362 = vmatprep.subr.mxu0 0.0
      %363 = vmatpush1.msra.mxu0 0.0
      %364 = vmatprep.subr.mxu0 0.0
      %365 = vmatpush1.msra.mxu0 0.0
      %366 = vmatprep.subr.mxu0 0.0
      %367 = vmatpush1.msra.mxu0 0.0
      %368 = vmatprep.subr.mxu0 0.0
      %369 = vmatpush1.msra.mxu0 0.0
      %370 = vmatprep.subr.mxu0 0.0
      %371 = vmatpush1.msra.mxu0 0.0
      %372 = vmatprep.subr.mxu0 0.0
      %373 = vmatpush1.msra.mxu0 0.0
      %374 = vmatprep.subr.mxu0 0.0
      %375 = vmatpush1.msra.mxu0 0.0
      %376 = vmatprep.subr.mxu0 0.0
      %377 = vmatpush1.msra.mxu0 0.0
      %378 = vmatprep.subr.mxu0 0.0
      %379 = vmatpush1.msra.mxu0 0.0
      %380 = vmatprep.subr.mxu0 0.0
      %381 = vmatpush1.msra.mxu0 0.0
      %382 = vmatprep.subr.mxu0 0.0
      %383 = vmatpush1.msra.mxu0 0.0
      %384 = vmatprep.subr.mxu0 0.0
      %385 = vmatpush1.msra.mxu0 0.0
      %386 = vmatprep.subr.mxu0 0.0
      %387 = vmatpush1.msra.mxu0 0.0
      %388 = vmatprep.subr.mxu0 0.0
      %389 = vmatpush1.msra.mxu0 0.0
      %390 = vmatprep.mubr.f32.mxu0 0.0
      %391 = vmatmul.mubr.f32.gmra.mrb[0].mxu0 %v324
      %v392 = vpop.f32.mrb[0].mxu0
      %v393 = vadd.f32 %v320, %v392
      %v394 = vpop.f32.mrb[0].mxu0
      %395 = vdwg.mxu0
      %v396 = vld [vmem:[%s231 + $0x10] sm:$0xff]
      %s397 = scalar_lea.vmem %s1, 16
      %v398 = vld [vmem:[%s397] sm:$0xff]
      %v400 = vsel %vm249, %v398, 0
      %402 = vmatprep.subr.mxu0 0.0
      %403 = vmatpush1.msra.mxu0 %v396
      %404 = vmatprep.subr.mxu0 0.0
      %405 = vmatpush1.msra.mxu0 0.0
      %406 = vmatprep.subr.mxu0 0.0
      %407 = vmatpush1.msra.mxu0 0.0
      %408 = vmatprep.subr.mxu0 0.0
      %409 = vmatpush1.msra.mxu0 0.0
      %410 = vmatprep.subr.mxu0 0.0
      %411 = vmatpush1.msra.mxu0 0.0
      %412 = vmatprep.subr.mxu0 0.0
      %413 = vmatpush1.msra.mxu0 0.0
      %414 = vmatprep.subr.mxu0 0.0
      %415 = vmatpush1.msra.mxu0 0.0
      %416 = vmatprep.subr.mxu0 0.0
      %417 = vmatpush1.msra.mxu0 0.0
      %418 = vmatprep.subr.mxu0 0.0
      %419 = vmatpush1.msra.mxu0 0.0
      %420 = vmatprep.subr.mxu0 0.0
      %421 = vmatpush1.msra.mxu0 0.0
      %422 = vmatprep.subr.mxu0 0.0
      %423 = vmatpush1.msra.mxu0 0.0
      %424 = vmatprep.subr.mxu0 0.0
      %425 = vmatpush1.msra.mxu0 0.0
      %426 = vmatprep.subr.mxu0 0.0
      %427 = vmatpush1.msra.mxu0 0.0
      %428 = vmatprep.subr.mxu0 0.0
      %429 = vmatpush1.msra.mxu0 0.0
      %430 = vmatprep.subr.mxu0 0.0
      %431 = vmatpush1.msra.mxu0 0.0
      %432 = vmatprep.subr.mxu0 0.0
      %433 = vmatpush1.msra.mxu0 0.0
      %434 = vmatprep.subr.mxu0 0.0
      %435 = vmatpush1.msra.mxu0 0.0
      %436 = vmatprep.subr.mxu0 0.0
      %437 = vmatpush1.msra.mxu0 0.0
      %438 = vmatprep.subr.mxu0 0.0
      %439 = vmatpush1.msra.mxu0 0.0
      %440 = vmatprep.subr.mxu0 0.0
      %441 = vmatpush1.msra.mxu0 0.0
      %442 = vmatprep.subr.mxu0 0.0
      %443 = vmatpush1.msra.mxu0 0.0
      %444 = vmatprep.subr.mxu0 0.0
      %445 = vmatpush1.msra.mxu0 0.0
      %446 = vmatprep.subr.mxu0 0.0
      %447 = vmatpush1.msra.mxu0 0.0
      %448 = vmatprep.subr.mxu0 0.0
      %449 = vmatpush1.msra.mxu0 0.0
      %450 = vmatprep.subr.mxu0 0.0
      %451 = vmatpush1.msra.mxu0 0.0
      %452 = vmatprep.subr.mxu0 0.0
      %453 = vmatpush1.msra.mxu0 0.0
      %454 = vmatprep.subr.mxu0 0.0
      %455 = vmatpush1.msra.mxu0 0.0
      %456 = vmatprep.subr.mxu0 0.0
      %457 = vmatpush1.msra.mxu0 0.0
      %458 = vmatprep.subr.mxu0 0.0
      %459 = vmatpush1.msra.mxu0 0.0
      %460 = vmatprep.subr.mxu0 0.0
      %461 = vmatpush1.msra.mxu0 0.0
      %462 = vmatprep.subr.mxu0 0.0
      %463 = vmatpush1.msra.mxu0 0.0
      %464 = vmatprep.subr.mxu0 0.0
      %465 = vmatpush1.msra.mxu0 0.0
      %466 = vmatprep.mubr.f32.mxu0 0.0
      %467 = vmatmul.mubr.f32.gmra.mrb[0].mxu0 %v400
      %v468 = vpop.f32.mrb[0].mxu0
      %v469 = vadd.f32 0.0, %v468
      %v470 = vpop.f32.mrb[0].mxu0
      %471 = vdwg.mxu0
      %v472 = vadd.f32 %v393, %v469
      %v473 = vld [vmem:[%s231 + $0x8] sm:$0xff]
      %s474 = scalar_lea.vmem %s1, 24
      %v475 = vld [vmem:[%s474] sm:$0xff]
      %v477 = vsel %vm249, %v475, 0
      %479 = vmatprep.subr.mxu0 0.0
      %480 = vmatpush1.msra.mxu0 %v473
      %481 = vmatprep.subr.mxu0 0.0
      %482 = vmatpush1.msra.mxu0 0.0
      %483 = vmatprep.subr.mxu0 0.0
      %484 = vmatpush1.msra.mxu0 0.0
      %485 = vmatprep.subr.mxu0 0.0
      %486 = vmatpush1.msra.mxu0 0.0
      %487 = vmatprep.subr.mxu0 0.0
      %488 = vmatpush1.msra.mxu0 0.0
      %489 = vmatprep.subr.mxu0 0.0
      %490 = vmatpush1.msra.mxu0 0.0
      %491 = vmatprep.subr.mxu0 0.0
      %492 = vmatpush1.msra.mxu0 0.0
      %493 = vmatprep.subr.mxu0 0.0
      %494 = vmatpush1.msra.mxu0 0.0
      %495 = vmatprep.subr.mxu0 0.0
      %496 = vmatpush1.msra.mxu0 0.0
      %497 = vmatprep.subr.mxu0 0.0
      %498 = vmatpush1.msra.mxu0 0.0
      %499 = vmatprep.subr.mxu0 0.0
      %500 = vmatpush1.msra.mxu0 0.0
      %501 = vmatprep.subr.mxu0 0.0
      %502 = vmatpush1.msra.mxu0 0.0
      %503 = vmatprep.subr.mxu0 0.0
      %504 = vmatpush1.msra.mxu0 0.0
      %505 = vmatprep.subr.mxu0 0.0
      %506 = vmatpush1.msra.mxu0 0.0
      %507 = vmatprep.subr.mxu0 0.0
      %508 = vmatpush1.msra.mxu0 0.0
      %509 = vmatprep.subr.mxu0 0.0
      %510 = vmatpush1.msra.mxu0 0.0
      %511 = vmatprep.subr.mxu0 0.0
      %512 = vmatpush1.msra.mxu0 0.0
      %513 = vmatprep.subr.mxu0 0.0
      %514 = vmatpush1.msra.mxu0 0.0
      %515 = vmatprep.subr.mxu0 0.0
      %516 = vmatpush1.msra.mxu0 0.0
      %517 = vmatprep.subr.mxu0 0.0
      %518 = vmatpush1.msra.mxu0 0.0
      %519 = vmatprep.subr.mxu0 0.0
      %520 = vmatpush1.msra.mxu0 0.0
      %521 = vmatprep.subr.mxu0 0.0
      %522 = vmatpush1.msra.mxu0 0.0
      %523 = vmatprep.subr.mxu0 0.0
      %524 = vmatpush1.msra.mxu0 0.0
      %525 = vmatprep.subr.mxu0 0.0
      %526 = vmatpush1.msra.mxu0 0.0
      %527 = vmatprep.subr.mxu0 0.0
      %528 = vmatpush1.msra.mxu0 0.0
      %529 = vmatprep.subr.mxu0 0.0
      %530 = vmatpush1.msra.mxu0 0.0
      %531 = vmatprep.subr.mxu0 0.0
      %532 = vmatpush1.msra.mxu0 0.0
      %533 = vmatprep.subr.mxu0 0.0
      %534 = vmatpush1.msra.mxu0 0.0
      %535 = vmatprep.subr.mxu0 0.0
      %536 = vmatpush1.msra.mxu0 0.0
      %537 = vmatprep.subr.mxu0 0.0
      %538 = vmatpush1.msra.mxu0 0.0
      %539 = vmatprep.subr.mxu0 0.0
      %540 = vmatpush1.msra.mxu0 0.0
      %541 = vmatprep.subr.mxu0 0.0
      %542 = vmatpush1.msra.mxu0 0.0
      %543 = vmatprep.mubr.f32.mxu0 0.0
      %544 = vmatmul.mubr.f32.gmra.mrb[0].mxu0 %v477
      %v545 = vpop.f32.mrb[0].mxu0
      %v546 = vadd.f32 0.0, %v545
      %v547 = vpop.f32.mrb[0].mxu0
      %548 = vdwg.mxu0
      %v549 = vadd.f32 %v472, %v546
      %v550 = vld [vmem:[%s231 + $0x28] sm:$0xff]
      %s551 = scalar_lea.vmem %s1, 32
      %v552 = vld [vmem:[%s551] sm:$0xff]
      %v554 = vsel %vm249, %v552, 0
      %556 = vmatprep.subr.mxu0 0.0
      %557 = vmatpush1.msra.mxu0 %v550
      %558 = vmatprep.subr.mxu0 0.0
      %559 = vmatpush1.msra.mxu0 0.0
      %560 = vmatprep.subr.mxu0 0.0
      %561 = vmatpush1.msra.mxu0 0.0
      %562 = vmatprep.subr.mxu0 0.0
      %563 = vmatpush1.msra.mxu0 0.0
      %564 = vmatprep.subr.mxu0 0.0
      %565 = vmatpush1.msra.mxu0 0.0
      %566 = vmatprep.subr.mxu0 0.0
      %567 = vmatpush1.msra.mxu0 0.0
      %568 = vmatprep.subr.mxu0 0.0
      %569 = vmatpush1.msra.mxu0 0.0
      %570 = vmatprep.subr.mxu0 0.0
      %571 = vmatpush1.msra.mxu0 0.0
      %572 = vmatprep.subr.mxu0 0.0
      %573 = vmatpush1.msra.mxu0 0.0
      %574 = vmatprep.subr.mxu0 0.0
      %575 = vmatpush1.msra.mxu0 0.0
      %576 = vmatprep.subr.mxu0 0.0
      %577 = vmatpush1.msra.mxu0 0.0
      %578 = vmatprep.subr.mxu0 0.0
      %579 = vmatpush1.msra.mxu0 0.0
      %580 = vmatprep.subr.mxu0 0.0
      %581 = vmatpush1.msra.mxu0 0.0
      %582 = vmatprep.subr.mxu0 0.0
      %583 = vmatpush1.msra.mxu0 0.0
      %584 = vmatprep.subr.mxu0 0.0
      %585 = vmatpush1.msra.mxu0 0.0
      %586 = vmatprep.subr.mxu0 0.0
      %587 = vmatpush1.msra.mxu0 0.0
      %588 = vmatprep.subr.mxu0 0.0
      %589 = vmatpush1.msra.mxu0 0.0
      %590 = vmatprep.subr.mxu0 0.0
      %591 = vmatpush1.msra.mxu0 0.0
      %592 = vmatprep.subr.mxu0 0.0
      %593 = vmatpush1.msra.mxu0 0.0
      %594 = vmatprep.subr.mxu0 0.0
      %595 = vmatpush1.msra.mxu0 0.0
      %596 = vmatprep.subr.mxu0 0.0
      %597 = vmatpush1.msra.mxu0 0.0
      %598 = vmatprep.subr.mxu0 0.0
      %599 = vmatpush1.msra.mxu0 0.0
      %600 = vmatprep.subr.mxu0 0.0
      %601 = vmatpush1.msra.mxu0 0.0
      %602 = vmatprep.subr.mxu0 0.0
      %603 = vmatpush1.msra.mxu0 0.0
      %604 = vmatprep.subr.mxu0 0.0
      %605 = vmatpush1.msra.mxu0 0.0
      %606 = vmatprep.subr.mxu0 0.0
      %607 = vmatpush1.msra.mxu0 0.0
      %608 = vmatprep.subr.mxu0 0.0
      %609 = vmatpush1.msra.mxu0 0.0
      %610 = vmatprep.subr.mxu0 0.0
      %611 = vmatpush1.msra.mxu0 0.0
      %612 = vmatprep.subr.mxu0 0.0
      %613 = vmatpush1.msra.mxu0 0.0
      %614 = vmatprep.subr.mxu0 0.0
      %615 = vmatpush1.msra.mxu0 0.0
      %616 = vmatprep.subr.mxu0 0.0
      %617 = vmatpush1.msra.mxu0 0.0
      %618 = vmatprep.subr.mxu0 0.0
      %619 = vmatpush1.msra.mxu0 0.0
      %620 = vmatprep.mubr.f32.mxu0 0.0
      %621 = vmatmul.mubr.f32.gmra.mrb[0].mxu0 %v554
      %v622 = vpop.f32.mrb[0].mxu0
      %v623 = vadd.f32 0.0, %v622
      %v624 = vpop.f32.mrb[0].mxu0
      %625 = vdwg.mxu0
      %v626 = vadd.f32 %v549, %v623
      %v627 = vld [vmem:[%s231 + $0x18] sm:$0xff]
      %s628 = scalar_lea.vmem %s1, 40
      %v629 = vld [vmem:[%s628] sm:$0xff]
      %v631 = vsel %vm249, %v629, 0
      %633 = vmatprep.subr.mxu0 0.0
      %634 = vmatpush1.msra.mxu0 %v627
      %635 = vmatprep.subr.mxu0 0.0
      %636 = vmatpush1.msra.mxu0 0.0
      %637 = vmatprep.subr.mxu0 0.0
      %638 = vmatpush1.msra.mxu0 0.0
      %639 = vmatprep.subr.mxu0 0.0
      %640 = vmatpush1.msra.mxu0 0.0
      %641 = vmatprep.subr.mxu0 0.0
      %642 = vmatpush1.msra.mxu0 0.0
      %643 = vmatprep.subr.mxu0 0.0
      %644 = vmatpush1.msra.mxu0 0.0
      %645 = vmatprep.subr.mxu0 0.0
      %646 = vmatpush1.msra.mxu0 0.0
      %647 = vmatprep.subr.mxu0 0.0
      %648 = vmatpush1.msra.mxu0 0.0
      %649 = vmatprep.subr.mxu0 0.0
      %650 = vmatpush1.msra.mxu0 0.0
      %651 = vmatprep.subr.mxu0 0.0
      %652 = vmatpush1.msra.mxu0 0.0
      %653 = vmatprep.subr.mxu0 0.0
      %654 = vmatpush1.msra.mxu0 0.0
      %655 = vmatprep.subr.mxu0 0.0
      %656 = vmatpush1.msra.mxu0 0.0
      %657 = vmatprep.subr.mxu0 0.0
      %658 = vmatpush1.msra.mxu0 0.0
      %659 = vmatprep.subr.mxu0 0.0
      %660 = vmatpush1.msra.mxu0 0.0
      %661 = vmatprep.subr.mxu0 0.0
      %662 = vmatpush1.msra.mxu0 0.0
      %663 = vmatprep.subr.mxu0 0.0
      %664 = vmatpush1.msra.mxu0 0.0
      %665 = vmatprep.subr.mxu0 0.0
      %666 = vmatpush1.msra.mxu0 0.0
      %667 = vmatprep.subr.mxu0 0.0
      %668 = vmatpush1.msra.mxu0 0.0
      %669 = vmatprep.subr.mxu0 0.0
      %670 = vmatpush1.msra.mxu0 0.0
      %671 = vmatprep.subr.mxu0 0.0
      %672 = vmatpush1.msra.mxu0 0.0
      %673 = vmatprep.subr.mxu0 0.0
      %674 = vmatpush1.msra.mxu0 0.0
      %675 = vmatprep.subr.mxu0 0.0
      %676 = vmatpush1.msra.mxu0 0.0
      %677 = vmatprep.subr.mxu0 0.0
      %678 = vmatpush1.msra.mxu0 0.0
      %679 = vmatprep.subr.mxu0 0.0
      %680 = vmatpush1.msra.mxu0 0.0
      %681 = vmatprep.subr.mxu0 0.0
      %682 = vmatpush1.msra.mxu0 0.0
      %683 = vmatprep.subr.mxu0 0.0
      %684 = vmatpush1.msra.mxu0 0.0
      %685 = vmatprep.subr.mxu0 0.0
      %686 = vmatpush1.msra.mxu0 0.0
      %687 = vmatprep.subr.mxu0 0.0
      %688 = vmatpush1.msra.mxu0 0.0
      %689 = vmatprep.subr.mxu0 0.0
      %690 = vmatpush1.msra.mxu0 0.0
      %691 = vmatprep.subr.mxu0 0.0
      %692 = vmatpush1.msra.mxu0 0.0
      %693 = vmatprep.subr.mxu0 0.0
      %694 = vmatpush1.msra.mxu0 0.0
      %695 = vmatprep.subr.mxu0 0.0
      %696 = vmatpush1.msra.mxu0 0.0
      %697 = vmatprep.mubr.f32.mxu0 0.0
      %698 = vmatmul.mubr.f32.gmra.mrb[0].mxu0 %v631
      %v699 = vpop.f32.mrb[0].mxu0
      %v700 = vadd.f32 0.0, %v699
      %v701 = vpop.f32.mrb[0].mxu0
      %702 = vdwg.mxu0
      %v703 = vadd.f32 %v626, %v700
      %s704 = scalar_lea.vmem %s1, 48
      %v705 = vld [vmem:[%s704] sm:$0xff]
      %707 = vrot.lane.b32.xlu0 %v244, 120
      %v708 = vpop.permute.xlu0 %707
      %v711 = vsel %vm249, %v705, 0
      %713 = vmatprep.subr.mxu0 0.0
      %714 = vmatpush1.msra.mxu0 %v708
      %715 = vmatprep.subr.mxu0 0.0
      %716 = vmatpush1.msra.mxu0 0.0
      %717 = vmatprep.subr.mxu0 0.0
      %718 = vmatpush1.msra.mxu0 0.0
      %719 = vmatprep.subr.mxu0 0.0
      %720 = vmatpush1.msra.mxu0 0.0
      %721 = vmatprep.subr.mxu0 0.0
      %722 = vmatpush1.msra.mxu0 0.0
      %723 = vmatprep.subr.mxu0 0.0
      %724 = vmatpush1.msra.mxu0 0.0
      %725 = vmatprep.subr.mxu0 0.0
      %726 = vmatpush1.msra.mxu0 0.0
      %727 = vmatprep.subr.mxu0 0.0
      %728 = vmatpush1.msra.mxu0 0.0
      %729 = vmatprep.subr.mxu0 0.0
      %730 = vmatpush1.msra.mxu0 0.0
      %731 = vmatprep.subr.mxu0 0.0
      %732 = vmatpush1.msra.mxu0 0.0
      %733 = vmatprep.subr.mxu0 0.0
      %734 = vmatpush1.msra.mxu0 0.0
      %735 = vmatprep.subr.mxu0 0.0
      %736 = vmatpush1.msra.mxu0 0.0
      %737 = vmatprep.subr.mxu0 0.0
      %738 = vmatpush1.msra.mxu0 0.0
      %739 = vmatprep.subr.mxu0 0.0
      %740 = vmatpush1.msra.mxu0 0.0
      %741 = vmatprep.subr.mxu0 0.0
      %742 = vmatpush1.msra.mxu0 0.0
      %743 = vmatprep.subr.mxu0 0.0
      %744 = vmatpush1.msra.mxu0 0.0
      %745 = vmatprep.subr.mxu0 0.0
      %746 = vmatpush1.msra.mxu0 0.0
      %747 = vmatprep.subr.mxu0 0.0
      %748 = vmatpush1.msra.mxu0 0.0
      %749 = vmatprep.subr.mxu0 0.0
      %750 = vmatpush1.msra.mxu0 0.0
      %751 = vmatprep.subr.mxu0 0.0
      %752 = vmatpush1.msra.mxu0 0.0
      %753 = vmatprep.subr.mxu0 0.0
      %754 = vmatpush1.msra.mxu0 0.0
      %755 = vmatprep.subr.mxu0 0.0
      %756 = vmatpush1.msra.mxu0 0.0
      %757 = vmatprep.subr.mxu0 0.0
      %758 = vmatpush1.msra.mxu0 0.0
      %759 = vmatprep.subr.mxu0 0.0
      %760 = vmatpush1.msra.mxu0 0.0
      %761 = vmatprep.subr.mxu0 0.0
      %762 = vmatpush1.msra.mxu0 0.0
      %763 = vmatprep.subr.mxu0 0.0
      %764 = vmatpush1.msra.mxu0 0.0
      %765 = vmatprep.subr.mxu0 0.0
      %766 = vmatpush1.msra.mxu0 0.0
      %767 = vmatprep.subr.mxu0 0.0
      %768 = vmatpush1.msra.mxu0 0.0
      %769 = vmatprep.subr.mxu0 0.0
      %770 = vmatpush1.msra.mxu0 0.0
      %771 = vmatprep.subr.mxu0 0.0
      %772 = vmatpush1.msra.mxu0 0.0
      %773 = vmatprep.subr.mxu0 0.0
      %774 = vmatpush1.msra.mxu0 0.0
      %775 = vmatprep.subr.mxu0 0.0
      %776 = vmatpush1.msra.mxu0 0.0
      %777 = vmatprep.mubr.f32.mxu0 0.0
      %778 = vmatmul.mubr.f32.gmra.mrb[0].mxu0 %v711
      %v779 = vpop.f32.mrb[0].mxu0
      %v780 = vadd.f32 0.0, %v779
      %v781 = vpop.f32.mrb[0].mxu0
      %782 = vdwg.mxu0
      %v783 = vadd.f32 %v703, %v780
      %s784 = scalar_lea.vmem %s1, 56
      %v785 = vld [vmem:[%s784] sm:$0xff]
      %787 = vrot.lane.b32.xlu0 %v246, 120
      %v788 = vpop.permute.xlu0 %787
      %v791 = vsel %vm249, %v785, 0
      %793 = vmatprep.subr.mxu0 0.0
      %794 = vmatpush1.msra.mxu0 %v788
      %795 = vmatprep.subr.mxu0 0.0
      %796 = vmatpush1.msra.mxu0 0.0
      %797 = vmatprep.subr.mxu0 0.0
      %798 = vmatpush1.msra.mxu0 0.0
      %799 = vmatprep.subr.mxu0 0.0
      %800 = vmatpush1.msra.mxu0 0.0
      %801 = vmatprep.subr.mxu0 0.0
      %802 = vmatpush1.msra.mxu0 0.0
      %803 = vmatprep.subr.mxu0 0.0
      %804 = vmatpush1.msra.mxu0 0.0
      %805 = vmatprep.subr.mxu0 0.0
      %806 = vmatpush1.msra.mxu0 0.0
      %807 = vmatprep.subr.mxu0 0.0
      %808 = vmatpush1.msra.mxu0 0.0
      %809 = vmatprep.subr.mxu0 0.0
      %810 = vmatpush1.msra.mxu0 0.0
      %811 = vmatprep.subr.mxu0 0.0
      %812 = vmatpush1.msra.mxu0 0.0
      %813 = vmatprep.subr.mxu0 0.0
      %814 = vmatpush1.msra.mxu0 0.0
      %815 = vmatprep.subr.mxu0 0.0
      %816 = vmatpush1.msra.mxu0 0.0
      %817 = vmatprep.subr.mxu0 0.0
      %818 = vmatpush1.msra.mxu0 0.0
      %819 = vmatprep.subr.mxu0 0.0
      %820 = vmatpush1.msra.mxu0 0.0
      %821 = vmatprep.subr.mxu0 0.0
      %822 = vmatpush1.msra.mxu0 0.0
      %823 = vmatprep.subr.mxu0 0.0
      %824 = vmatpush1.msra.mxu0 0.0
      %825 = vmatprep.subr.mxu0 0.0
      %826 = vmatpush1.msra.mxu0 0.0
      %827 = vmatprep.subr.mxu0 0.0
      %828 = vmatpush1.msra.mxu0 0.0
      %829 = vmatprep.subr.mxu0 0.0
      %830 = vmatpush1.msra.mxu0 0.0
      %831 = vmatprep.subr.mxu0 0.0
      %832 = vmatpush1.msra.mxu0 0.0
      %833 = vmatprep.subr.mxu0 0.0
      %834 = vmatpush1.msra.mxu0 0.0
      %835 = vmatprep.subr.mxu0 0.0
      %836 = vmatpush1.msra.mxu0 0.0
      %837 = vmatprep.subr.mxu0 0.0
      %838 = vmatpush1.msra.mxu0 0.0
      %839 = vmatprep.subr.mxu0 0.0
      %840 = vmatpush1.msra.mxu0 0.0
      %841 = vmatprep.subr.mxu0 0.0
      %842 = vmatpush1.msra.mxu0 0.0
      %843 = vmatprep.subr.mxu0 0.0
      %844 = vmatpush1.msra.mxu0 0.0
      %845 = vmatprep.subr.mxu0 0.0
      %846 = vmatpush1.msra.mxu0 0.0
      %847 = vmatprep.subr.mxu0 0.0
      %848 = vmatpush1.msra.mxu0 0.0
      %849 = vmatprep.subr.mxu0 0.0
      %850 = vmatpush1.msra.mxu0 0.0
      %851 = vmatprep.subr.mxu0 0.0
      %852 = vmatpush1.msra.mxu0 0.0
      %853 = vmatprep.subr.mxu0 0.0
      %854 = vmatpush1.msra.mxu0 0.0
      %855 = vmatprep.subr.mxu0 0.0
      %856 = vmatpush1.msra.mxu0 0.0
      %857 = vmatprep.mubr.f32.mxu0 0.0
      %858 = vmatmul.mubr.f32.gmra.mrb[0].mxu0 %v791
      %v859 = vpop.f32.mrb[0].mxu0
      %v860 = vadd.f32 0.0, %v859
      %v861 = vpop.f32.mrb[0].mxu0
      %862 = vdwg.mxu0
      %v863 = vadd.f32 %v783, %v860
      %s864 = scalar_lea.vmem %s1, 64
      %v865 = vld [vmem:[%s864] sm:$0xff]
      %867 = vrot.lane.b32.xlu0 %v396, 120
      %v868 = vpop.permute.xlu0 %867
      %v871 = vsel %vm249, %v865, 0
      %873 = vmatprep.subr.mxu0 0.0
      %874 = vmatpush1.msra.mxu0 %v868
      %875 = vmatprep.subr.mxu0 0.0
      %876 = vmatpush1.msra.mxu0 0.0
      %877 = vmatprep.subr.mxu0 0.0
      %878 = vmatpush1.msra.mxu0 0.0
      %879 = vmatprep.subr.mxu0 0.0
      %880 = vmatpush1.msra.mxu0 0.0
      %881 = vmatprep.subr.mxu0 0.0
      %882 = vmatpush1.msra.mxu0 0.0
      %883 = vmatprep.subr.mxu0 0.0
      %884 = vmatpush1.msra.mxu0 0.0
      %885 = vmatprep.subr.mxu0 0.0
      %886 = vmatpush1.msra.mxu0 0.0
      %887 = vmatprep.subr.mxu0 0.0
      %888 = vmatpush1.msra.mxu0 0.0
      %889 = vmatprep.subr.mxu0 0.0
      %890 = vmatpush1.msra.mxu0 0.0
      %891 = vmatprep.subr.mxu0 0.0
      %892 = vmatpush1.msra.mxu0 0.0
      %893 = vmatprep.subr.mxu0 0.0
      %894 = vmatpush1.msra.mxu0 0.0
      %895 = vmatprep.subr.mxu0 0.0
      %896 = vmatpush1.msra.mxu0 0.0
      %897 = vmatprep.subr.mxu0 0.0
      %898 = vmatpush1.msra.mxu0 0.0
      %899 = vmatprep.subr.mxu0 0.0
      %900 = vmatpush1.msra.mxu0 0.0
      %901 = vmatprep.subr.mxu0 0.0
      %902 = vmatpush1.msra.mxu0 0.0
      %903 = vmatprep.subr.mxu0 0.0
      %904 = vmatpush1.msra.mxu0 0.0
      %905 = vmatprep.subr.mxu0 0.0
      %906 = vmatpush1.msra.mxu0 0.0
      %907 = vmatprep.subr.mxu0 0.0
      %908 = vmatpush1.msra.mxu0 0.0
      %909 = vmatprep.subr.mxu0 0.0
      %910 = vmatpush1.msra.mxu0 0.0
      %911 = vmatprep.subr.mxu0 0.0
      %912 = vmatpush1.msra.mxu0 0.0
      %913 = vmatprep.subr.mxu0 0.0
      %914 = vmatpush1.msra.mxu0 0.0
      %915 = vmatprep.subr.mxu0 0.0
      %916 = vmatpush1.msra.mxu0 0.0
      %917 = vmatprep.subr.mxu0 0.0
      %918 = vmatpush1.msra.mxu0 0.0
      %919 = vmatprep.subr.mxu0 0.0
      %920 = vmatpush1.msra.mxu0 0.0
      %921 = vmatprep.subr.mxu0 0.0
      %922 = vmatpush1.msra.mxu0 0.0
      %923 = vmatprep.subr.mxu0 0.0
      %924 = vmatpush1.msra.mxu0 0.0
      %925 = vmatprep.subr.mxu0 0.0
      %926 = vmatpush1.msra.mxu0 0.0
      %927 = vmatprep.subr.mxu0 0.0
      %928 = vmatpush1.msra.mxu0 0.0
      %929 = vmatprep.subr.mxu0 0.0
      %930 = vmatpush1.msra.mxu0 0.0
      %931 = vmatprep.subr.mxu0 0.0
      %932 = vmatpush1.msra.mxu0 0.0
      %933 = vmatprep.subr.mxu0 0.0
      %934 = vmatpush1.msra.mxu0 0.0
      %935 = vmatprep.subr.mxu0 0.0
      %936 = vmatpush1.msra.mxu0 0.0
      %937 = vmatprep.mubr.f32.mxu0 0.0
      %938 = vmatmul.mubr.f32.gmra.mrb[0].mxu0 %v871
      %v939 = vpop.f32.mrb[0].mxu0
      %v940 = vadd.f32 0.0, %v939
      %v941 = vpop.f32.mrb[0].mxu0
      %942 = vdwg.mxu0
      %v943 = vadd.f32 %v863, %v940
      %v944 = vld [vmem:[%s2] sm:$0xff]
      %946 = vset.pattern.permute.xlu0 0
      %947 = vperm.xlu0 %946, %v944
      %v948 = vpop.permute.xlu0 %947
      %v950 = vadd.f32 %v943, %v948
      %v951 = vmax.f32 %v950, 0.0
      %vm952 = vcmask 523264
      %v953 = vsel %vm952, %v951, 0.0
      %954 = vadd.xlane.f32.xlu0 %v953
      %v955 = vpop.xlane.xlu0 %954
      %v956 = vmul.f32 %v951, %v951
      %v957 = vsel %vm952, %v956, 0.0
      %958 = vadd.xlane.f32.xlu0 %v957
      %v959 = vpop.xlane.xlu0 %958
      %960 = vmatprep.subr.mxu0 0.0
      %961 = vmatpush1.msra.mxu0 %v396
      %962 = vmatprep.subr.mxu0 0.0
      %963 = vmatpush1.msra.mxu0 0.0
      %964 = vmatprep.subr.mxu0 0.0
      %965 = vmatpush1.msra.mxu0 0.0
      %966 = vmatprep.subr.mxu0 0.0
      %967 = vmatpush1.msra.mxu0 0.0
      %968 = vmatprep.subr.mxu0 0.0
      %969 = vmatpush1.msra.mxu0 0.0
      %970 = vmatprep.subr.mxu0 0.0
      %971 = vmatpush1.msra.mxu0 0.0
      %972 = vmatprep.subr.mxu0 0.0
      %973 = vmatpush1.msra.mxu0 0.0
      %974 = vmatprep.subr.mxu0 0.0
      %975 = vmatpush1.msra.mxu0 0.0
      %976 = vmatprep.subr.mxu0 0.0
      %977 = vmatpush1.msra.mxu0 0.0
      %978 = vmatprep.subr.mxu0 0.0
      %979 = vmatpush1.msra.mxu0 0.0
      %980 = vmatprep.subr.mxu0 0.0
      %981 = vmatpush1.msra.mxu0 0.0
      %982 = vmatprep.subr.mxu0 0.0
      %983 = vmatpush1.msra.mxu0 0.0
      %984 = vmatprep.subr.mxu0 0.0
      %985 = vmatpush1.msra.mxu0 0.0
      %986 = vmatprep.subr.mxu0 0.0
      %987 = vmatpush1.msra.mxu0 0.0
      %988 = vmatprep.subr.mxu0 0.0
      %989 = vmatpush1.msra.mxu0 0.0
      %990 = vmatprep.subr.mxu0 0.0
      %991 = vmatpush1.msra.mxu0 0.0
      %992 = vmatprep.subr.mxu0 0.0
      %993 = vmatpush1.msra.mxu0 0.0
      %994 = vmatprep.subr.mxu0 0.0
      %995 = vmatpush1.msra.mxu0 0.0
      %996 = vmatprep.subr.mxu0 0.0
      %997 = vmatpush1.msra.mxu0 0.0
      %998 = vmatprep.subr.mxu0 0.0
      %999 = vmatpush1.msra.mxu0 0.0
      %1000 = vmatprep.subr.mxu0 0.0
      %1001 = vmatpush1.msra.mxu0 0.0
      %1002 = vmatprep.subr.mxu0 0.0
      %1003 = vmatpush1.msra.mxu0 0.0
      %1004 = vmatprep.subr.mxu0 0.0
      %1005 = vmatpush1.msra.mxu0 0.0
      %1006 = vmatprep.subr.mxu0 0.0
      %1007 = vmatpush1.msra.mxu0 0.0
      %1008 = vmatprep.subr.mxu0 0.0
      %1009 = vmatpush1.msra.mxu0 0.0
      %1010 = vmatprep.subr.mxu0 0.0
      %1011 = vmatpush1.msra.mxu0 0.0
      %1012 = vmatprep.subr.mxu0 0.0
      %1013 = vmatpush1.msra.mxu0 0.0
      %1014 = vmatprep.subr.mxu0 0.0
      %1015 = vmatpush1.msra.mxu0 0.0
      %1016 = vmatprep.subr.mxu0 0.0
      %1017 = vmatpush1.msra.mxu0 0.0
      %1018 = vmatprep.subr.mxu0 0.0
      %1019 = vmatpush1.msra.mxu0 0.0
      %1020 = vmatprep.subr.mxu0 0.0
      %1021 = vmatpush1.msra.mxu0 0.0
      %1022 = vmatprep.subr.mxu0 0.0
      %1023 = vmatpush1.msra.mxu0 0.0
      %1024 = vmatprep.mubr.f32.mxu0 0.0
      %1025 = vmatmul.mubr.f32.gmra.mrb[0].mxu0 %v251
      %v1026 = vpop.f32.mrb[0].mxu0
      %v1027 = vadd.f32 0.0, %v1026
      %v1028 = vpop.f32.mrb[0].mxu0
      %1029 = vdwg.mxu0
      %1030 = vmatprep.subr.mxu0 0.0
      %1031 = vmatpush1.msra.mxu0 %v246
      %1032 = vmatprep.subr.mxu0 0.0
      %1033 = vmatpush1.msra.mxu0 0.0
      %1034 = vmatprep.subr.mxu0 0.0
      %1035 = vmatpush1.msra.mxu0 0.0
      %1036 = vmatprep.subr.mxu0 0.0
      %1037 = vmatpush1.msra.mxu0 0.0
      %1038 = vmatprep.subr.mxu0 0.0
      %1039 = vmatpush1.msra.mxu0 0.0
      %1040 = vmatprep.subr.mxu0 0.0
      %1041 = vmatpush1.msra.mxu0 0.0
      %1042 = vmatprep.subr.mxu0 0.0
      %1043 = vmatpush1.msra.mxu0 0.0
      %1044 = vmatprep.subr.mxu0 0.0
      %1045 = vmatpush1.msra.mxu0 0.0
      %1046 = vmatprep.subr.mxu0 0.0
      %1047 = vmatpush1.msra.mxu0 0.0
      %1048 = vmatprep.subr.mxu0 0.0
      %1049 = vmatpush1.msra.mxu0 0.0
      %1050 = vmatprep.subr.mxu0 0.0
      %1051 = vmatpush1.msra.mxu0 0.0
      %1052 = vmatprep.subr.mxu0 0.0
      %1053 = vmatpush1.msra.mxu0 0.0
      %1054 = vmatprep.subr.mxu0 0.0
      %1055 = vmatpush1.msra.mxu0 0.0
      %1056 = vmatprep.subr.mxu0 0.0
      %1057 = vmatpush1.msra.mxu0 0.0
      %1058 = vmatprep.subr.mxu0 0.0
      %1059 = vmatpush1.msra.mxu0 0.0
      %1060 = vmatprep.subr.mxu0 0.0
      %1061 = vmatpush1.msra.mxu0 0.0
      %1062 = vmatprep.subr.mxu0 0.0
      %1063 = vmatpush1.msra.mxu0 0.0
      %1064 = vmatprep.subr.mxu0 0.0
      %1065 = vmatpush1.msra.mxu0 0.0
      %1066 = vmatprep.subr.mxu0 0.0
      %1067 = vmatpush1.msra.mxu0 0.0
      %1068 = vmatprep.subr.mxu0 0.0
      %1069 = vmatpush1.msra.mxu0 0.0
      %1070 = vmatprep.subr.mxu0 0.0
      %1071 = vmatpush1.msra.mxu0 0.0
      %1072 = vmatprep.subr.mxu0 0.0
      %1073 = vmatpush1.msra.mxu0 0.0
      %1074 = vmatprep.subr.mxu0 0.0
      %1075 = vmatpush1.msra.mxu0 0.0
      %1076 = vmatprep.subr.mxu0 0.0
      %1077 = vmatpush1.msra.mxu0 0.0
      %1078 = vmatprep.subr.mxu0 0.0
      %1079 = vmatpush1.msra.mxu0 0.0
      %1080 = vmatprep.subr.mxu0 0.0
      %1081 = vmatpush1.msra.mxu0 0.0
      %1082 = vmatprep.subr.mxu0 0.0
      %1083 = vmatpush1.msra.mxu0 0.0
      %1084 = vmatprep.subr.mxu0 0.0
      %1085 = vmatpush1.msra.mxu0 0.0
      %1086 = vmatprep.subr.mxu0 0.0
      %1087 = vmatpush1.msra.mxu0 0.0
      %1088 = vmatprep.subr.mxu0 0.0
      %1089 = vmatpush1.msra.mxu0 0.0
      %1090 = vmatprep.subr.mxu0 0.0
      %1091 = vmatpush1.msra.mxu0 0.0
      %1092 = vmatprep.subr.mxu0 0.0
      %1093 = vmatpush1.msra.mxu0 0.0
      %1094 = vmatprep.mubr.f32.mxu0 0.0
      %1095 = vmatmul.mubr.f32.gmra.mrb[0].mxu0 %v324
      %v1096 = vpop.f32.mrb[0].mxu0
      %v1097 = vadd.f32 %v1027, %v1096
      %v1098 = vpop.f32.mrb[0].mxu0
      %1099 = vdwg.mxu0
      %v1100 = vld [vmem:[%s231 + $0x30] sm:$0xff]
      %1101 = vmatprep.subr.mxu0 0.0
      %1102 = vmatpush1.msra.mxu0 %v1100
      %1103 = vmatprep.subr.mxu0 0.0
      %1104 = vmatpush1.msra.mxu0 0.0
      %1105 = vmatprep.subr.mxu0 0.0
      %1106 = vmatpush1.msra.mxu0 0.0
      %1107 = vmatprep.subr.mxu0 0.0
      %1108 = vmatpush1.msra.mxu0 0.0
      %1109 = vmatprep.subr.mxu0 0.0
      %1110 = vmatpush1.msra.mxu0 0.0
      %1111 = vmatprep.subr.mxu0 0.0
      %1112 = vmatpush1.msra.mxu0 0.0
      %1113 = vmatprep.subr.mxu0 0.0
      %1114 = vmatpush1.msra.mxu0 0.0
      %1115 = vmatprep.subr.mxu0 0.0
      %1116 = vmatpush1.msra.mxu0 0.0
      %1117 = vmatprep.subr.mxu0 0.0
      %1118 = vmatpush1.msra.mxu0 0.0
      %1119 = vmatprep.subr.mxu0 0.0
      %1120 = vmatpush1.msra.mxu0 0.0
      %1121 = vmatprep.subr.mxu0 0.0
      %1122 = vmatpush1.msra.mxu0 0.0
      %1123 = vmatprep.subr.mxu0 0.0
      %1124 = vmatpush1.msra.mxu0 0.0
      %1125 = vmatprep.subr.mxu0 0.0
      %1126 = vmatpush1.msra.mxu0 0.0
      %1127 = vmatprep.subr.mxu0 0.0
      %1128 = vmatpush1.msra.mxu0 0.0
      %1129 = vmatprep.subr.mxu0 0.0
      %1130 = vmatpush1.msra.mxu0 0.0
      %1131 = vmatprep.subr.mxu0 0.0
      %1132 = vmatpush1.msra.mxu0 0.0
      %1133 = vmatprep.subr.mxu0 0.0
      %1134 = vmatpush1.msra.mxu0 0.0
      %1135 = vmatprep.subr.mxu0 0.0
      %1136 = vmatpush1.msra.mxu0 0.0
      %1137 = vmatprep.subr.mxu0 0.0
      %1138 = vmatpush1.msra.mxu0 0.0
      %1139 = vmatprep.subr.mxu0 0.0
      %1140 = vmatpush1.msra.mxu0 0.0
      %1141 = vmatprep.subr.mxu0 0.0
      %1142 = vmatpush1.msra.mxu0 0.0
      %1143 = vmatprep.subr.mxu0 0.0
      %1144 = vmatpush1.msra.mxu0 0.0
      %1145 = vmatprep.subr.mxu0 0.0
      %1146 = vmatpush1.msra.mxu0 0.0
      %1147 = vmatprep.subr.mxu0 0.0
      %1148 = vmatpush1.msra.mxu0 0.0
      %1149 = vmatprep.subr.mxu0 0.0
      %1150 = vmatpush1.msra.mxu0 0.0
      %1151 = vmatprep.subr.mxu0 0.0
      %1152 = vmatpush1.msra.mxu0 0.0
      %1153 = vmatprep.subr.mxu0 0.0
      %1154 = vmatpush1.msra.mxu0 0.0
      %1155 = vmatprep.subr.mxu0 0.0
      %1156 = vmatpush1.msra.mxu0 0.0
      %1157 = vmatprep.subr.mxu0 0.0
      %1158 = vmatpush1.msra.mxu0 0.0
      %1159 = vmatprep.subr.mxu0 0.0
      %1160 = vmatpush1.msra.mxu0 0.0
      %1161 = vmatprep.subr.mxu0 0.0
      %1162 = vmatpush1.msra.mxu0 0.0
      %1163 = vmatprep.subr.mxu0 0.0
      %1164 = vmatpush1.msra.mxu0 0.0
      %1165 = vmatprep.mubr.f32.mxu0 0.0
      %1166 = vmatmul.mubr.f32.gmra.mrb[0].mxu0 %v400
      %v1167 = vpop.f32.mrb[0].mxu0
      %v1168 = vadd.f32 0.0, %v1167
      %v1169 = vpop.f32.mrb[0].mxu0
      %1170 = vdwg.mxu0
      %v1171 = vadd.f32 %v1097, %v1168
      %1172 = vmatprep.subr.mxu0 0.0
      %1173 = vmatpush1.msra.mxu0 %v550
      %1174 = vmatprep.subr.mxu0 0.0
      %1175 = vmatpush1.msra.mxu0 0.0
      %1176 = vmatprep.subr.mxu0 0.0
      %1177 = vmatpush1.msra.mxu0 0.0
      %1178 = vmatprep.subr.mxu0 0.0
      %1179 = vmatpush1.msra.mxu0 0.0
      %1180 = vmatprep.subr.mxu0 0.0
      %1181 = vmatpush1.msra.mxu0 0.0
      %1182 = vmatprep.subr.mxu0 0.0
      %1183 = vmatpush1.msra.mxu0 0.0
      %1184 = vmatprep.subr.mxu0 0.0
      %1185 = vmatpush1.msra.mxu0 0.0
      %1186 = vmatprep.subr.mxu0 0.0
      %1187 = vmatpush1.msra.mxu0 0.0
      %1188 = vmatprep.subr.mxu0 0.0
      %1189 = vmatpush1.msra.mxu0 0.0
      %1190 = vmatprep.subr.mxu0 0.0
      %1191 = vmatpush1.msra.mxu0 0.0
      %1192 = vmatprep.subr.mxu0 0.0
      %1193 = vmatpush1.msra.mxu0 0.0
      %1194 = vmatprep.subr.mxu0 0.0
      %1195 = vmatpush1.msra.mxu0 0.0
      %1196 = vmatprep.subr.mxu0 0.0
      %1197 = vmatpush1.msra.mxu0 0.0
      %1198 = vmatprep.subr.mxu0 0.0
      %1199 = vmatpush1.msra.mxu0 0.0
      %1200 = vmatprep.subr.mxu0 0.0
      %1201 = vmatpush1.msra.mxu0 0.0
      %1202 = vmatprep.subr.mxu0 0.0
      %1203 = vmatpush1.msra.mxu0 0.0
      %1204 = vmatprep.subr.mxu0 0.0
      %1205 = vmatpush1.msra.mxu0 0.0
      %1206 = vmatprep.subr.mxu0 0.0
      %1207 = vmatpush1.msra.mxu0 0.0
      %1208 = vmatprep.subr.mxu0 0.0
      %1209 = vmatpush1.msra.mxu0 0.0
      %1210 = vmatprep.subr.mxu0 0.0
      %1211 = vmatpush1.msra.mxu0 0.0
      %1212 = vmatprep.subr.mxu0 0.0
      %1213 = vmatpush1.msra.mxu0 0.0
      %1214 = vmatprep.subr.mxu0 0.0
      %1215 = vmatpush1.msra.mxu0 0.0
      %1216 = vmatprep.subr.mxu0 0.0
      %1217 = vmatpush1.msra.mxu0 0.0
      %1218 = vmatprep.subr.mxu0 0.0
      %1219 = vmatpush1.msra.mxu0 0.0
      %1220 = vmatprep.subr.mxu0 0.0
      %1221 = vmatpush1.msra.mxu0 0.0
      %1222 = vmatprep.subr.mxu0 0.0
      %1223 = vmatpush1.msra.mxu0 0.0
      %1224 = vmatprep.subr.mxu0 0.0
      %1225 = vmatpush1.msra.mxu0 0.0
      %1226 = vmatprep.subr.mxu0 0.0
      %1227 = vmatpush1.msra.mxu0 0.0
      %1228 = vmatprep.subr.mxu0 0.0
      %1229 = vmatpush1.msra.mxu0 0.0
      %1230 = vmatprep.subr.mxu0 0.0
      %1231 = vmatpush1.msra.mxu0 0.0
      %1232 = vmatprep.subr.mxu0 0.0
      %1233 = vmatpush1.msra.mxu0 0.0
      %1234 = vmatprep.subr.mxu0 0.0
      %1235 = vmatpush1.msra.mxu0 0.0
      %1236 = vmatprep.mubr.f32.mxu0 0.0
      %1237 = vmatmul.mubr.f32.gmra.mrb[0].mxu0 %v477
      %v1238 = vpop.f32.mrb[0].mxu0
      %v1239 = vadd.f32 0.0, %v1238
      %v1240 = vpop.f32.mrb[0].mxu0
      %1241 = vdwg.mxu0
      %v1242 = vadd.f32 %v1171, %v1239
      %1243 = vmatprep.subr.mxu0 0.0
      %1244 = vmatpush1.msra.mxu0 %v627
      %1245 = vmatprep.subr.mxu0 0.0
      %1246 = vmatpush1.msra.mxu0 0.0
      %1247 = vmatprep.subr.mxu0 0.0
      %1248 = vmatpush1.msra.mxu0 0.0
      %1249 = vmatprep.subr.mxu0 0.0
      %1250 = vmatpush1.msra.mxu0 0.0
      %1251 = vmatprep.subr.mxu0 0.0
      %1252 = vmatpush1.msra.mxu0 0.0
      %1253 = vmatprep.subr.mxu0 0.0
      %1254 = vmatpush1.msra.mxu0 0.0
      %1255 = vmatprep.subr.mxu0 0.0
      %1256 = vmatpush1.msra.mxu0 0.0
      %1257 = vmatprep.subr.mxu0 0.0
      %1258 = vmatpush1.msra.mxu0 0.0
      %1259 = vmatprep.subr.mxu0 0.0
      %1260 = vmatpush1.msra.mxu0 0.0
      %1261 = vmatprep.subr.mxu0 0.0
      %1262 = vmatpush1.msra.mxu0 0.0
      %1263 = vmatprep.subr.mxu0 0.0
      %1264 = vmatpush1.msra.mxu0 0.0
      %1265 = vmatprep.subr.mxu0 0.0
      %1266 = vmatpush1.msra.mxu0 0.0
      %1267 = vmatprep.subr.mxu0 0.0
      %1268 = vmatpush1.msra.mxu0 0.0
      %1269 = vmatprep.subr.mxu0 0.0
      %1270 = vmatpush1.msra.mxu0 0.0
      %1271 = vmatprep.subr.mxu0 0.0
      %1272 = vmatpush1.msra.mxu0 0.0
      %1273 = vmatprep.subr.mxu0 0.0
      %1274 = vmatpush1.msra.mxu0 0.0
      %1275 = vmatprep.subr.mxu0 0.0
      %1276 = vmatpush1.msra.mxu0 0.0
      %1277 = vmatprep.subr.mxu0 0.0
      %1278 = vmatpush1.msra.mxu0 0.0
      %1279 = vmatprep.subr.mxu0 0.0
      %1280 = vmatpush1.msra.mxu0 0.0
      %1281 = vmatprep.subr.mxu0 0.0
      %1282 = vmatpush1.msra.mxu0 0.0
      %1283 = vmatprep.subr.mxu0 0.0
      %1284 = vmatpush1.msra.mxu0 0.0
      %1285 = vmatprep.subr.mxu0 0.0
      %1286 = vmatpush1.msra.mxu0 0.0
      %1287 = vmatprep.subr.mxu0 0.0
      %1288 = vmatpush1.msra.mxu0 0.0
      %1289 = vmatprep.subr.mxu0 0.0
      %1290 = vmatpush1.msra.mxu0 0.0
      %1291 = vmatprep.subr.mxu0 0.0
      %1292 = vmatpush1.msra.mxu0 0.0
      %1293 = vmatprep.subr.mxu0 0.0
      %1294 = vmatpush1.msra.mxu0 0.0
      %1295 = vmatprep.subr.mxu0 0.0
      %1296 = vmatpush1.msra.mxu0 0.0
      %1297 = vmatprep.subr.mxu0 0.0
      %1298 = vmatpush1.msra.mxu0 0.0
      %1299 = vmatprep.subr.mxu0 0.0
      %1300 = vmatpush1.msra.mxu0 0.0
      %1301 = vmatprep.subr.mxu0 0.0
      %1302 = vmatpush1.msra.mxu0 0.0
      %1303 = vmatprep.subr.mxu0 0.0
      %1304 = vmatpush1.msra.mxu0 0.0
      %1305 = vmatprep.subr.mxu0 0.0
      %1306 = vmatpush1.msra.mxu0 0.0
      %1307 = vmatprep.mubr.f32.mxu0 0.0
      %1308 = vmatmul.mubr.f32.gmra.mrb[0].mxu0 %v554
      %v1309 = vpop.f32.mrb[0].mxu0
      %v1310 = vadd.f32 0.0, %v1309
      %v1311 = vpop.f32.mrb[0].mxu0
      %1312 = vdwg.mxu0
      %v1313 = vadd.f32 %v1242, %v1310
      %v1314 = vld [vmem:[%s231 + $0x38] sm:$0xff]
      %1315 = vmatprep.subr.mxu0 0.0
      %1316 = vmatpush1.msra.mxu0 %v1314
      %1317 = vmatprep.subr.mxu0 0.0
      %1318 = vmatpush1.msra.mxu0 0.0
      %1319 = vmatprep.subr.mxu0 0.0
      %1320 = vmatpush1.msra.mxu0 0.0
      %1321 = vmatprep.subr.mxu0 0.0
      %1322 = vmatpush1.msra.mxu0 0.0
      %1323 = vmatprep.subr.mxu0 0.0
      %1324 = vmatpush1.msra.mxu0 0.0
      %1325 = vmatprep.subr.mxu0 0.0
      %1326 = vmatpush1.msra.mxu0 0.0
      %1327 = vmatprep.subr.mxu0 0.0
      %1328 = vmatpush1.msra.mxu0 0.0
      %1329 = vmatprep.subr.mxu0 0.0
      %1330 = vmatpush1.msra.mxu0 0.0
      %1331 = vmatprep.subr.mxu0 0.0
      %1332 = vmatpush1.msra.mxu0 0.0
      %1333 = vmatprep.subr.mxu0 0.0
      %1334 = vmatpush1.msra.mxu0 0.0
      %1335 = vmatprep.subr.mxu0 0.0
      %1336 = vmatpush1.msra.mxu0 0.0
      %1337 = vmatprep.subr.mxu0 0.0
      %1338 = vmatpush1.msra.mxu0 0.0
      %1339 = vmatprep.subr.mxu0 0.0
      %1340 = vmatpush1.msra.mxu0 0.0
      %1341 = vmatprep.subr.mxu0 0.0
      %1342 = vmatpush1.msra.mxu0 0.0
      %1343 = vmatprep.subr.mxu0 0.0
      %1344 = vmatpush1.msra.mxu0 0.0
      %1345 = vmatprep.subr.mxu0 0.0
      %1346 = vmatpush1.msra.mxu0 0.0
      %1347 = vmatprep.subr.mxu0 0.0
      %1348 = vmatpush1.msra.mxu0 0.0
      %1349 = vmatprep.subr.mxu0 0.0
      %1350 = vmatpush1.msra.mxu0 0.0
      %1351 = vmatprep.subr.mxu0 0.0
      %1352 = vmatpush1.msra.mxu0 0.0
      %1353 = vmatprep.subr.mxu0 0.0
      %1354 = vmatpush1.msra.mxu0 0.0
      %1355 = vmatprep.subr.mxu0 0.0
      %1356 = vmatpush1.msra.mxu0 0.0
      %1357 = vmatprep.subr.mxu0 0.0
      %1358 = vmatpush1.msra.mxu0 0.0
      %1359 = vmatprep.subr.mxu0 0.0
      %1360 = vmatpush1.msra.mxu0 0.0
      %1361 = vmatprep.subr.mxu0 0.0
      %1362 = vmatpush1.msra.mxu0 0.0
      %1363 = vmatprep.subr.mxu0 0.0
      %1364 = vmatpush1.msra.mxu0 0.0
      %1365 = vmatprep.subr.mxu0 0.0
      %1366 = vmatpush1.msra.mxu0 0.0
      %1367 = vmatprep.subr.mxu0 0.0
      %1368 = vmatpush1.msra.mxu0 0.0
      %1369 = vmatprep.subr.mxu0 0.0
      %1370 = vmatpush1.msra.mxu0 0.0
      %1371 = vmatprep.subr.mxu0 0.0
      %1372 = vmatpush1.msra.mxu0 0.0
      %1373 = vmatprep.subr.mxu0 0.0
      %1374 = vmatpush1.msra.mxu0 0.0
      %1375 = vmatprep.subr.mxu0 0.0
      %1376 = vmatpush1.msra.mxu0 0.0
      %1377 = vmatprep.subr.mxu0 0.0
      %1378 = vmatpush1.msra.mxu0 0.0
      %1379 = vmatprep.mubr.f32.mxu0 0.0
      %1380 = vmatmul.mubr.f32.gmra.mrb[0].mxu0 %v631
      %v1381 = vpop.f32.mrb[0].mxu0
      %v1382 = vadd.f32 0.0, %v1381
      %v1383 = vpop.f32.mrb[0].mxu0
      %1384 = vdwg.mxu0
      %v1385 = vadd.f32 %v1313, %v1382
      %1386 = vmatprep.subr.mxu0 0.0
      %1387 = vmatpush1.msra.mxu0 %v788
      %1388 = vmatprep.subr.mxu0 0.0
      %1389 = vmatpush1.msra.mxu0 0.0
      %1390 = vmatprep.subr.mxu0 0.0
      %1391 = vmatpush1.msra.mxu0 0.0
      %1392 = vmatprep.subr.mxu0 0.0
      %1393 = vmatpush1.msra.mxu0 0.0
      %1394 = vmatprep.subr.mxu0 0.0
      %1395 = vmatpush1.msra.mxu0 0.0
      %1396 = vmatprep.subr.mxu0 0.0
      %1397 = vmatpush1.msra.mxu0 0.0
      %1398 = vmatprep.subr.mxu0 0.0
      %1399 = vmatpush1.msra.mxu0 0.0
      %1400 = vmatprep.subr.mxu0 0.0
      %1401 = vmatpush1.msra.mxu0 0.0
      %1402 = vmatprep.subr.mxu0 0.0
      %1403 = vmatpush1.msra.mxu0 0.0
      %1404 = vmatprep.subr.mxu0 0.0
      %1405 = vmatpush1.msra.mxu0 0.0
      %1406 = vmatprep.subr.mxu0 0.0
      %1407 = vmatpush1.msra.mxu0 0.0
      %1408 = vmatprep.subr.mxu0 0.0
      %1409 = vmatpush1.msra.mxu0 0.0
      %1410 = vmatprep.subr.mxu0 0.0
      %1411 = vmatpush1.msra.mxu0 0.0
      %1412 = vmatprep.subr.mxu0 0.0
      %1413 = vmatpush1.msra.mxu0 0.0
      %1414 = vmatprep.subr.mxu0 0.0
      %1415 = vmatpush1.msra.mxu0 0.0
      %1416 = vmatprep.subr.mxu0 0.0
      %1417 = vmatpush1.msra.mxu0 0.0
      %1418 = vmatprep.subr.mxu0 0.0
      %1419 = vmatpush1.msra.mxu0 0.0
      %1420 = vmatprep.subr.mxu0 0.0
      %1421 = vmatpush1.msra.mxu0 0.0
      %1422 = vmatprep.subr.mxu0 0.0
      %1423 = vmatpush1.msra.mxu0 0.0
      %1424 = vmatprep.subr.mxu0 0.0
      %1425 = vmatpush1.msra.mxu0 0.0
      %1426 = vmatprep.subr.mxu0 0.0
      %1427 = vmatpush1.msra.mxu0 0.0
      %1428 = vmatprep.subr.mxu0 0.0
      %1429 = vmatpush1.msra.mxu0 0.0
      %1430 = vmatprep.subr.mxu0 0.0
      %1431 = vmatpush1.msra.mxu0 0.0
      %1432 = vmatprep.subr.mxu0 0.0
      %1433 = vmatpush1.msra.mxu0 0.0
      %1434 = vmatprep.subr.mxu0 0.0
      %1435 = vmatpush1.msra.mxu0 0.0
      %1436 = vmatprep.subr.mxu0 0.0
      %1437 = vmatpush1.msra.mxu0 0.0
      %1438 = vmatprep.subr.mxu0 0.0
      %1439 = vmatpush1.msra.mxu0 0.0
      %1440 = vmatprep.subr.mxu0 0.0
      %1441 = vmatpush1.msra.mxu0 0.0
      %1442 = vmatprep.subr.mxu0 0.0
      %1443 = vmatpush1.msra.mxu0 0.0
      %1444 = vmatprep.subr.mxu0 0.0
      %1445 = vmatpush1.msra.mxu0 0.0
      %1446 = vmatprep.subr.mxu0 0.0
      %1447 = vmatpush1.msra.mxu0 0.0
      %1448 = vmatprep.subr.mxu0 0.0
      %1449 = vmatpush1.msra.mxu0 0.0
      %1450 = vmatprep.mubr.f32.mxu0 0.0
      %1451 = vmatmul.mubr.f32.gmra.mrb[0].mxu0 %v711
      %v1452 = vpop.f32.mrb[0].mxu0
      %v1453 = vadd.f32 0.0, %v1452
      %v1454 = vpop.f32.mrb[0].mxu0
      %1455 = vdwg.mxu0
      %v1456 = vadd.f32 %v1385, %v1453
      %1457 = vmatprep.subr.mxu0 0.0
      %1458 = vmatpush1.msra.mxu0 %v868
      %1459 = vmatprep.subr.mxu0 0.0
      %1460 = vmatpush1.msra.mxu0 0.0
      %1461 = vmatprep.subr.mxu0 0.0
      %1462 = vmatpush1.msra.mxu0 0.0
      %1463 = vmatprep.subr.mxu0 0.0
      %1464 = vmatpush1.msra.mxu0 0.0
      %1465 = vmatprep.subr.mxu0 0.0
      %1466 = vmatpush1.msra.mxu0 0.0
      %1467 = vmatprep.subr.mxu0 0.0
      %1468 = vmatpush1.msra.mxu0 0.0
      %1469 = vmatprep.subr.mxu0 0.0
      %1470 = vmatpush1.msra.mxu0 0.0
      %1471 = vmatprep.subr.mxu0 0.0
      %1472 = vmatpush1.msra.mxu0 0.0
      %1473 = vmatprep.subr.mxu0 0.0
      %1474 = vmatpush1.msra.mxu0 0.0
      %1475 = vmatprep.subr.mxu0 0.0
      %1476 = vmatpush1.msra.mxu0 0.0
      %1477 = vmatprep.subr.mxu0 0.0
      %1478 = vmatpush1.msra.mxu0 0.0
      %1479 = vmatprep.subr.mxu0 0.0
      %1480 = vmatpush1.msra.mxu0 0.0
      %1481 = vmatprep.subr.mxu0 0.0
      %1482 = vmatpush1.msra.mxu0 0.0
      %1483 = vmatprep.subr.mxu0 0.0
      %1484 = vmatpush1.msra.mxu0 0.0
      %1485 = vmatprep.subr.mxu0 0.0
      %1486 = vmatpush1.msra.mxu0 0.0
      %1487 = vmatprep.subr.mxu0 0.0
      %1488 = vmatpush1.msra.mxu0 0.0
      %1489 = vmatprep.subr.mxu0 0.0
      %1490 = vmatpush1.msra.mxu0 0.0
      %1491 = vmatprep.subr.mxu0 0.0
      %1492 = vmatpush1.msra.mxu0 0.0
      %1493 = vmatprep.subr.mxu0 0.0
      %1494 = vmatpush1.msra.mxu0 0.0
      %1495 = vmatprep.subr.mxu0 0.0
      %1496 = vmatpush1.msra.mxu0 0.0
      %1497 = vmatprep.subr.mxu0 0.0
      %1498 = vmatpush1.msra.mxu0 0.0
      %1499 = vmatprep.subr.mxu0 0.0
      %1500 = vmatpush1.msra.mxu0 0.0
      %1501 = vmatprep.subr.mxu0 0.0
      %1502 = vmatpush1.msra.mxu0 0.0
      %1503 = vmatprep.subr.mxu0 0.0
      %1504 = vmatpush1.msra.mxu0 0.0
      %1505 = vmatprep.subr.mxu0 0.0
      %1506 = vmatpush1.msra.mxu0 0.0
      %1507 = vmatprep.subr.mxu0 0.0
      %1508 = vmatpush1.msra.mxu0 0.0
      %1509 = vmatprep.subr.mxu0 0.0
      %1510 = vmatpush1.msra.mxu0 0.0
      %1511 = vmatprep.subr.mxu0 0.0
      %1512 = vmatpush1.msra.mxu0 0.0
      %1513 = vmatprep.subr.mxu0 0.0
      %1514 = vmatpush1.msra.mxu0 0.0
      %1515 = vmatprep.subr.mxu0 0.0
      %1516 = vmatpush1.msra.mxu0 0.0
      %1517 = vmatprep.subr.mxu0 0.0
      %1518 = vmatpush1.msra.mxu0 0.0
      %1519 = vmatprep.subr.mxu0 0.0
      %1520 = vmatpush1.msra.mxu0 0.0
      %1521 = vmatprep.mubr.f32.mxu0 0.0
      %1522 = vmatmul.mubr.f32.gmra.mrb[0].mxu0 %v791
      %v1523 = vpop.f32.mrb[0].mxu0
      %v1524 = vadd.f32 0.0, %v1523
      %v1525 = vpop.f32.mrb[0].mxu0
      %1526 = vdwg.mxu0
      %v1527 = vadd.f32 %v1456, %v1524
      %1529 = vrot.lane.b32.xlu0 %v1100, 120
      %v1530 = vpop.permute.xlu0 %1529
      %1532 = vmatprep.subr.mxu0 0.0
      %1533 = vmatpush1.msra.mxu0 %v1530
      %1534 = vmatprep.subr.mxu0 0.0
      %1535 = vmatpush1.msra.mxu0 0.0
      %1536 = vmatprep.subr.mxu0 0.0
      %1537 = vmatpush1.msra.mxu0 0.0
      %1538 = vmatprep.subr.mxu0 0.0
      %1539 = vmatpush1.msra.mxu0 0.0
      %1540 = vmatprep.subr.mxu0 0.0
      %1541 = vmatpush1.msra.mxu0 0.0
      %1542 = vmatprep.subr.mxu0 0.0
      %1543 = vmatpush1.msra.mxu0 0.0
      %1544 = vmatprep.subr.mxu0 0.0
      %1545 = vmatpush1.msra.mxu0 0.0
      %1546 = vmatprep.subr.mxu0 0.0
      %1547 = vmatpush1.msra.mxu0 0.0
      %1548 = vmatprep.subr.mxu0 0.0
      %1549 = vmatpush1.msra.mxu0 0.0
      %1550 = vmatprep.subr.mxu0 0.0
      %1551 = vmatpush1.msra.mxu0 0.0
      %1552 = vmatprep.subr.mxu0 0.0
      %1553 = vmatpush1.msra.mxu0 0.0
      %1554 = vmatprep.subr.mxu0 0.0
      %1555 = vmatpush1.msra.mxu0 0.0
      %1556 = vmatprep.subr.mxu0 0.0
      %1557 = vmatpush1.msra.mxu0 0.0
      %1558 = vmatprep.subr.mxu0 0.0
      %1559 = vmatpush1.msra.mxu0 0.0
      %1560 = vmatprep.subr.mxu0 0.0
      %1561 = vmatpush1.msra.mxu0 0.0
      %1562 = vmatprep.subr.mxu0 0.0
      %1563 = vmatpush1.msra.mxu0 0.0
      %1564 = vmatprep.subr.mxu0 0.0
      %1565 = vmatpush1.msra.mxu0 0.0
      %1566 = vmatprep.subr.mxu0 0.0
      %1567 = vmatpush1.msra.mxu0 0.0
      %1568 = vmatprep.subr.mxu0 0.0
      %1569 = vmatpush1.msra.mxu0 0.0
      %1570 = vmatprep.subr.mxu0 0.0
      %1571 = vmatpush1.msra.mxu0 0.0
      %1572 = vmatprep.subr.mxu0 0.0
      %1573 = vmatpush1.msra.mxu0 0.0
      %1574 = vmatprep.subr.mxu0 0.0
      %1575 = vmatpush1.msra.mxu0 0.0
      %1576 = vmatprep.subr.mxu0 0.0
      %1577 = vmatpush1.msra.mxu0 0.0
      %1578 = vmatprep.subr.mxu0 0.0
      %1579 = vmatpush1.msra.mxu0 0.0
      %1580 = vmatprep.subr.mxu0 0.0
      %1581 = vmatpush1.msra.mxu0 0.0
      %1582 = vmatprep.subr.mxu0 0.0
      %1583 = vmatpush1.msra.mxu0 0.0
      %1584 = vmatprep.subr.mxu0 0.0
      %1585 = vmatpush1.msra.mxu0 0.0
      %1586 = vmatprep.subr.mxu0 0.0
      %1587 = vmatpush1.msra.mxu0 0.0
      %1588 = vmatprep.subr.mxu0 0.0
      %1589 = vmatpush1.msra.mxu0 0.0
      %1590 = vmatprep.subr.mxu0 0.0
      %1591 = vmatpush1.msra.mxu0 0.0
      %1592 = vmatprep.subr.mxu0 0.0
      %1593 = vmatpush1.msra.mxu0 0.0
      %1594 = vmatprep.subr.mxu0 0.0
      %1595 = vmatpush1.msra.mxu0 0.0
      %1596 = vmatprep.mubr.f32.mxu0 0.0
      %1597 = vmatmul.mubr.f32.gmra.mrb[0].mxu0 %v871
      %v1598 = vpop.f32.mrb[0].mxu0
      %v1599 = vadd.f32 0.0, %v1598
      %v1600 = vpop.f32.mrb[0].mxu0
      %1601 = vdwg.mxu0
      %v1602 = vadd.f32 %v1527, %v1599
      %v1603 = vadd.f32 %v1602, %v948
      %v1604 = vmax.f32 %v1603, 0.0
      %v1605 = vsel %vm952, %v1604, 0.0
      %1606 = vadd.xlane.f32.xlu0 %v1605
      %v1607 = vpop.xlane.xlu0 %1606
      %v1608 = vmul.f32 %v1604, %v1604
      %v1609 = vsel %vm952, %v1608, 0.0
      %1610 = vadd.xlane.f32.xlu0 %v1609
      %v1611 = vpop.xlane.xlu0 %1610
      %v1612 = vmax.f32 %v951, %v1604
      %v1613 = vmin.f32 %v951, %v1604
      %v1614 = vadd.f32 %v955, %v1607
      %v1615 = vadd.f32 %v959, %v1611
      %1616 = vmatprep.subr.mxu0 0.0
      %1617 = vmatpush1.msra.mxu0 %v550
      %1618 = vmatprep.subr.mxu0 0.0
      %1619 = vmatpush1.msra.mxu0 0.0
      %1620 = vmatprep.subr.mxu0 0.0
      %1621 = vmatpush1.msra.mxu0 0.0
      %1622 = vmatprep.subr.mxu0 0.0
      %1623 = vmatpush1.msra.mxu0 0.0
      %1624 = vmatprep.subr.mxu0 0.0
      %1625 = vmatpush1.msra.mxu0 0.0
      %1626 = vmatprep.subr.mxu0 0.0
      %1627 = vmatpush1.msra.mxu0 0.0
      %1628 = vmatprep.subr.mxu0 0.0
      %1629 = vmatpush1.msra.mxu0 0.0
      %1630 = vmatprep.subr.mxu0 0.0
      %1631 = vmatpush1.msra.mxu0 0.0
      %1632 = vmatprep.subr.mxu0 0.0
      %1633 = vmatpush1.msra.mxu0 0.0
      %1634 = vmatprep.subr.mxu0 0.0
      %1635 = vmatpush1.msra.mxu0 0.0
      %1636 = vmatprep.subr.mxu0 0.0
      %1637 = vmatpush1.msra.mxu0 0.0
      %1638 = vmatprep.subr.mxu0 0.0
      %1639 = vmatpush1.msra.mxu0 0.0
      %1640 = vmatprep.subr.mxu0 0.0
      %1641 = vmatpush1.msra.mxu0 0.0
      %1642 = vmatprep.subr.mxu0 0.0
      %1643 = vmatpush1.msra.mxu0 0.0
      %1644 = vmatprep.subr.mxu0 0.0
      %1645 = vmatpush1.msra.mxu0 0.0
      %1646 = vmatprep.subr.mxu0 0.0
      %1647 = vmatpush1.msra.mxu0 0.0
      %1648 = vmatprep.subr.mxu0 0.0
      %1649 = vmatpush1.msra.mxu0 0.0
      %1650 = vmatprep.subr.mxu0 0.0
      %1651 = vmatpush1.msra.mxu0 0.0
      %1652 = vmatprep.subr.mxu0 0.0
      %1653 = vmatpush1.msra.mxu0 0.0
      %1654 = vmatprep.subr.mxu0 0.0
      %1655 = vmatpush1.msra.mxu0 0.0
      %1656 = vmatprep.subr.mxu0 0.0
      %1657 = vmatpush1.msra.mxu0 0.0
      %1658 = vmatprep.subr.mxu0 0.0
      %1659 = vmatpush1.msra.mxu0 0.0
      %1660 = vmatprep.subr.mxu0 0.0
      %1661 = vmatpush1.msra.mxu0 0.0
      %1662 = vmatprep.subr.mxu0 0.0
      %1663 = vmatpush1.msra.mxu0 0.0
      %1664 = vmatprep.subr.mxu0 0.0
      %1665 = vmatpush1.msra.mxu0 0.0
      %1666 = vmatprep.subr.mxu0 0.0
      %1667 = vmatpush1.msra.mxu0 0.0
      %1668 = vmatprep.subr.mxu0 0.0
      %1669 = vmatpush1.msra.mxu0 0.0
      %1670 = vmatprep.subr.mxu0 0.0
      %1671 = vmatpush1.msra.mxu0 0.0
      %1672 = vmatprep.subr.mxu0 0.0
      %1673 = vmatpush1.msra.mxu0 0.0
      %1674 = vmatprep.subr.mxu0 0.0
      %1675 = vmatpush1.msra.mxu0 0.0
      %1676 = vmatprep.subr.mxu0 0.0
      %1677 = vmatpush1.msra.mxu0 0.0
      %1678 = vmatprep.subr.mxu0 0.0
      %1679 = vmatpush1.msra.mxu0 0.0
      %1680 = vmatprep.mubr.f32.mxu0 0.0
      %1681 = vmatmul.mubr.f32.gmra.mrb[0].mxu0 %v251
      %v1682 = vpop.f32.mrb[0].mxu0
      %v1683 = vadd.f32 0.0, %v1682
      %v1684 = vpop.f32.mrb[0].mxu0
      %1685 = vdwg.mxu0
      %1686 = vmatprep.subr.mxu0 0.0
      %1687 = vmatpush1.msra.mxu0 %v473
      %1688 = vmatprep.subr.mxu0 0.0
      %1689 = vmatpush1.msra.mxu0 0.0
      %1690 = vmatprep.subr.mxu0 0.0
      %1691 = vmatpush1.msra.mxu0 0.0
      %1692 = vmatprep.subr.mxu0 0.0
      %1693 = vmatpush1.msra.mxu0 0.0
      %1694 = vmatprep.subr.mxu0 0.0
      %1695 = vmatpush1.msra.mxu0 0.0
      %1696 = vmatprep.subr.mxu0 0.0
      %1697 = vmatpush1.msra.mxu0 0.0
      %1698 = vmatprep.subr.mxu0 0.0
      %1699 = vmatpush1.msra.mxu0 0.0
      %1700 = vmatprep.subr.mxu0 0.0
      %1701 = vmatpush1.msra.mxu0 0.0
      %1702 = vmatprep.subr.mxu0 0.0
      %1703 = vmatpush1.msra.mxu0 0.0
      %1704 = vmatprep.subr.mxu0 0.0
      %1705 = vmatpush1.msra.mxu0 0.0
      %1706 = vmatprep.subr.mxu0 0.0
      %1707 = vmatpush1.msra.mxu0 0.0
      %1708 = vmatprep.subr.mxu0 0.0
      %1709 = vmatpush1.msra.mxu0 0.0
      %1710 = vmatprep.subr.mxu0 0.0
      %1711 = vmatpush1.msra.mxu0 0.0
      %1712 = vmatprep.subr.mxu0 0.0
      %1713 = vmatpush1.msra.mxu0 0.0
      %1714 = vmatprep.subr.mxu0 0.0
      %1715 = vmatpush1.msra.mxu0 0.0
      %1716 = vmatprep.subr.mxu0 0.0
      %1717 = vmatpush1.msra.mxu0 0.0
      %1718 = vmatprep.subr.mxu0 0.0
      %1719 = vmatpush1.msra.mxu0 0.0
      %1720 = vmatprep.subr.mxu0 0.0
      %1721 = vmatpush1.msra.mxu0 0.0
      %1722 = vmatprep.subr.mxu0 0.0
      %1723 = vmatpush1.msra.mxu0 0.0
      %1724 = vmatprep.subr.mxu0 0.0
      %1725 = vmatpush1.msra.mxu0 0.0
      %1726 = vmatprep.subr.mxu0 0.0
      %1727 = vmatpush1.msra.mxu0 0.0
      %1728 = vmatprep.subr.mxu0 0.0
      %1729 = vmatpush1.msra.mxu0 0.0
      %1730 = vmatprep.subr.mxu0 0.0
      %1731 = vmatpush1.msra.mxu0 0.0
      %1732 = vmatprep.subr.mxu0 0.0
      %1733 = vmatpush1.msra.mxu0 0.0
      %1734 = vmatprep.subr.mxu0 0.0
      %1735 = vmatpush1.msra.mxu0 0.0
      %1736 = vmatprep.subr.mxu0 0.0
      %1737 = vmatpush1.msra.mxu0 0.0
      %1738 = vmatprep.subr.mxu0 0.0
      %1739 = vmatpush1.msra.mxu0 0.0
      %1740 = vmatprep.subr.mxu0 0.0
      %1741 = vmatpush1.msra.mxu0 0.0
      %1742 = vmatprep.subr.mxu0 0.0
      %1743 = vmatpush1.msra.mxu0 0.0
      %1744 = vmatprep.subr.mxu0 0.0
      %1745 = vmatpush1.msra.mxu0 0.0
      %1746 = vmatprep.subr.mxu0 0.0
      %1747 = vmatpush1.msra.mxu0 0.0
      %1748 = vmatprep.subr.mxu0 0.0
      %1749 = vmatpush1.msra.mxu0 0.0
      %1750 = vmatprep.mubr.f32.mxu0 0.0
      %1751 = vmatmul.mubr.f32.gmra.mrb[0].mxu0 %v324
      %v1752 = vpop.f32.mrb[0].mxu0
      %v1753 = vadd.f32 %v1683, %v1752
      %v1754 = vpop.f32.mrb[0].mxu0
      %1755 = vdwg.mxu0
      %1756 = vmatprep.subr.mxu0 0.0
      %1757 = vmatpush1.msra.mxu0 %v627
      %1758 = vmatprep.subr.mxu0 0.0
      %1759 = vmatpush1.msra.mxu0 0.0
      %1760 = vmatprep.subr.mxu0 0.0
      %1761 = vmatpush1.msra.mxu0 0.0
      %1762 = vmatprep.subr.mxu0 0.0
      %1763 = vmatpush1.msra.mxu0 0.0
      %1764 = vmatprep.subr.mxu0 0.0
      %1765 = vmatpush1.msra.mxu0 0.0
      %1766 = vmatprep.subr.mxu0 0.0
      %1767 = vmatpush1.msra.mxu0 0.0
      %1768 = vmatprep.subr.mxu0 0.0
      %1769 = vmatpush1.msra.mxu0 0.0
      %1770 = vmatprep.subr.mxu0 0.0
      %1771 = vmatpush1.msra.mxu0 0.0
      %1772 = vmatprep.subr.mxu0 0.0
      %1773 = vmatpush1.msra.mxu0 0.0
      %1774 = vmatprep.subr.mxu0 0.0
      %1775 = vmatpush1.msra.mxu0 0.0
      %1776 = vmatprep.subr.mxu0 0.0
      %1777 = vmatpush1.msra.mxu0 0.0
      %1778 = vmatprep.subr.mxu0 0.0
      %1779 = vmatpush1.msra.mxu0 0.0
      %1780 = vmatprep.subr.mxu0 0.0
      %1781 = vmatpush1.msra.mxu0 0.0
      %1782 = vmatprep.subr.mxu0 0.0
      %1783 = vmatpush1.msra.mxu0 0.0
      %1784 = vmatprep.subr.mxu0 0.0
      %1785 = vmatpush1.msra.mxu0 0.0
      %1786 = vmatprep.subr.mxu0 0.0
      %1787 = vmatpush1.msra.mxu0 0.0
      %1788 = vmatprep.subr.mxu0 0.0
      %1789 = vmatpush1.msra.mxu0 0.0
      %1790 = vmatprep.subr.mxu0 0.0
      %1791 = vmatpush1.msra.mxu0 0.0
      %1792 = vmatprep.subr.mxu0 0.0
      %1793 = vmatpush1.msra.mxu0 0.0
      %1794 = vmatprep.subr.mxu0 0.0
      %1795 = vmatpush1.msra.mxu0 0.0
      %1796 = vmatprep.subr.mxu0 0.0
      %1797 = vmatpush1.msra.mxu0 0.0
      %1798 = vmatprep.subr.mxu0 0.0
      %1799 = vmatpush1.msra.mxu0 0.0
      %1800 = vmatprep.subr.mxu0 0.0
      %1801 = vmatpush1.msra.mxu0 0.0
      %1802 = vmatprep.subr.mxu0 0.0
      %1803 = vmatpush1.msra.mxu0 0.0
      %1804 = vmatprep.subr.mxu0 0.0
      %1805 = vmatpush1.msra.mxu0 0.0
      %1806 = vmatprep.subr.mxu0 0.0
      %1807 = vmatpush1.msra.mxu0 0.0
      %1808 = vmatprep.subr.mxu0 0.0
      %1809 = vmatpush1.msra.mxu0 0.0
      %1810 = vmatprep.subr.mxu0 0.0
      %1811 = vmatpush1.msra.mxu0 0.0
      %1812 = vmatprep.subr.mxu0 0.0
      %1813 = vmatpush1.msra.mxu0 0.0
      %1814 = vmatprep.subr.mxu0 0.0
      %1815 = vmatpush1.msra.mxu0 0.0
      %1816 = vmatprep.subr.mxu0 0.0
      %1817 = vmatpush1.msra.mxu0 0.0
      %1818 = vmatprep.subr.mxu0 0.0
      %1819 = vmatpush1.msra.mxu0 0.0
      %1820 = vmatprep.mubr.f32.mxu0 0.0
      %1821 = vmatmul.mubr.f32.gmra.mrb[0].mxu0 %v400
      %v1822 = vpop.f32.mrb[0].mxu0
      %v1823 = vadd.f32 0.0, %v1822
      %v1824 = vpop.f32.mrb[0].mxu0
      %1825 = vdwg.mxu0
      %v1826 = vadd.f32 %v1753, %v1823
      %1827 = vmatprep.subr.mxu0 0.0
      %1828 = vmatpush1.msra.mxu0 %v708
      %1829 = vmatprep.subr.mxu0 0.0
      %1830 = vmatpush1.msra.mxu0 0.0
      %1831 = vmatprep.subr.mxu0 0.0
      %1832 = vmatpush1.msra.mxu0 0.0
      %1833 = vmatprep.subr.mxu0 0.0
      %1834 = vmatpush1.msra.mxu0 0.0
      %1835 = vmatprep.subr.mxu0 0.0
      %1836 = vmatpush1.msra.mxu0 0.0
      %1837 = vmatprep.subr.mxu0 0.0
      %1838 = vmatpush1.msra.mxu0 0.0
      %1839 = vmatprep.subr.mxu0 0.0
      %1840 = vmatpush1.msra.mxu0 0.0
      %1841 = vmatprep.subr.mxu0 0.0
      %1842 = vmatpush1.msra.mxu0 0.0
      %1843 = vmatprep.subr.mxu0 0.0
      %1844 = vmatpush1.msra.mxu0 0.0
      %1845 = vmatprep.subr.mxu0 0.0
      %1846 = vmatpush1.msra.mxu0 0.0
      %1847 = vmatprep.subr.mxu0 0.0
      %1848 = vmatpush1.msra.mxu0 0.0
      %1849 = vmatprep.subr.mxu0 0.0
      %1850 = vmatpush1.msra.mxu0 0.0
      %1851 = vmatprep.subr.mxu0 0.0
      %1852 = vmatpush1.msra.mxu0 0.0
      %1853 = vmatprep.subr.mxu0 0.0
      %1854 = vmatpush1.msra.mxu0 0.0
      %1855 = vmatprep.subr.mxu0 0.0
      %1856 = vmatpush1.msra.mxu0 0.0
      %1857 = vmatprep.subr.mxu0 0.0
      %1858 = vmatpush1.msra.mxu0 0.0
      %1859 = vmatprep.subr.mxu0 0.0
      %1860 = vmatpush1.msra.mxu0 0.0
      %1861 = vmatprep.subr.mxu0 0.0
      %1862 = vmatpush1.msra.mxu0 0.0
      %1863 = vmatprep.subr.mxu0 0.0
      %1864 = vmatpush1.msra.mxu0 0.0
      %1865 = vmatprep.subr.mxu0 0.0
      %1866 = vmatpush1.msra.mxu0 0.0
      %1867 = vmatprep.subr.mxu0 0.0
      %1868 = vmatpush1.msra.mxu0 0.0
      %1869 = vmatprep.subr.mxu0 0.0
      %1870 = vmatpush1.msra.mxu0 0.0
      %1871 = vmatprep.subr.mxu0 0.0
      %1872 = vmatpush1.msra.mxu0 0.0
      %1873 = vmatprep.subr.mxu0 0.0
      %1874 = vmatpush1.msra.mxu0 0.0
      %1875 = vmatprep.subr.mxu0 0.0
      %1876 = vmatpush1.msra.mxu0 0.0
      %1877 = vmatprep.subr.mxu0 0.0
      %1878 = vmatpush1.msra.mxu0 0.0
      %1879 = vmatprep.subr.mxu0 0.0
      %1880 = vmatpush1.msra.mxu0 0.0
      %1881 = vmatprep.subr.mxu0 0.0
      %1882 = vmatpush1.msra.mxu0 0.0
      %1883 = vmatprep.subr.mxu0 0.0
      %1884 = vmatpush1.msra.mxu0 0.0
      %1885 = vmatprep.subr.mxu0 0.0
      %1886 = vmatpush1.msra.mxu0 0.0
      %1887 = vmatprep.subr.mxu0 0.0
      %1888 = vmatpush1.msra.mxu0 0.0
      %1889 = vmatprep.subr.mxu0 0.0
      %1890 = vmatpush1.msra.mxu0 0.0
      %1891 = vmatprep.mubr.f32.mxu0 0.0
      %1892 = vmatmul.mubr.f32.gmra.mrb[0].mxu0 %v477
      %v1893 = vpop.f32.mrb[0].mxu0
      %v1894 = vadd.f32 0.0, %v1893
      %v1895 = vpop.f32.mrb[0].mxu0
      %1896 = vdwg.mxu0
      %v1897 = vadd.f32 %v1826, %v1894
      %1898 = vmatprep.subr.mxu0 0.0
      %1899 = vmatpush1.msra.mxu0 %v788
      %1900 = vmatprep.subr.mxu0 0.0
      %1901 = vmatpush1.msra.mxu0 0.0
      %1902 = vmatprep.subr.mxu0 0.0
      %1903 = vmatpush1.msra.mxu0 0.0
      %1904 = vmatprep.subr.mxu0 0.0
      %1905 = vmatpush1.msra.mxu0 0.0
      %1906 = vmatprep.subr.mxu0 0.0
      %1907 = vmatpush1.msra.mxu0 0.0
      %1908 = vmatprep.subr.mxu0 0.0
      %1909 = vmatpush1.msra.mxu0 0.0
      %1910 = vmatprep.subr.mxu0 0.0
      %1911 = vmatpush1.msra.mxu0 0.0
      %1912 = vmatprep.subr.mxu0 0.0
      %1913 = vmatpush1.msra.mxu0 0.0
      %1914 = vmatprep.subr.mxu0 0.0
      %1915 = vmatpush1.msra.mxu0 0.0
      %1916 = vmatprep.subr.mxu0 0.0
      %1917 = vmatpush1.msra.mxu0 0.0
      %1918 = vmatprep.subr.mxu0 0.0
      %1919 = vmatpush1.msra.mxu0 0.0
      %1920 = vmatprep.subr.mxu0 0.0
      %1921 = vmatpush1.msra.mxu0 0.0
      %1922 = vmatprep.subr.mxu0 0.0
      %1923 = vmatpush1.msra.mxu0 0.0
      %1924 = vmatprep.subr.mxu0 0.0
      %1925 = vmatpush1.msra.mxu0 0.0
      %1926 = vmatprep.subr.mxu0 0.0
      %1927 = vmatpush1.msra.mxu0 0.0
      %1928 = vmatprep.subr.mxu0 0.0
      %1929 = vmatpush1.msra.mxu0 0.0
      %1930 = vmatprep.subr.mxu0 0.0
      %1931 = vmatpush1.msra.mxu0 0.0
      %1932 = vmatprep.subr.mxu0 0.0
      %1933 = vmatpush1.msra.mxu0 0.0
      %1934 = vmatprep.subr.mxu0 0.0
      %1935 = vmatpush1.msra.mxu0 0.0
      %1936 = vmatprep.subr.mxu0 0.0
      %1937 = vmatpush1.msra.mxu0 0.0
      %1938 = vmatprep.subr.mxu0 0.0
      %1939 = vmatpush1.msra.mxu0 0.0
      %1940 = vmatprep.subr.mxu0 0.0
      %1941 = vmatpush1.msra.mxu0 0.0
      %1942 = vmatprep.subr.mxu0 0.0
      %1943 = vmatpush1.msra.mxu0 0.0
      %1944 = vmatprep.subr.mxu0 0.0
      %1945 = vmatpush1.msra.mxu0 0.0
      %1946 = vmatprep.subr.mxu0 0.0
      %1947 = vmatpush1.msra.mxu0 0.0
      %1948 = vmatprep.subr.mxu0 0.0
      %1949 = vmatpush1.msra.mxu0 0.0
      %1950 = vmatprep.subr.mxu0 0.0
      %1951 = vmatpush1.msra.mxu0 0.0
      %1952 = vmatprep.subr.mxu0 0.0
      %1953 = vmatpush1.msra.mxu0 0.0
      %1954 = vmatprep.subr.mxu0 0.0
      %1955 = vmatpush1.msra.mxu0 0.0
      %1956 = vmatprep.subr.mxu0 0.0
      %1957 = vmatpush1.msra.mxu0 0.0
      %1958 = vmatprep.subr.mxu0 0.0
      %1959 = vmatpush1.msra.mxu0 0.0
      %1960 = vmatprep.subr.mxu0 0.0
      %1961 = vmatpush1.msra.mxu0 0.0
      %1962 = vmatprep.mubr.f32.mxu0 0.0
      %1963 = vmatmul.mubr.f32.gmra.mrb[0].mxu0 %v554
      %v1964 = vpop.f32.mrb[0].mxu0
      %v1965 = vadd.f32 0.0, %v1964
      %v1966 = vpop.f32.mrb[0].mxu0
      %1967 = vdwg.mxu0
      %v1968 = vadd.f32 %v1897, %v1965
      %1969 = vmatprep.subr.mxu0 0.0
      %1970 = vmatpush1.msra.mxu0 %v868
      %1971 = vmatprep.subr.mxu0 0.0
      %1972 = vmatpush1.msra.mxu0 0.0
      %1973 = vmatprep.subr.mxu0 0.0
      %1974 = vmatpush1.msra.mxu0 0.0
      %1975 = vmatprep.subr.mxu0 0.0
      %1976 = vmatpush1.msra.mxu0 0.0
      %1977 = vmatprep.subr.mxu0 0.0
      %1978 = vmatpush1.msra.mxu0 0.0
      %1979 = vmatprep.subr.mxu0 0.0
      %1980 = vmatpush1.msra.mxu0 0.0
      %1981 = vmatprep.subr.mxu0 0.0
      %1982 = vmatpush1.msra.mxu0 0.0
      %1983 = vmatprep.subr.mxu0 0.0
      %1984 = vmatpush1.msra.mxu0 0.0
      %1985 = vmatprep.subr.mxu0 0.0
      %1986 = vmatpush1.msra.mxu0 0.0
      %1987 = vmatprep.subr.mxu0 0.0
      %1988 = vmatpush1.msra.mxu0 0.0
      %1989 = vmatprep.subr.mxu0 0.0
      %1990 = vmatpush1.msra.mxu0 0.0
      %1991 = vmatprep.subr.mxu0 0.0
      %1992 = vmatpush1.msra.mxu0 0.0
      %1993 = vmatprep.subr.mxu0 0.0
      %1994 = vmatpush1.msra.mxu0 0.0
      %1995 = vmatprep.subr.mxu0 0.0
      %1996 = vmatpush1.msra.mxu0 0.0
      %1997 = vmatprep.subr.mxu0 0.0
      %1998 = vmatpush1.msra.mxu0 0.0
      %1999 = vmatprep.subr.mxu0 0.0
      %2000 = vmatpush1.msra.mxu0 0.0
      %2001 = vmatprep.subr.mxu0 0.0
      %2002 = vmatpush1.msra.mxu0 0.0
      %2003 = vmatprep.subr.mxu0 0.0
      %2004 = vmatpush1.msra.mxu0 0.0
      %2005 = vmatprep.subr.mxu0 0.0
      %2006 = vmatpush1.msra.mxu0 0.0
      %2007 = vmatprep.subr.mxu0 0.0
      %2008 = vmatpush1.msra.mxu0 0.0
      %2009 = vmatprep.subr.mxu0 0.0
      %2010 = vmatpush1.msra.mxu0 0.0
      %2011 = vmatprep.subr.mxu0 0.0
      %2012 = vmatpush1.msra.mxu0 0.0
      %2013 = vmatprep.subr.mxu0 0.0
      %2014 = vmatpush1.msra.mxu0 0.0
      %2015 = vmatprep.subr.mxu0 0.0
      %2016 = vmatpush1.msra.mxu0 0.0
      %2017 = vmatprep.subr.mxu0 0.0
      %2018 = vmatpush1.msra.mxu0 0.0
      %2019 = vmatprep.subr.mxu0 0.0
      %2020 = vmatpush1.msra.mxu0 0.0
      %2021 = vmatprep.subr.mxu0 0.0
      %2022 = vmatpush1.msra.mxu0 0.0
      %2023 = vmatprep.subr.mxu0 0.0
      %2024 = vmatpush1.msra.mxu0 0.0
      %2025 = vmatprep.subr.mxu0 0.0
      %2026 = vmatpush1.msra.mxu0 0.0
      %2027 = vmatprep.subr.mxu0 0.0
      %2028 = vmatpush1.msra.mxu0 0.0
      %2029 = vmatprep.subr.mxu0 0.0
      %2030 = vmatpush1.msra.mxu0 0.0
      %2031 = vmatprep.subr.mxu0 0.0
      %2032 = vmatpush1.msra.mxu0 0.0
      %2033 = vmatprep.mubr.f32.mxu0 0.0
      %2034 = vmatmul.mubr.f32.gmra.mrb[0].mxu0 %v631
      %v2035 = vpop.f32.mrb[0].mxu0
      %v2036 = vadd.f32 0.0, %v2035
      %v2037 = vpop.f32.mrb[0].mxu0
      %2038 = vdwg.mxu0
      %v2039 = vadd.f32 %v1968, %v2036
      %2041 = vrot.lane.b32.xlu0 %v473, 120
      %v2042 = vpop.permute.xlu0 %2041
      %2044 = vmatprep.subr.mxu0 0.0
      %2045 = vmatpush1.msra.mxu0 %v2042
      %2046 = vmatprep.subr.mxu0 0.0
      %2047 = vmatpush1.msra.mxu0 0.0
      %2048 = vmatprep.subr.mxu0 0.0
      %2049 = vmatpush1.msra.mxu0 0.0
      %2050 = vmatprep.subr.mxu0 0.0
      %2051 = vmatpush1.msra.mxu0 0.0
      %2052 = vmatprep.subr.mxu0 0.0
      %2053 = vmatpush1.msra.mxu0 0.0
      %2054 = vmatprep.subr.mxu0 0.0
      %2055 = vmatpush1.msra.mxu0 0.0
      %2056 = vmatprep.subr.mxu0 0.0
      %2057 = vmatpush1.msra.mxu0 0.0
      %2058 = vmatprep.subr.mxu0 0.0
      %2059 = vmatpush1.msra.mxu0 0.0
      %2060 = vmatprep.subr.mxu0 0.0
      %2061 = vmatpush1.msra.mxu0 0.0
      %2062 = vmatprep.subr.mxu0 0.0
      %2063 = vmatpush1.msra.mxu0 0.0
      %2064 = vmatprep.subr.mxu0 0.0
      %2065 = vmatpush1.msra.mxu0 0.0
      %2066 = vmatprep.subr.mxu0 0.0
      %2067 = vmatpush1.msra.mxu0 0.0
      %2068 = vmatprep.subr.mxu0 0.0
      %2069 = vmatpush1.msra.mxu0 0.0
      %2070 = vmatprep.subr.mxu0 0.0
      %2071 = vmatpush1.msra.mxu0 0.0
      %2072 = vmatprep.subr.mxu0 0.0
      %2073 = vmatpush1.msra.mxu0 0.0
      %2074 = vmatprep.subr.mxu0 0.0
      %2075 = vmatpush1.msra.mxu0 0.0
      %2076 = vmatprep.subr.mxu0 0.0
      %2077 = vmatpush1.msra.mxu0 0.0
      %2078 = vmatprep.subr.mxu0 0.0
      %2079 = vmatpush1.msra.mxu0 0.0
      %2080 = vmatprep.subr.mxu0 0.0
      %2081 = vmatpush1.msra.mxu0 0.0
      %2082 = vmatprep.subr.mxu0 0.0
      %2083 = vmatpush1.msra.mxu0 0.0
      %2084 = vmatprep.subr.mxu0 0.0
      %2085 = vmatpush1.msra.mxu0 0.0
      %2086 = vmatprep.subr.mxu0 0.0
      %2087 = vmatpush1.msra.mxu0 0.0
      %2088 = vmatprep.subr.mxu0 0.0
      %2089 = vmatpush1.msra.mxu0 0.0
      %2090 = vmatprep.subr.mxu0 0.0
      %2091 = vmatpush1.msra.mxu0 0.0
      %2092 = vmatprep.subr.mxu0 0.0
      %2093 = vmatpush1.msra.mxu0 0.0
      %2094 = vmatprep.subr.mxu0 0.0
      %2095 = vmatpush1.msra.mxu0 0.0
      %2096 = vmatprep.subr.mxu0 0.0
      %2097 = vmatpush1.msra.mxu0 0.0
      %2098 = vmatprep.subr.mxu0 0.0
      %2099 = vmatpush1.msra.mxu0 0.0
      %2100 = vmatprep.subr.mxu0 0.0
      %2101 = vmatpush1.msra.mxu0 0.0
      %2102 = vmatprep.subr.mxu0 0.0
      %2103 = vmatpush1.msra.mxu0 0.0
      %2104 = vmatprep.subr.mxu0 0.0
      %2105 = vmatpush1.msra.mxu0 0.0
      %2106 = vmatprep.subr.mxu0 0.0
      %2107 = vmatpush1.msra.mxu0 0.0
      %2108 = vmatprep.mubr.f32.mxu0 0.0
      %2109 = vmatmul.mubr.f32.gmra.mrb[0].mxu0 %v711
      %v2110 = vpop.f32.mrb[0].mxu0
      %v2111 = vadd.f32 0.0, %v2110
      %v2112 = vpop.f32.mrb[0].mxu0
      %2113 = vdwg.mxu0
      %v2114 = vadd.f32 %v2039, %v2111
      %2116 = vrot.lane.b32.xlu0 %v550, 120
      %v2117 = vpop.permute.xlu0 %2116
      %2119 = vmatprep.subr.mxu0 0.0
      %2120 = vmatpush1.msra.mxu0 %v2117
      %2121 = vmatprep.subr.mxu0 0.0
      %2122 = vmatpush1.msra.mxu0 0.0
      %2123 = vmatprep.subr.mxu0 0.0
      %2124 = vmatpush1.msra.mxu0 0.0
      %2125 = vmatprep.subr.mxu0 0.0
      %2126 = vmatpush1.msra.mxu0 0.0
      %2127 = vmatprep.subr.mxu0 0.0
      %2128 = vmatpush1.msra.mxu0 0.0
      %2129 = vmatprep.subr.mxu0 0.0
      %2130 = vmatpush1.msra.mxu0 0.0
      %2131 = vmatprep.subr.mxu0 0.0
      %2132 = vmatpush1.msra.mxu0 0.0
      %2133 = vmatprep.subr.mxu0 0.0
      %2134 = vmatpush1.msra.mxu0 0.0
      %2135 = vmatprep.subr.mxu0 0.0
      %2136 = vmatpush1.msra.mxu0 0.0
      %2137 = vmatprep.subr.mxu0 0.0
      %2138 = vmatpush1.msra.mxu0 0.0
      %2139 = vmatprep.subr.mxu0 0.0
      %2140 = vmatpush1.msra.mxu0 0.0
      %2141 = vmatprep.subr.mxu0 0.0
      %2142 = vmatpush1.msra.mxu0 0.0
      %2143 = vmatprep.subr.mxu0 0.0
      %2144 = vmatpush1.msra.mxu0 0.0
      %2145 = vmatprep.subr.mxu0 0.0
      %2146 = vmatpush1.msra.mxu0 0.0
      %2147 = vmatprep.subr.mxu0 0.0
      %2148 = vmatpush1.msra.mxu0 0.0
      %2149 = vmatprep.subr.mxu0 0.0
      %2150 = vmatpush1.msra.mxu0 0.0
      %2151 = vmatprep.subr.mxu0 0.0
      %2152 = vmatpush1.msra.mxu0 0.0
      %2153 = vmatprep.subr.mxu0 0.0
      %2154 = vmatpush1.msra.mxu0 0.0
      %2155 = vmatprep.subr.mxu0 0.0
      %2156 = vmatpush1.msra.mxu0 0.0
      %2157 = vmatprep.subr.mxu0 0.0
      %2158 = vmatpush1.msra.mxu0 0.0
      %2159 = vmatprep.subr.mxu0 0.0
      %2160 = vmatpush1.msra.mxu0 0.0
      %2161 = vmatprep.subr.mxu0 0.0
      %2162 = vmatpush1.msra.mxu0 0.0
      %2163 = vmatprep.subr.mxu0 0.0
      %2164 = vmatpush1.msra.mxu0 0.0
      %2165 = vmatprep.subr.mxu0 0.0
      %2166 = vmatpush1.msra.mxu0 0.0
      %2167 = vmatprep.subr.mxu0 0.0
      %2168 = vmatpush1.msra.mxu0 0.0
      %2169 = vmatprep.subr.mxu0 0.0
      %2170 = vmatpush1.msra.mxu0 0.0
      %2171 = vmatprep.subr.mxu0 0.0
      %2172 = vmatpush1.msra.mxu0 0.0
      %2173 = vmatprep.subr.mxu0 0.0
      %2174 = vmatpush1.msra.mxu0 0.0
      %2175 = vmatprep.subr.mxu0 0.0
      %2176 = vmatpush1.msra.mxu0 0.0
      %2177 = vmatprep.subr.mxu0 0.0
      %2178 = vmatpush1.msra.mxu0 0.0
      %2179 = vmatprep.subr.mxu0 0.0
      %2180 = vmatpush1.msra.mxu0 0.0
      %2181 = vmatprep.subr.mxu0 0.0
      %2182 = vmatpush1.msra.mxu0 0.0
      %2183 = vmatprep.mubr.f32.mxu0 0.0
      %2184 = vmatmul.mubr.f32.gmra.mrb[0].mxu0 %v791
      %v2185 = vpop.f32.mrb[0].mxu0
      %v2186 = vadd.f32 0.0, %v2185
      %v2187 = vpop.f32.mrb[0].mxu0
      %2188 = vdwg.mxu0
      %v2189 = vadd.f32 %v2114, %v2186
      %2191 = vrot.lane.b32.xlu0 %v627, 120
      %v2192 = vpop.permute.xlu0 %2191
      %2194 = vmatprep.subr.mxu0 0.0
      %2195 = vmatpush1.msra.mxu0 %v2192
      %2196 = vmatprep.subr.mxu0 0.0
      %2197 = vmatpush1.msra.mxu0 0.0
      %2198 = vmatprep.subr.mxu0 0.0
      %2199 = vmatpush1.msra.mxu0 0.0
      %2200 = vmatprep.subr.mxu0 0.0
      %2201 = vmatpush1.msra.mxu0 0.0
      %2202 = vmatprep.subr.mxu0 0.0
      %2203 = vmatpush1.msra.mxu0 0.0
      %2204 = vmatprep.subr.mxu0 0.0
      %2205 = vmatpush1.msra.mxu0 0.0
      %2206 = vmatprep.subr.mxu0 0.0
      %2207 = vmatpush1.msra.mxu0 0.0
      %2208 = vmatprep.subr.mxu0 0.0
      %2209 = vmatpush1.msra.mxu0 0.0
      %2210 = vmatprep.subr.mxu0 0.0
      %2211 = vmatpush1.msra.mxu0 0.0
      %2212 = vmatprep.subr.mxu0 0.0
      %2213 = vmatpush1.msra.mxu0 0.0
      %2214 = vmatprep.subr.mxu0 0.0
      %2215 = vmatpush1.msra.mxu0 0.0
      %2216 = vmatprep.subr.mxu0 0.0
      %2217 = vmatpush1.msra.mxu0 0.0
      %2218 = vmatprep.subr.mxu0 0.0
      %2219 = vmatpush1.msra.mxu0 0.0
      %2220 = vmatprep.subr.mxu0 0.0
      %2221 = vmatpush1.msra.mxu0 0.0
      %2222 = vmatprep.subr.mxu0 0.0
      %2223 = vmatpush1.msra.mxu0 0.0
      %2224 = vmatprep.subr.mxu0 0.0
      %2225 = vmatpush1.msra.mxu0 0.0
      %2226 = vmatprep.subr.mxu0 0.0
      %2227 = vmatpush1.msra.mxu0 0.0
      %2228 = vmatprep.subr.mxu0 0.0
      %2229 = vmatpush1.msra.mxu0 0.0
      %2230 = vmatprep.subr.mxu0 0.0
      %2231 = vmatpush1.msra.mxu0 0.0
      %2232 = vmatprep.subr.mxu0 0.0
      %2233 = vmatpush1.msra.mxu0 0.0
      %2234 = vmatprep.subr.mxu0 0.0
      %2235 = vmatpush1.msra.mxu0 0.0
      %2236 = vmatprep.subr.mxu0 0.0
      %2237 = vmatpush1.msra.mxu0 0.0
      %2238 = vmatprep.subr.mxu0 0.0
      %2239 = vmatpush1.msra.mxu0 0.0
      %2240 = vmatprep.subr.mxu0 0.0
      %2241 = vmatpush1.msra.mxu0 0.0
      %2242 = vmatprep.subr.mxu0 0.0
      %2243 = vmatpush1.msra.mxu0 0.0
      %2244 = vmatprep.subr.mxu0 0.0
      %2245 = vmatpush1.msra.mxu0 0.0
      %2246 = vmatprep.subr.mxu0 0.0
      %2247 = vmatpush1.msra.mxu0 0.0
      %2248 = vmatprep.subr.mxu0 0.0
      %2249 = vmatpush1.msra.mxu0 0.0
      %2250 = vmatprep.subr.mxu0 0.0
      %2251 = vmatpush1.msra.mxu0 0.0
      %2252 = vmatprep.subr.mxu0 0.0
      %2253 = vmatpush1.msra.mxu0 0.0
      %2254 = vmatprep.subr.mxu0 0.0
      %2255 = vmatpush1.msra.mxu0 0.0
      %2256 = vmatprep.subr.mxu0 0.0
      %2257 = vmatpush1.msra.mxu0 0.0
      %2258 = vmatprep.mubr.f32.mxu0 0.0
      %2259 = vmatmul.mubr.f32.gmra.mrb[0].mxu0 %v871
      %v2260 = vpop.f32.mrb[0].mxu0
      %v2261 = vadd.f32 0.0, %v2260
      %v2262 = vpop.f32.mrb[0].mxu0
      %2263 = vdwg.mxu0
      %v2264 = vadd.f32 %v2189, %v2261
      %v2265 = vadd.f32 %v2264, %v948
      %v2266 = vmax.f32 %v2265, 0.0
      %v2267 = vsel %vm952, %v2266, 0.0
      %2268 = vadd.xlane.f32.xlu0 %v2267
      %v2269 = vpop.xlane.xlu0 %2268
      %v2270 = vmul.f32 %v2266, %v2266
      %v2271 = vsel %vm952, %v2270, 0.0
      %2272 = vadd.xlane.f32.xlu0 %v2271
      %v2273 = vpop.xlane.xlu0 %2272
      %v2274 = vmax.f32 %v1612, %v2266
      %v2275 = vmin.f32 %v1613, %v2266
      %v2276 = vadd.f32 %v1614, %v2269
      %v2277 = vadd.f32 %v1615, %v2273
      %2278 = vmatprep.subr.mxu0 0.0
      %2279 = vmatpush1.msra.mxu0 %v627
      %2280 = vmatprep.subr.mxu0 0.0
      %2281 = vmatpush1.msra.mxu0 0.0
      %2282 = vmatprep.subr.mxu0 0.0
      %2283 = vmatpush1.msra.mxu0 0.0
      %2284 = vmatprep.subr.mxu0 0.0
      %2285 = vmatpush1.msra.mxu0 0.0
      %2286 = vmatprep.subr.mxu0 0.0
      %2287 = vmatpush1.msra.mxu0 0.0
      %2288 = vmatprep.subr.mxu0 0.0
      %2289 = vmatpush1.msra.mxu0 0.0
      %2290 = vmatprep.subr.mxu0 0.0
      %2291 = vmatpush1.msra.mxu0 0.0
      %2292 = vmatprep.subr.mxu0 0.0
      %2293 = vmatpush1.msra.mxu0 0.0
      %2294 = vmatprep.subr.mxu0 0.0
      %2295 = vmatpush1.msra.mxu0 0.0
      %2296 = vmatprep.subr.mxu0 0.0
      %2297 = vmatpush1.msra.mxu0 0.0
      %2298 = vmatprep.subr.mxu0 0.0
      %2299 = vmatpush1.msra.mxu0 0.0
      %2300 = vmatprep.subr.mxu0 0.0
      %2301 = vmatpush1.msra.mxu0 0.0
      %2302 = vmatprep.subr.mxu0 0.0
      %2303 = vmatpush1.msra.mxu0 0.0
      %2304 = vmatprep.subr.mxu0 0.0
      %2305 = vmatpush1.msra.mxu0 0.0
      %2306 = vmatprep.subr.mxu0 0.0
      %2307 = vmatpush1.msra.mxu0 0.0
      %2308 = vmatprep.subr.mxu0 0.0
      %2309 = vmatpush1.msra.mxu0 0.0
      %2310 = vmatprep.subr.mxu0 0.0
      %2311 = vmatpush1.msra.mxu0 0.0
      %2312 = vmatprep.subr.mxu0 0.0
      %2313 = vmatpush1.msra.mxu0 0.0
      %2314 = vmatprep.subr.mxu0 0.0
      %2315 = vmatpush1.msra.mxu0 0.0
      %2316 = vmatprep.subr.mxu0 0.0
      %2317 = vmatpush1.msra.mxu0 0.0
      %2318 = vmatprep.subr.mxu0 0.0
      %2319 = vmatpush1.msra.mxu0 0.0
      %2320 = vmatprep.subr.mxu0 0.0
      %2321 = vmatpush1.msra.mxu0 0.0
      %2322 = vmatprep.subr.mxu0 0.0
      %2323 = vmatpush1.msra.mxu0 0.0
      %2324 = vmatprep.subr.mxu0 0.0
      %2325 = vmatpush1.msra.mxu0 0.0
      %2326 = vmatprep.subr.mxu0 0.0
      %2327 = vmatpush1.msra.mxu0 0.0
      %2328 = vmatprep.subr.mxu0 0.0
      %2329 = vmatpush1.msra.mxu0 0.0
      %2330 = vmatprep.subr.mxu0 0.0
      %2331 = vmatpush1.msra.mxu0 0.0
      %2332 = vmatprep.subr.mxu0 0.0
      %2333 = vmatpush1.msra.mxu0 0.0
      %2334 = vmatprep.subr.mxu0 0.0
      %2335 = vmatpush1.msra.mxu0 0.0
      %2336 = vmatprep.subr.mxu0 0.0
      %2337 = vmatpush1.msra.mxu0 0.0
      %2338 = vmatprep.subr.mxu0 0.0
      %2339 = vmatpush1.msra.mxu0 0.0
      %2340 = vmatprep.subr.mxu0 0.0
      %2341 = vmatpush1.msra.mxu0 0.0
      %2342 = vmatprep.mubr.f32.mxu0 0.0
      %2343 = vmatmul.mubr.f32.gmra.mrb[0].mxu0 %v251
      %v2344 = vpop.f32.mrb[0].mxu0
      %v2345 = vadd.f32 0.0, %v2344
      %v2346 = vpop.f32.mrb[0].mxu0
      %2347 = vdwg.mxu0
      %2348 = vmatprep.subr.mxu0 0.0
      %2349 = vmatpush1.msra.mxu0 %v550
      %2350 = vmatprep.subr.mxu0 0.0
      %2351 = vmatpush1.msra.mxu0 0.0
      %2352 = vmatprep.subr.mxu0 0.0
      %2353 = vmatpush1.msra.mxu0 0.0
      %2354 = vmatprep.subr.mxu0 0.0
      %2355 = vmatpush1.msra.mxu0 0.0
      %2356 = vmatprep.subr.mxu0 0.0
      %2357 = vmatpush1.msra.mxu0 0.0
      %2358 = vmatprep.subr.mxu0 0.0
      %2359 = vmatpush1.msra.mxu0 0.0
      %2360 = vmatprep.subr.mxu0 0.0
      %2361 = vmatpush1.msra.mxu0 0.0
      %2362 = vmatprep.subr.mxu0 0.0
      %2363 = vmatpush1.msra.mxu0 0.0
      %2364 = vmatprep.subr.mxu0 0.0
      %2365 = vmatpush1.msra.mxu0 0.0
      %2366 = vmatprep.subr.mxu0 0.0
      %2367 = vmatpush1.msra.mxu0 0.0
      %2368 = vmatprep.subr.mxu0 0.0
      %2369 = vmatpush1.msra.mxu0 0.0
      %2370 = vmatprep.subr.mxu0 0.0
      %2371 = vmatpush1.msra.mxu0 0.0
      %2372 = vmatprep.subr.mxu0 0.0
      %2373 = vmatpush1.msra.mxu0 0.0
      %2374 = vmatprep.subr.mxu0 0.0
      %2375 = vmatpush1.msra.mxu0 0.0
      %2376 = vmatprep.subr.mxu0 0.0
      %2377 = vmatpush1.msra.mxu0 0.0
      %2378 = vmatprep.subr.mxu0 0.0
      %2379 = vmatpush1.msra.mxu0 0.0
      %2380 = vmatprep.subr.mxu0 0.0
      %2381 = vmatpush1.msra.mxu0 0.0
      %2382 = vmatprep.subr.mxu0 0.0
      %2383 = vmatpush1.msra.mxu0 0.0
      %2384 = vmatprep.subr.mxu0 0.0
      %2385 = vmatpush1.msra.mxu0 0.0
      %2386 = vmatprep.subr.mxu0 0.0
      %2387 = vmatpush1.msra.mxu0 0.0
      %2388 = vmatprep.subr.mxu0 0.0
      %2389 = vmatpush1.msra.mxu0 0.0
      %2390 = vmatprep.subr.mxu0 0.0
      %2391 = vmatpush1.msra.mxu0 0.0
      %2392 = vmatprep.subr.mxu0 0.0
      %2393 = vmatpush1.msra.mxu0 0.0
      %2394 = vmatprep.subr.mxu0 0.0
      %2395 = vmatpush1.msra.mxu0 0.0
      %2396 = vmatprep.subr.mxu0 0.0
      %2397 = vmatpush1.msra.mxu0 0.0
      %2398 = vmatprep.subr.mxu0 0.0
      %2399 = vmatpush1.msra.mxu0 0.0
      %2400 = vmatprep.subr.mxu0 0.0
      %2401 = vmatpush1.msra.mxu0 0.0
      %2402 = vmatprep.subr.mxu0 0.0
      %2403 = vmatpush1.msra.mxu0 0.0
      %2404 = vmatprep.subr.mxu0 0.0
      %2405 = vmatpush1.msra.mxu0 0.0
      %2406 = vmatprep.subr.mxu0 0.0
      %2407 = vmatpush1.msra.mxu0 0.0
      %2408 = vmatprep.subr.mxu0 0.0
      %2409 = vmatpush1.msra.mxu0 0.0
      %2410 = vmatprep.subr.mxu0 0.0
      %2411 = vmatpush1.msra.mxu0 0.0
      %2412 = vmatprep.mubr.f32.mxu0 0.0
      %2413 = vmatmul.mubr.f32.gmra.mrb[0].mxu0 %v324
      %v2414 = vpop.f32.mrb[0].mxu0
      %v2415 = vadd.f32 %v2345, %v2414
      %v2416 = vpop.f32.mrb[0].mxu0
      %2417 = vdwg.mxu0
      %2418 = vmatprep.subr.mxu0 0.0
      %2419 = vmatpush1.msra.mxu0 %v1314
      %2420 = vmatprep.subr.mxu0 0.0
      %2421 = vmatpush1.msra.mxu0 0.0
      %2422 = vmatprep.subr.mxu0 0.0
      %2423 = vmatpush1.msra.mxu0 0.0
      %2424 = vmatprep.subr.mxu0 0.0
      %2425 = vmatpush1.msra.mxu0 0.0
      %2426 = vmatprep.subr.mxu0 0.0
      %2427 = vmatpush1.msra.mxu0 0.0
      %2428 = vmatprep.subr.mxu0 0.0
      %2429 = vmatpush1.msra.mxu0 0.0
      %2430 = vmatprep.subr.mxu0 0.0
      %2431 = vmatpush1.msra.mxu0 0.0
      %2432 = vmatprep.subr.mxu0 0.0
      %2433 = vmatpush1.msra.mxu0 0.0
      %2434 = vmatprep.subr.mxu0 0.0
      %2435 = vmatpush1.msra.mxu0 0.0
      %2436 = vmatprep.subr.mxu0 0.0
      %2437 = vmatpush1.msra.mxu0 0.0
      %2438 = vmatprep.subr.mxu0 0.0
      %2439 = vmatpush1.msra.mxu0 0.0
      %2440 = vmatprep.subr.mxu0 0.0
      %2441 = vmatpush1.msra.mxu0 0.0
      %2442 = vmatprep.subr.mxu0 0.0
      %2443 = vmatpush1.msra.mxu0 0.0
      %2444 = vmatprep.subr.mxu0 0.0
      %2445 = vmatpush1.msra.mxu0 0.0
      %2446 = vmatprep.subr.mxu0 0.0
      %2447 = vmatpush1.msra.mxu0 0.0
      %2448 = vmatprep.subr.mxu0 0.0
      %2449 = vmatpush1.msra.mxu0 0.0
      %2450 = vmatprep.subr.mxu0 0.0
      %2451 = vmatpush1.msra.mxu0 0.0
      %2452 = vmatprep.subr.mxu0 0.0
      %2453 = vmatpush1.msra.mxu0 0.0
      %2454 = vmatprep.subr.mxu0 0.0
      %2455 = vmatpush1.msra.mxu0 0.0
      %2456 = vmatprep.subr.mxu0 0.0
      %2457 = vmatpush1.msra.mxu0 0.0
      %2458 = vmatprep.subr.mxu0 0.0
      %2459 = vmatpush1.msra.mxu0 0.0
      %2460 = vmatprep.subr.mxu0 0.0
      %2461 = vmatpush1.msra.mxu0 0.0
      %2462 = vmatprep.subr.mxu0 0.0
      %2463 = vmatpush1.msra.mxu0 0.0
      %2464 = vmatprep.subr.mxu0 0.0
      %2465 = vmatpush1.msra.mxu0 0.0
      %2466 = vmatprep.subr.mxu0 0.0
      %2467 = vmatpush1.msra.mxu0 0.0
      %2468 = vmatprep.subr.mxu0 0.0
      %2469 = vmatpush1.msra.mxu0 0.0
      %2470 = vmatprep.subr.mxu0 0.0
      %2471 = vmatpush1.msra.mxu0 0.0
      %2472 = vmatprep.subr.mxu0 0.0
      %2473 = vmatpush1.msra.mxu0 0.0
      %2474 = vmatprep.subr.mxu0 0.0
      %2475 = vmatpush1.msra.mxu0 0.0
      %2476 = vmatprep.subr.mxu0 0.0
      %2477 = vmatpush1.msra.mxu0 0.0
      %2478 = vmatprep.subr.mxu0 0.0
      %2479 = vmatpush1.msra.mxu0 0.0
      %2480 = vmatprep.subr.mxu0 0.0
      %2481 = vmatpush1.msra.mxu0 0.0
      %2482 = vmatprep.mubr.f32.mxu0 0.0
      %2483 = vmatmul.mubr.f32.gmra.mrb[0].mxu0 %v400
      %v2484 = vpop.f32.mrb[0].mxu0
      %v2485 = vadd.f32 0.0, %v2484
      %v2486 = vpop.f32.mrb[0].mxu0
      %2487 = vdwg.mxu0
      %v2488 = vadd.f32 %v2415, %v2485
      %2489 = vmatprep.subr.mxu0 0.0
      %2490 = vmatpush1.msra.mxu0 %v788
      %2491 = vmatprep.subr.mxu0 0.0
      %2492 = vmatpush1.msra.mxu0 0.0
      %2493 = vmatprep.subr.mxu0 0.0
      %2494 = vmatpush1.msra.mxu0 0.0
      %2495 = vmatprep.subr.mxu0 0.0
      %2496 = vmatpush1.msra.mxu0 0.0
      %2497 = vmatprep.subr.mxu0 0.0
      %2498 = vmatpush1.msra.mxu0 0.0
      %2499 = vmatprep.subr.mxu0 0.0
      %2500 = vmatpush1.msra.mxu0 0.0
      %2501 = vmatprep.subr.mxu0 0.0
      %2502 = vmatpush1.msra.mxu0 0.0
      %2503 = vmatprep.subr.mxu0 0.0
      %2504 = vmatpush1.msra.mxu0 0.0
      %2505 = vmatprep.subr.mxu0 0.0
      %2506 = vmatpush1.msra.mxu0 0.0
      %2507 = vmatprep.subr.mxu0 0.0
      %2508 = vmatpush1.msra.mxu0 0.0
      %2509 = vmatprep.subr.mxu0 0.0
      %2510 = vmatpush1.msra.mxu0 0.0
      %2511 = vmatprep.subr.mxu0 0.0
      %2512 = vmatpush1.msra.mxu0 0.0
      %2513 = vmatprep.subr.mxu0 0.0
      %2514 = vmatpush1.msra.mxu0 0.0
      %2515 = vmatprep.subr.mxu0 0.0
      %2516 = vmatpush1.msra.mxu0 0.0
      %2517 = vmatprep.subr.mxu0 0.0
      %2518 = vmatpush1.msra.mxu0 0.0
      %2519 = vmatprep.subr.mxu0 0.0
      %2520 = vmatpush1.msra.mxu0 0.0
      %2521 = vmatprep.subr.mxu0 0.0
      %2522 = vmatpush1.msra.mxu0 0.0
      %2523 = vmatprep.subr.mxu0 0.0
      %2524 = vmatpush1.msra.mxu0 0.0
      %2525 = vmatprep.subr.mxu0 0.0
      %2526 = vmatpush1.msra.mxu0 0.0
      %2527 = vmatprep.subr.mxu0 0.0
      %2528 = vmatpush1.msra.mxu0 0.0
      %2529 = vmatprep.subr.mxu0 0.0
      %2530 = vmatpush1.msra.mxu0 0.0
      %2531 = vmatprep.subr.mxu0 0.0
      %2532 = vmatpush1.msra.mxu0 0.0
      %2533 = vmatprep.subr.mxu0 0.0
      %2534 = vmatpush1.msra.mxu0 0.0
      %2535 = vmatprep.subr.mxu0 0.0
      %2536 = vmatpush1.msra.mxu0 0.0
      %2537 = vmatprep.subr.mxu0 0.0
      %2538 = vmatpush1.msra.mxu0 0.0
      %2539 = vmatprep.subr.mxu0 0.0
      %2540 = vmatpush1.msra.mxu0 0.0
      %2541 = vmatprep.subr.mxu0 0.0
      %2542 = vmatpush1.msra.mxu0 0.0
      %2543 = vmatprep.subr.mxu0 0.0
      %2544 = vmatpush1.msra.mxu0 0.0
      %2545 = vmatprep.subr.mxu0 0.0
      %2546 = vmatpush1.msra.mxu0 0.0
      %2547 = vmatprep.subr.mxu0 0.0
      %2548 = vmatpush1.msra.mxu0 0.0
      %2549 = vmatprep.subr.mxu0 0.0
      %2550 = vmatpush1.msra.mxu0 0.0
      %2551 = vmatprep.subr.mxu0 0.0
      %2552 = vmatpush1.msra.mxu0 0.0
      %2553 = vmatprep.mubr.f32.mxu0 0.0
      %2554 = vmatmul.mubr.f32.gmra.mrb[0].mxu0 %v477
      %v2555 = vpop.f32.mrb[0].mxu0
      %v2556 = vadd.f32 0.0, %v2555
      %v2557 = vpop.f32.mrb[0].mxu0
      %2558 = vdwg.mxu0
      %v2559 = vadd.f32 %v2488, %v2556
      %2560 = vmatprep.subr.mxu0 0.0
      %2561 = vmatpush1.msra.mxu0 %v868
      %2562 = vmatprep.subr.mxu0 0.0
      %2563 = vmatpush1.msra.mxu0 0.0
      %2564 = vmatprep.subr.mxu0 0.0
      %2565 = vmatpush1.msra.mxu0 0.0
      %2566 = vmatprep.subr.mxu0 0.0
      %2567 = vmatpush1.msra.mxu0 0.0
      %2568 = vmatprep.subr.mxu0 0.0
      %2569 = vmatpush1.msra.mxu0 0.0
      %2570 = vmatprep.subr.mxu0 0.0
      %2571 = vmatpush1.msra.mxu0 0.0
      %2572 = vmatprep.subr.mxu0 0.0
      %2573 = vmatpush1.msra.mxu0 0.0
      %2574 = vmatprep.subr.mxu0 0.0
      %2575 = vmatpush1.msra.mxu0 0.0
      %2576 = vmatprep.subr.mxu0 0.0
      %2577 = vmatpush1.msra.mxu0 0.0
      %2578 = vmatprep.subr.mxu0 0.0
      %2579 = vmatpush1.msra.mxu0 0.0
      %2580 = vmatprep.subr.mxu0 0.0
      %2581 = vmatpush1.msra.mxu0 0.0
      %2582 = vmatprep.subr.mxu0 0.0
      %2583 = vmatpush1.msra.mxu0 0.0
      %2584 = vmatprep.subr.mxu0 0.0
      %2585 = vmatpush1.msra.mxu0 0.0
      %2586 = vmatprep.subr.mxu0 0.0
      %2587 = vmatpush1.msra.mxu0 0.0
      %2588 = vmatprep.subr.mxu0 0.0
      %2589 = vmatpush1.msra.mxu0 0.0
      %2590 = vmatprep.subr.mxu0 0.0
      %2591 = vmatpush1.msra.mxu0 0.0
      %2592 = vmatprep.subr.mxu0 0.0
      %2593 = vmatpush1.msra.mxu0 0.0
      %2594 = vmatprep.subr.mxu0 0.0
      %2595 = vmatpush1.msra.mxu0 0.0
      %2596 = vmatprep.subr.mxu0 0.0
      %2597 = vmatpush1.msra.mxu0 0.0
      %2598 = vmatprep.subr.mxu0 0.0
      %2599 = vmatpush1.msra.mxu0 0.0
      %2600 = vmatprep.subr.mxu0 0.0
      %2601 = vmatpush1.msra.mxu0 0.0
      %2602 = vmatprep.subr.mxu0 0.0
      %2603 = vmatpush1.msra.mxu0 0.0
      %2604 = vmatprep.subr.mxu0 0.0
      %2605 = vmatpush1.msra.mxu0 0.0
      %2606 = vmatprep.subr.mxu0 0.0
      %2607 = vmatpush1.msra.mxu0 0.0
      %2608 = vmatprep.subr.mxu0 0.0
      %2609 = vmatpush1.msra.mxu0 0.0
      %2610 = vmatprep.subr.mxu0 0.0
      %2611 = vmatpush1.msra.mxu0 0.0
      %2612 = vmatprep.subr.mxu0 0.0
      %2613 = vmatpush1.msra.mxu0 0.0
      %2614 = vmatprep.subr.mxu0 0.0
      %2615 = vmatpush1.msra.mxu0 0.0
      %2616 = vmatprep.subr.mxu0 0.0
      %2617 = vmatpush1.msra.mxu0 0.0
      %2618 = vmatprep.subr.mxu0 0.0
      %2619 = vmatpush1.msra.mxu0 0.0
      %2620 = vmatprep.subr.mxu0 0.0
      %2621 = vmatpush1.msra.mxu0 0.0
      %2622 = vmatprep.subr.mxu0 0.0
      %2623 = vmatpush1.msra.mxu0 0.0
      %2624 = vmatprep.mubr.f32.mxu0 0.0
      %2625 = vmatmul.mubr.f32.gmra.mrb[0].mxu0 %v554
      %v2626 = vpop.f32.mrb[0].mxu0
      %v2627 = vadd.f32 0.0, %v2626
      %v2628 = vpop.f32.mrb[0].mxu0
      %2629 = vdwg.mxu0
      %v2630 = vadd.f32 %v2559, %v2627
      %2631 = vmatprep.subr.mxu0 0.0
      %2632 = vmatpush1.msra.mxu0 %v1530
      %2633 = vmatprep.subr.mxu0 0.0
      %2634 = vmatpush1.msra.mxu0 0.0
      %2635 = vmatprep.subr.mxu0 0.0
      %2636 = vmatpush1.msra.mxu0 0.0
      %2637 = vmatprep.subr.mxu0 0.0
      %2638 = vmatpush1.msra.mxu0 0.0
      %2639 = vmatprep.subr.mxu0 0.0
      %2640 = vmatpush1.msra.mxu0 0.0
      %2641 = vmatprep.subr.mxu0 0.0
      %2642 = vmatpush1.msra.mxu0 0.0
      %2643 = vmatprep.subr.mxu0 0.0
      %2644 = vmatpush1.msra.mxu0 0.0
      %2645 = vmatprep.subr.mxu0 0.0
      %2646 = vmatpush1.msra.mxu0 0.0
      %2647 = vmatprep.subr.mxu0 0.0
      %2648 = vmatpush1.msra.mxu0 0.0
      %2649 = vmatprep.subr.mxu0 0.0
      %2650 = vmatpush1.msra.mxu0 0.0
      %2651 = vmatprep.subr.mxu0 0.0
      %2652 = vmatpush1.msra.mxu0 0.0
      %2653 = vmatprep.subr.mxu0 0.0
      %2654 = vmatpush1.msra.mxu0 0.0
      %2655 = vmatprep.subr.mxu0 0.0
      %2656 = vmatpush1.msra.mxu0 0.0
      %2657 = vmatprep.subr.mxu0 0.0
      %2658 = vmatpush1.msra.mxu0 0.0
      %2659 = vmatprep.subr.mxu0 0.0
      %2660 = vmatpush1.msra.mxu0 0.0
      %2661 = vmatprep.subr.mxu0 0.0
      %2662 = vmatpush1.msra.mxu0 0.0
      %2663 = vmatprep.subr.mxu0 0.0
      %2664 = vmatpush1.msra.mxu0 0.0
      %2665 = vmatprep.subr.mxu0 0.0
      %2666 = vmatpush1.msra.mxu0 0.0
      %2667 = vmatprep.subr.mxu0 0.0
      %2668 = vmatpush1.msra.mxu0 0.0
      %2669 = vmatprep.subr.mxu0 0.0
      %2670 = vmatpush1.msra.mxu0 0.0
      %2671 = vmatprep.subr.mxu0 0.0
      %2672 = vmatpush1.msra.mxu0 0.0
      %2673 = vmatprep.subr.mxu0 0.0
      %2674 = vmatpush1.msra.mxu0 0.0
      %2675 = vmatprep.subr.mxu0 0.0
      %2676 = vmatpush1.msra.mxu0 0.0
      %2677 = vmatprep.subr.mxu0 0.0
      %2678 = vmatpush1.msra.mxu0 0.0
      %2679 = vmatprep.subr.mxu0 0.0
      %2680 = vmatpush1.msra.mxu0 0.0
      %2681 = vmatprep.subr.mxu0 0.0
      %2682 = vmatpush1.msra.mxu0 0.0
      %2683 = vmatprep.subr.mxu0 0.0
      %2684 = vmatpush1.msra.mxu0 0.0
      %2685 = vmatprep.subr.mxu0 0.0
      %2686 = vmatpush1.msra.mxu0 0.0
      %2687 = vmatprep.subr.mxu0 0.0
      %2688 = vmatpush1.msra.mxu0 0.0
      %2689 = vmatprep.subr.mxu0 0.0
      %2690 = vmatpush1.msra.mxu0 0.0
      %2691 = vmatprep.subr.mxu0 0.0
      %2692 = vmatpush1.msra.mxu0 0.0
      %2693 = vmatprep.subr.mxu0 0.0
      %2694 = vmatpush1.msra.mxu0 0.0
      %2695 = vmatprep.mubr.f32.mxu0 0.0
      %2696 = vmatmul.mubr.f32.gmra.mrb[0].mxu0 %v631
      %v2697 = vpop.f32.mrb[0].mxu0
      %v2698 = vadd.f32 0.0, %v2697
      %v2699 = vpop.f32.mrb[0].mxu0
      %2700 = vdwg.mxu0
      %v2701 = vadd.f32 %v2630, %v2698
      %2702 = vmatprep.subr.mxu0 0.0
      %2703 = vmatpush1.msra.mxu0 %v2117
      %2704 = vmatprep.subr.mxu0 0.0
      %2705 = vmatpush1.msra.mxu0 0.0
      %2706 = vmatprep.subr.mxu0 0.0
      %2707 = vmatpush1.msra.mxu0 0.0
      %2708 = vmatprep.subr.mxu0 0.0
      %2709 = vmatpush1.msra.mxu0 0.0
      %2710 = vmatprep.subr.mxu0 0.0
      %2711 = vmatpush1.msra.mxu0 0.0
      %2712 = vmatprep.subr.mxu0 0.0
      %2713 = vmatpush1.msra.mxu0 0.0
      %2714 = vmatprep.subr.mxu0 0.0
      %2715 = vmatpush1.msra.mxu0 0.0
      %2716 = vmatprep.subr.mxu0 0.0
      %2717 = vmatpush1.msra.mxu0 0.0
      %2718 = vmatprep.subr.mxu0 0.0
      %2719 = vmatpush1.msra.mxu0 0.0
      %2720 = vmatprep.subr.mxu0 0.0
      %2721 = vmatpush1.msra.mxu0 0.0
      %2722 = vmatprep.subr.mxu0 0.0
      %2723 = vmatpush1.msra.mxu0 0.0
      %2724 = vmatprep.subr.mxu0 0.0
      %2725 = vmatpush1.msra.mxu0 0.0
      %2726 = vmatprep.subr.mxu0 0.0
      %2727 = vmatpush1.msra.mxu0 0.0
      %2728 = vmatprep.subr.mxu0 0.0
      %2729 = vmatpush1.msra.mxu0 0.0
      %2730 = vmatprep.subr.mxu0 0.0
      %2731 = vmatpush1.msra.mxu0 0.0
      %2732 = vmatprep.subr.mxu0 0.0
      %2733 = vmatpush1.msra.mxu0 0.0
      %2734 = vmatprep.subr.mxu0 0.0
      %2735 = vmatpush1.msra.mxu0 0.0
      %2736 = vmatprep.subr.mxu0 0.0
      %2737 = vmatpush1.msra.mxu0 0.0
      %2738 = vmatprep.subr.mxu0 0.0
      %2739 = vmatpush1.msra.mxu0 0.0
      %2740 = vmatprep.subr.mxu0 0.0
      %2741 = vmatpush1.msra.mxu0 0.0
      %2742 = vmatprep.subr.mxu0 0.0
      %2743 = vmatpush1.msra.mxu0 0.0
      %2744 = vmatprep.subr.mxu0 0.0
      %2745 = vmatpush1.msra.mxu0 0.0
      %2746 = vmatprep.subr.mxu0 0.0
      %2747 = vmatpush1.msra.mxu0 0.0
      %2748 = vmatprep.subr.mxu0 0.0
      %2749 = vmatpush1.msra.mxu0 0.0
      %2750 = vmatprep.subr.mxu0 0.0
      %2751 = vmatpush1.msra.mxu0 0.0
      %2752 = vmatprep.subr.mxu0 0.0
      %2753 = vmatpush1.msra.mxu0 0.0
      %2754 = vmatprep.subr.mxu0 0.0
      %2755 = vmatpush1.msra.mxu0 0.0
      %2756 = vmatprep.subr.mxu0 0.0
      %2757 = vmatpush1.msra.mxu0 0.0
      %2758 = vmatprep.subr.mxu0 0.0
      %2759 = vmatpush1.msra.mxu0 0.0
      %2760 = vmatprep.subr.mxu0 0.0
      %2761 = vmatpush1.msra.mxu0 0.0
      %2762 = vmatprep.subr.mxu0 0.0
      %2763 = vmatpush1.msra.mxu0 0.0
      %2764 = vmatprep.subr.mxu0 0.0
      %2765 = vmatpush1.msra.mxu0 0.0
      %2766 = vmatprep.mubr.f32.mxu0 0.0
      %2767 = vmatmul.mubr.f32.gmra.mrb[0].mxu0 %v711
      %v2768 = vpop.f32.mrb[0].mxu0
      %v2769 = vadd.f32 0.0, %v2768
      %v2770 = vpop.f32.mrb[0].mxu0
      %2771 = vdwg.mxu0
      %v2772 = vadd.f32 %v2701, %v2769
      %2773 = vmatprep.subr.mxu0 0.0
      %2774 = vmatpush1.msra.mxu0 %v2192
      %2775 = vmatprep.subr.mxu0 0.0
      %2776 = vmatpush1.msra.mxu0 0.0
      %2777 = vmatprep.subr.mxu0 0.0
      %2778 = vmatpush1.msra.mxu0 0.0
      %2779 = vmatprep.subr.mxu0 0.0
      %2780 = vmatpush1.msra.mxu0 0.0
      %2781 = vmatprep.subr.mxu0 0.0
      %2782 = vmatpush1.msra.mxu0 0.0
      %2783 = vmatprep.subr.mxu0 0.0
      %2784 = vmatpush1.msra.mxu0 0.0
      %2785 = vmatprep.subr.mxu0 0.0
      %2786 = vmatpush1.msra.mxu0 0.0
      %2787 = vmatprep.subr.mxu0 0.0
      %2788 = vmatpush1.msra.mxu0 0.0
      %2789 = vmatprep.subr.mxu0 0.0
      %2790 = vmatpush1.msra.mxu0 0.0
      %2791 = vmatprep.subr.mxu0 0.0
      %2792 = vmatpush1.msra.mxu0 0.0
      %2793 = vmatprep.subr.mxu0 0.0
      %2794 = vmatpush1.msra.mxu0 0.0
      %2795 = vmatprep.subr.mxu0 0.0
      %2796 = vmatpush1.msra.mxu0 0.0
      %2797 = vmatprep.subr.mxu0 0.0
      %2798 = vmatpush1.msra.mxu0 0.0
      %2799 = vmatprep.subr.mxu0 0.0
      %2800 = vmatpush1.msra.mxu0 0.0
      %2801 = vmatprep.subr.mxu0 0.0
      %2802 = vmatpush1.msra.mxu0 0.0
      %2803 = vmatprep.subr.mxu0 0.0
      %2804 = vmatpush1.msra.mxu0 0.0
      %2805 = vmatprep.subr.mxu0 0.0
      %2806 = vmatpush1.msra.mxu0 0.0
      %2807 = vmatprep.subr.mxu0 0.0
      %2808 = vmatpush1.msra.mxu0 0.0
      %2809 = vmatprep.subr.mxu0 0.0
      %2810 = vmatpush1.msra.mxu0 0.0
      %2811 = vmatprep.subr.mxu0 0.0
      %2812 = vmatpush1.msra.mxu0 0.0
      %2813 = vmatprep.subr.mxu0 0.0
      %2814 = vmatpush1.msra.mxu0 0.0
      %2815 = vmatprep.subr.mxu0 0.0
      %2816 = vmatpush1.msra.mxu0 0.0
      %2817 = vmatprep.subr.mxu0 0.0
      %2818 = vmatpush1.msra.mxu0 0.0
      %2819 = vmatprep.subr.mxu0 0.0
      %2820 = vmatpush1.msra.mxu0 0.0
      %2821 = vmatprep.subr.mxu0 0.0
      %2822 = vmatpush1.msra.mxu0 0.0
      %2823 = vmatprep.subr.mxu0 0.0
      %2824 = vmatpush1.msra.mxu0 0.0
      %2825 = vmatprep.subr.mxu0 0.0
      %2826 = vmatpush1.msra.mxu0 0.0
      %2827 = vmatprep.subr.mxu0 0.0
      %2828 = vmatpush1.msra.mxu0 0.0
      %2829 = vmatprep.subr.mxu0 0.0
      %2830 = vmatpush1.msra.mxu0 0.0
      %2831 = vmatprep.subr.mxu0 0.0
      %2832 = vmatpush1.msra.mxu0 0.0
      %2833 = vmatprep.subr.mxu0 0.0
      %2834 = vmatpush1.msra.mxu0 0.0
      %2835 = vmatprep.subr.mxu0 0.0
      %2836 = vmatpush1.msra.mxu0 0.0
      %2837 = vmatprep.mubr.f32.mxu0 0.0
      %2838 = vmatmul.mubr.f32.gmra.mrb[0].mxu0 %v791
      %v2839 = vpop.f32.mrb[0].mxu0
      %v2840 = vadd.f32 0.0, %v2839
      %v2841 = vpop.f32.mrb[0].mxu0
      %2842 = vdwg.mxu0
      %v2843 = vadd.f32 %v2772, %v2840
      %2845 = vrot.lane.b32.xlu0 %v1314, 120
      %v2846 = vpop.permute.xlu0 %2845
      %2848 = vmatprep.subr.mxu0 0.0
      %2849 = vmatpush1.msra.mxu0 %v2846
      %2850 = vmatprep.subr.mxu0 0.0
      %2851 = vmatpush1.msra.mxu0 0.0
      %2852 = vmatprep.subr.mxu0 0.0
      %2853 = vmatpush1.msra.mxu0 0.0
      %2854 = vmatprep.subr.mxu0 0.0
      %2855 = vmatpush1.msra.mxu0 0.0
      %2856 = vmatprep.subr.mxu0 0.0
      %2857 = vmatpush1.msra.mxu0 0.0
      %2858 = vmatprep.subr.mxu0 0.0
      %2859 = vmatpush1.msra.mxu0 0.0
      %2860 = vmatprep.subr.mxu0 0.0
      %2861 = vmatpush1.msra.mxu0 0.0
      %2862 = vmatprep.subr.mxu0 0.0
      %2863 = vmatpush1.msra.mxu0 0.0
      %2864 = vmatprep.subr.mxu0 0.0
      %2865 = vmatpush1.msra.mxu0 0.0
      %2866 = vmatprep.subr.mxu0 0.0
      %2867 = vmatpush1.msra.mxu0 0.0
      %2868 = vmatprep.subr.mxu0 0.0
      %2869 = vmatpush1.msra.mxu0 0.0
      %2870 = vmatprep.subr.mxu0 0.0
      %2871 = vmatpush1.msra.mxu0 0.0
      %2872 = vmatprep.subr.mxu0 0.0
      %2873 = vmatpush1.msra.mxu0 0.0
      %2874 = vmatprep.subr.mxu0 0.0
      %2875 = vmatpush1.msra.mxu0 0.0
      %2876 = vmatprep.subr.mxu0 0.0
      %2877 = vmatpush1.msra.mxu0 0.0
      %2878 = vmatprep.subr.mxu0 0.0
      %2879 = vmatpush1.msra.mxu0 0.0
      %2880 = vmatprep.subr.mxu0 0.0
      %2881 = vmatpush1.msra.mxu0 0.0
      %2882 = vmatprep.subr.mxu0 0.0
      %2883 = vmatpush1.msra.mxu0 0.0
      %2884 = vmatprep.subr.mxu0 0.0
      %2885 = vmatpush1.msra.mxu0 0.0
      %2886 = vmatprep.subr.mxu0 0.0
      %2887 = vmatpush1.msra.mxu0 0.0
      %2888 = vmatprep.subr.mxu0 0.0
      %2889 = vmatpush1.msra.mxu0 0.0
      %2890 = vmatprep.subr.mxu0 0.0
      %2891 = vmatpush1.msra.mxu0 0.0
      %2892 = vmatprep.subr.mxu0 0.0
      %2893 = vmatpush1.msra.mxu0 0.0
      %2894 = vmatprep.subr.mxu0 0.0
      %2895 = vmatpush1.msra.mxu0 0.0
      %2896 = vmatprep.subr.mxu0 0.0
      %2897 = vmatpush1.msra.mxu0 0.0
      %2898 = vmatprep.subr.mxu0 0.0
      %2899 = vmatpush1.msra.mxu0 0.0
      %2900 = vmatprep.subr.mxu0 0.0
      %2901 = vmatpush1.msra.mxu0 0.0
      %2902 = vmatprep.subr.mxu0 0.0
      %2903 = vmatpush1.msra.mxu0 0.0
      %2904 = vmatprep.subr.mxu0 0.0
      %2905 = vmatpush1.msra.mxu0 0.0
      %2906 = vmatprep.subr.mxu0 0.0
      %2907 = vmatpush1.msra.mxu0 0.0
      %2908 = vmatprep.subr.mxu0 0.0
      %2909 = vmatpush1.msra.mxu0 0.0
      %2910 = vmatprep.subr.mxu0 0.0
      %2911 = vmatpush1.msra.mxu0 0.0
      %2912 = vmatprep.mubr.f32.mxu0 0.0
      %2913 = vmatmul.mubr.f32.gmra.mrb[0].mxu0 %v871
      %v2914 = vpop.f32.mrb[0].mxu0
      %v2915 = vadd.f32 0.0, %v2914
      %v2916 = vpop.f32.mrb[0].mxu0
      %2917 = vdwg.mxu0
      %v2918 = vadd.f32 %v2843, %v2915
      %v2919 = vadd.f32 %v2918, %v948
      %v2920 = vmax.f32 %v2919, 0.0
      %v2921 = vsel %vm952, %v2920, 0.0
      %2922 = vadd.xlane.f32.xlu0 %v2921
      %v2923 = vpop.xlane.xlu0 %2922
      %v2924 = vmul.f32 %v2920, %v2920
      %v2925 = vsel %vm952, %v2924, 0.0
      %2926 = vadd.xlane.f32.xlu0 %v2925
      %v2927 = vpop.xlane.xlu0 %2926
      %v2928 = vmax.f32 %v2274, %v2920
      %v2929 = vmin.f32 %v2275, %v2920
      %v2930 = vadd.f32 %v2276, %v2923
      %v2931 = vadd.f32 %v2277, %v2927
      %2932 = vst.msk [vmem:[%s235] sm:$0xff] %vm952, %v2928
      %2933 = vst.msk [vmem:[%s239] sm:$0xff] %vm952, %v2929
      %vm2934 = vcmask 7168
      %2935 = vst.msk [vmem:[%s243] sm:$0xff] %vm2934, %v2930
      %vm2936 = vcmask 15368
      %2937 = vst.msk [vmem:[%s243] sm:$0xff] %vm2936, %v2931
      %p2938 = scmp.lt.s32.totalorder %s17, 1
      %s2939 = scalar_select %p2938, %s17, 1
      %s2940 = smul.addr %s2939, 8
      %s2941 = scalar_lea.vmem %s3, %s2940
      %p2942 = scmp.lt.s32.totalorder %s17, 1
      %s2943 = scalar_select %p2942, %s17, 1
      %s2944 = smul.addr %s2943, 8
      %s2945 = scalar_lea.vmem %s4, %s2944
      %p2946 = scmp.lt.s32.totalorder %s17, 1
      %s2947 = scalar_select %p2946, %s17, 1
      %s2948 = smul.addr %s2947, 8
      %s2949 = scalar_lea.vmem %s5, %s2948
      // Predicated region
      $region33: #{meso1_forward.2} parent=31 // pred_check
        %p2950 = pneg %p103
      $region34: #{meso1_forward.2} parent=31 // pred_check_branch
        %2952 = sbr.rel (%p2950) target = $region36
      $region35: #{meso1_forward.2} parent=31 // pred_region
        _
      $region36: #{meso1_forward.2} parent=31 // pred_fallthru
        _
      // Predicated region
      $region37: #{meso1_forward.2} parent=31 // pred_check
        %p2953 = pneg %p129
      $region38: #{meso1_forward.2} parent=31 // pred_check_branch
        %2955 = sbr.rel (%p2953) target = $region40
      $region39: #{meso1_forward.2} parent=31 // pred_region
        _
      $region40: #{meso1_forward.2} parent=31 // pred_fallthru
        _
      // Predicated region
      $region41: #{meso1_forward.2} parent=31 // pred_check
        %p2956 = pneg %p155
      $region42: #{meso1_forward.2} parent=31 // pred_check_branch
        %2958 = sbr.rel (%p2956) target = $region44
      $region43: #{meso1_forward.2} parent=31 // pred_region
        _
      $region44: #{meso1_forward.2} parent=31 // pred_fallthru
        _
    $region32: #{meso1_forward.2} parent=5 // pred_fallthru
      _
    %p2959 = scmp.le.s32.totalorder 2, %s12
    // Predicated region
    $region45: #{meso1_forward.2} parent=5 // pred_check
      %p2960 = pneg %p2959
    $region46: #{meso1_forward.2} parent=5 // pred_check_branch
      %2962 = sbr.rel (%p2960) target = $region48
    $region47: #{meso1_forward.2} parent=5 // pred_region
      %s2963 = ssub.s32 %s12, 2
      // Predicated region
      $region49: #{meso1_forward.2} parent=47 // pred_check
        %p2964 = pneg %p109
      $region50: #{meso1_forward.2} parent=47 // pred_check_branch
        %2966 = sbr.rel (%p2964) target = $region52
      $region51: #{meso1_forward.2} parent=47 // pred_region
        %p2967 = scmp.lt.s32.totalorder %s18, 1
        %s2968 = scalar_select %p2967, %s18, 1
        %s2969 = smul.addr %s2968, 8
        %s2970 = scalar_lea.vmem %s3, %s2969
      $region52: #{meso1_forward.2} parent=47 // pred_fallthru
        _
      // Predicated region
      $region53: #{meso1_forward.2} parent=47 // pred_check
        %p2971 = pneg %p135
      $region54: #{meso1_forward.2} parent=47 // pred_check_branch
        %2973 = sbr.rel (%p2971) target = $region56
      $region55: #{meso1_forward.2} parent=47 // pred_region
        %p2974 = scmp.lt.s32.totalorder %s18, 1
        %s2975 = scalar_select %p2974, %s18, 1
        %s2976 = smul.addr %s2975, 8
        %s2977 = scalar_lea.vmem %s4, %s2976
      $region56: #{meso1_forward.2} parent=47 // pred_fallthru
        _
      // Predicated region
      $region57: #{meso1_forward.2} parent=47 // pred_check
        %p2978 = pneg %p161
      $region58: #{meso1_forward.2} parent=47 // pred_check_branch
        %2980 = sbr.rel (%p2978) target = $region60
      $region59: #{meso1_forward.2} parent=47 // pred_region
        %p2981 = scmp.lt.s32.totalorder %s18, 1
        %s2982 = scalar_select %p2981, %s18, 1
        %s2983 = smul.addr %s2982, 8
        %s2984 = scalar_lea.vmem %s5, %s2983
      $region60: #{meso1_forward.2} parent=47 // pred_fallthru
        _
    $region48: #{meso1_forward.2} parent=5 // pred_fallthru
      _
  $region6: #{meso1_forward.2} parent=0 // loop_footer
    %s16 = sadd.s32 1, %s12
  $region7: #{meso1_forward.2} parent=0 // loop_footer_branch
    %11 = sbr.rel target = $region3
  $region8: #{meso1_forward.2} parent=0 // loop_exit
    _

</llo_original>
